<compile_context>
chip_gen: v6e
topology: v6e:2x2x1
jax: 0.10.0
libtpu: 0.0.40
codegen_flags: <defaults>
</compile_context>

<pallas_src>
import jax
import jax.numpy as jnp
from jax.experimental import pallas as pl
from jax.experimental.pallas import tpu as pltpu

H1, H2, H3 = 256, 512, 1024
_BATCH_ALIGN = 16  # bf16 packs 16 rows per sublane group


def _round_up(x, m):
    return pl.cdiv(x, m) * m


def _mlp_kernel(x_ref, w1_ref, b1_ref, w2_ref, b2_ref, w3_ref, b3_ref,
                w4_ref, b4_ref, o_ref):
    # All four linear layers + ReLUs fused. bf16 MXU operands, f32 accumulation,
    # bf16 epilogue (bias + ReLU) for layers 1-3, f32 bias for the final layer.
    h = x_ref[...]  # already bf16 (cast in the wrapper)

    h = jnp.dot(h, w1_ref[...], preferred_element_type=jnp.float32).astype(jnp.bfloat16)
    h = jnp.maximum(h + b1_ref[...], 0)

    h = jnp.dot(h, w2_ref[...], preferred_element_type=jnp.float32).astype(jnp.bfloat16)
    h = jnp.maximum(h + b2_ref[...], 0)

    h = jnp.dot(h, w3_ref[...], preferred_element_type=jnp.float32).astype(jnp.bfloat16)
    h = jnp.maximum(h + b3_ref[...], 0)

    # TODO(synk): dropout(p=0.25) is identity (eval mode); training-mode Bernoulli
    #             masking via pltpu.prng_seed/prng_random_bits is not wired in.
    y = jnp.dot(h, w4_ref[...], preferred_element_type=jnp.float32) + b4_ref[...]
    o_ref[...] = y.astype(o_ref.dtype)


def fully_connected_forward(x, params, *, tile_b=512, out_dtype=jnp.float32):
    """x: (B, input_size) float32. params: w1..w4 bf16 (in, out), b1..b4 f32 (1, out)."""
    B, in_dim = x.shape
    out_dim = params["w4"].shape[1]

    # Pad the final feature dim to a lane-dense multiple of 128 so the output
    # store is an unmasked vst. Real columns are sliced back in the wrapper.
    # (Layers 1/4 half-fill the 256-wide MXU, but they are <5% of total MXU
    #  cycles, so K/N padding there would be pure extra work — intentionally not done.)
    n_pad = int(_round_up(out_dim, 128))
    w4, b4 = params["w4"], params["b4"]
    if n_pad != out_dim:
        w4 = jnp.pad(w4, ((0, 0), (0, n_pad - out_dim)))
        b4 = jnp.pad(b4, ((0, 0), (0, n_pad - out_dim)))

    # bf16 biases for the bf16 epilogue of layers 1-3 (layer 4 stays f32).
    b1 = params["b1"].astype(jnp.bfloat16)
    b2 = params["b2"].astype(jnp.bfloat16)
    b3 = params["b3"].astype(jnp.bfloat16)

    # Batch tiling: 16-aligned (bf16 sublane packing), padded — no divisibility
    # assert. If the whole batch would be one tile but has >= 2 aligned groups,
    # split into >= 2 grid steps so both v7x TensorCores get work.
    b_align = int(_round_up(B, _BATCH_ALIGN))
    tb = int(min(tile_b, b_align))
    if b_align // tb < 2 and b_align >= 2 * _BATCH_ALIGN:
        tb = int(_round_up(pl.cdiv(b_align, 2), _BATCH_ALIGN))
    b_pad = int(_round_up(B, tb))

    # Cast input to bf16 in the wrapper (halves x DMA, removes in-kernel cast).
    x = x.astype(jnp.bfloat16)
    if b_pad != B:
        x = jnp.pad(x, ((0, b_pad - B), (0, 0)))

    def full_spec(shape):
        # Whole-array block, same block for every grid step (weights/biases).
        return pl.BlockSpec(shape, lambda i: tuple(0 for _ in shape))

    grid = (b_pad // tb,)
    out = pl.pallas_call(
        _mlp_kernel,
        out_shape=jax.ShapeDtypeStruct((b_pad, n_pad), out_dtype),
        grid_spec=pltpu.PrefetchScalarGridSpec(
            num_scalar_prefetch=0,
            grid=grid,
            in_specs=[
                pl.BlockSpec((tb, in_dim), lambda i: (i, 0)),        # x tile
                full_spec(params["w1"].shape), full_spec(b1.shape),
                full_spec(params["w2"].shape), full_spec(b2.shape),
                full_spec(params["w3"].shape), full_spec(b3.shape),
                full_spec(w4.shape), full_spec(b4.shape),
            ],
            out_specs=pl.BlockSpec((tb, n_pad), lambda i: (i, 0)),
        ),
        compiler_params=pltpu.CompilerParams(
            dimension_semantics=("parallel",),
        ),
    )(x, params["w1"], b1, params["w2"], b2, params["w3"], b3, w4, b4)

    return out[:B, :out_dim]


def init_params(key, input_size, output_size):
    """Deterministic init matching torch.nn.Linear default:
    U(-1/sqrt(fan_in), 1/sqrt(fan_in)) for weight and bias.
    Weights stored transposed vs torch as (in, out) in bf16; biases f32 (1, out)."""
    dims = [(input_size, H1), (H1, H2), (H2, H3), (H3, output_size)]
    params = {}
    keys = jax.random.split(key, 2 * len(dims))
    for idx, (fan_in, fan_out) in enumerate(dims):
        bound = 1.0 / jnp.sqrt(jnp.float32(fan_in))
        wk, bk = keys[2 * idx], keys[2 * idx + 1]
        params[f"w{idx + 1}"] = jax.random.uniform(
            wk, (fan_in, fan_out), jnp.float32,
            minval=-bound, maxval=bound).astype(jnp.bfloat16)
        params[f"b{idx + 1}"] = jax.random.uniform(
            bk, (1, fan_out), jnp.float32, minval=-bound, maxval=bound)
    return params


def reference_forward(x, params):
    """Pure-JAX reference mirroring the kernel's bf16-operand / f32-accumulate /
    bf16-epilogue math (layer 4 bias in f32)."""
    h = x.astype(jnp.bfloat16)
    for i in (1, 2, 3):
        acc = jnp.dot(h, params[f"w{i}"], preferred_element_type=jnp.float32)
        h = jnp.maximum(acc.astype(jnp.bfloat16)
                        + params[f"b{i}"].astype(jnp.bfloat16), 0)
    return jnp.dot(h, params["w4"], preferred_element_type=jnp.float32) + params["b4"]


if __name__ == "__main__":
    key = jax.random.PRNGKey(0)
    input_size, output_size = 32, 16
    batch = 48  # > 2*16 so the wrapper splits the batch into a 2-step grid

    pkey, xkey = jax.random.split(key)
    params = init_params(pkey, input_size, output_size)
    x = jax.random.normal(xkey, (batch, input_size), jnp.float32)

    out = fully_connected_forward(x, params)
    out = jax.block_until_ready(out)

    ref = reference_forward(x, params)
    assert out.shape == (batch, output_size), out.shape
    assert jnp.allclose(out, ref.astype(out.dtype), atol=2e-2, rtol=2e-2), \
        "mismatch vs reference"

    print("KERNEL_OK")
</pallas_src>

<mosaic_0001>
module attributes {stable_mosaic.version = 11 : i64} {
  func.func @_mlp_kernel(%arg0: i32, %arg1: memref<32x32xbf16, #tpu.memory_space<vmem>>, %arg2: memref<32x256xbf16, #tpu.memory_space<vmem>>, %arg3: memref<1x256xbf16, #tpu.memory_space<vmem>>, %arg4: memref<256x512xbf16, #tpu.memory_space<vmem>>, %arg5: memref<1x512xbf16, #tpu.memory_space<vmem>>, %arg6: memref<512x1024xbf16, #tpu.memory_space<vmem>>, %arg7: memref<1x1024xbf16, #tpu.memory_space<vmem>>, %arg8: memref<1024x128xbf16, #tpu.memory_space<vmem>>, %arg9: memref<1x128xf32, #tpu.memory_space<vmem>>, %arg10: memref<32x128xf32, #tpu.memory_space<vmem>>) attributes {dimension_semantics = [#tpu.dimension_semantics<parallel>], iteration_bounds = array<i64: 2>, scalar_prefetch = 0 : i64, scratch_operands = 0 : i64, tpu.core_type = #tpu.core_type<tc>, window_params = [{transform_indices = @transform_0, window_bounds = array<i64: 32, 32>}, {pipeline_mode = #tpu.pipeline_mode<synchronous>, transform_indices = @transform_1, window_bounds = array<i64: 32, 256>}, {pipeline_mode = #tpu.pipeline_mode<synchronous>, transform_indices = @transform_2, window_bounds = array<i64: 1, 256>}, {pipeline_mode = #tpu.pipeline_mode<synchronous>, transform_indices = @transform_3, window_bounds = array<i64: 256, 512>}, {pipeline_mode = #tpu.pipeline_mode<synchronous>, transform_indices = @transform_4, window_bounds = array<i64: 1, 512>}, {pipeline_mode = #tpu.pipeline_mode<synchronous>, transform_indices = @transform_5, window_bounds = array<i64: 512, 1024>}, {pipeline_mode = #tpu.pipeline_mode<synchronous>, transform_indices = @transform_6, window_bounds = array<i64: 1, 1024>}, {pipeline_mode = #tpu.pipeline_mode<synchronous>, transform_indices = @transform_7, window_bounds = array<i64: 1024, 128>}, {pipeline_mode = #tpu.pipeline_mode<synchronous>, transform_indices = @transform_8, window_bounds = array<i64: 1, 128>}, {transform_indices = @transform_9, window_bounds = array<i64: 32, 128>}]} {
    %c0 = arith.constant 0 : index
    %c0_0 = arith.constant 0 : index
    %0 = vector.load %arg1[%c0, %c0_0] : memref<32x32xbf16, #tpu.memory_space<vmem>>, vector<32x32xbf16>
    %c0_1 = arith.constant 0 : index
    %c0_2 = arith.constant 0 : index
    %1 = vector.load %arg2[%c0_1, %c0_2] : memref<32x256xbf16, #tpu.memory_space<vmem>>, vector<32x256xbf16>
    %cst = arith.constant dense<0.000000e+00> : vector<32x256xf32>
    %2 = tpu.matmul %0, %1, %cst {dimension_numbers = #tpu.dot_dimension_numbers<[1], [0], [0], [1], [0, 0, 1, 1], [], []>} : vector<32x32xbf16>, vector<32x256xbf16>, vector<32x256xf32> -> vector<32x256xf32>
    %3 = arith.truncf %2 : vector<32x256xf32> to vector<32x256xbf16>
    %c0_3 = arith.constant 0 : index
    %c0_4 = arith.constant 0 : index
    %4 = vector.load %arg3[%c0_3, %c0_4] : memref<1x256xbf16, #tpu.memory_space<vmem>>, vector<1x256xbf16>
    %5 = vector.broadcast %4 : vector<1x256xbf16> to vector<32x256xbf16>
    %6 = arith.addf %3, %5 : vector<32x256xbf16>
    %cst_5 = arith.constant 0.000000e+00 : bf16
    %7 = vector.broadcast %cst_5 : bf16 to vector<32x256xbf16>
    %8 = arith.maximumf %6, %7 : vector<32x256xbf16>
    %c0_6 = arith.constant 0 : index
    %c0_7 = arith.constant 0 : index
    %9 = vector.load %arg4[%c0_6, %c0_7] : memref<256x512xbf16, #tpu.memory_space<vmem>>, vector<256x512xbf16>
    %cst_8 = arith.constant dense<0.000000e+00> : vector<32x512xf32>
    %10 = tpu.matmul %8, %9, %cst_8 {dimension_numbers = #tpu.dot_dimension_numbers<[1], [0], [0], [1], [0, 0, 1, 1], [], []>} : vector<32x256xbf16>, vector<256x512xbf16>, vector<32x512xf32> -> vector<32x512xf32>
    %11 = arith.truncf %10 : vector<32x512xf32> to vector<32x512xbf16>
    %c0_9 = arith.constant 0 : index
    %c0_10 = arith.constant 0 : index
    %12 = vector.load %arg5[%c0_9, %c0_10] : memref<1x512xbf16, #tpu.memory_space<vmem>>, vector<1x512xbf16>
    %13 = vector.broadcast %12 : vector<1x512xbf16> to vector<32x512xbf16>
    %14 = arith.addf %11, %13 : vector<32x512xbf16>
    %cst_11 = arith.constant 0.000000e+00 : bf16
    %15 = vector.broadcast %cst_11 : bf16 to vector<32x512xbf16>
    %16 = arith.maximumf %14, %15 : vector<32x512xbf16>
    %c0_12 = arith.constant 0 : index
    %c0_13 = arith.constant 0 : index
    %17 = vector.load %arg6[%c0_12, %c0_13] : memref<512x1024xbf16, #tpu.memory_space<vmem>>, vector<512x1024xbf16>
    %cst_14 = arith.constant dense<0.000000e+00> : vector<32x1024xf32>
    %18 = tpu.matmul %16, %17, %cst_14 {dimension_numbers = #tpu.dot_dimension_numbers<[1], [0], [0], [1], [0, 0, 1, 1], [], []>} : vector<32x512xbf16>, vector<512x1024xbf16>, vector<32x1024xf32> -> vector<32x1024xf32>
    %19 = arith.truncf %18 : vector<32x1024xf32> to vector<32x1024xbf16>
    %c0_15 = arith.constant 0 : index
    %c0_16 = arith.constant 0 : index
    %20 = vector.load %arg7[%c0_15, %c0_16] : memref<1x1024xbf16, #tpu.memory_space<vmem>>, vector<1x1024xbf16>
    %21 = vector.broadcast %20 : vector<1x1024xbf16> to vector<32x1024xbf16>
    %22 = arith.addf %19, %21 : vector<32x1024xbf16>
    %cst_17 = arith.constant 0.000000e+00 : bf16
    %23 = vector.broadcast %cst_17 : bf16 to vector<32x1024xbf16>
    %24 = arith.maximumf %22, %23 : vector<32x1024xbf16>
    %c0_18 = arith.constant 0 : index
    %c0_19 = arith.constant 0 : index
    %25 = vector.load %arg8[%c0_18, %c0_19] : memref<1024x128xbf16, #tpu.memory_space<vmem>>, vector<1024x128xbf16>
    %cst_20 = arith.constant dense<0.000000e+00> : vector<32x128xf32>
    %26 = tpu.matmul %24, %25, %cst_20 {dimension_numbers = #tpu.dot_dimension_numbers<[1], [0], [0], [1], [0, 0, 1, 1], [], []>} : vector<32x1024xbf16>, vector<1024x128xbf16>, vector<32x128xf32> -> vector<32x128xf32>
    %c0_21 = arith.constant 0 : index
    %c0_22 = arith.constant 0 : index
    %27 = vector.load %arg9[%c0_21, %c0_22] : memref<1x128xf32, #tpu.memory_space<vmem>>, vector<1x128xf32>
    %28 = vector.broadcast %27 : vector<1x128xf32> to vector<32x128xf32>
    %29 = arith.addf %26, %28 : vector<32x128xf32>
    %c0_23 = arith.constant 0 : index
    %c0_24 = arith.constant 0 : index
    %30 = vector.load %arg10[%c0_23, %c0_24] : memref<32x128xf32, #tpu.memory_space<vmem>>, vector<32x128xf32>
    tpu.vector_store %arg10[%c0_23, %c0_24], %29 {strides = array<i32>} : memref<32x128xf32, #tpu.memory_space<vmem>>, vector<32x128xf32>,
    return
  }
  func.func @transform_0(%arg0: i32) -> (i32, i32) {
    %c0_i32 = arith.constant 0 : i32
    %c0_i32_0 = arith.constant 0 : i32
    return %arg0, %c0_i32 : i32, i32
  }
  func.func @transform_1(%arg0: i32) -> (i32, i32) {
    %c0_i32 = arith.constant 0 : i32
    %c0_i32_0 = arith.constant 0 : i32
    %c0_i32_1 = arith.constant 0 : i32
    return %c0_i32, %c0_i32_0 : i32, i32
  }
  func.func @transform_2(%arg0: i32) -> (i32, i32) {
    %c0_i32 = arith.constant 0 : i32
    %c0_i32_0 = arith.constant 0 : i32
    %c0_i32_1 = arith.constant 0 : i32
    return %c0_i32, %c0_i32_0 : i32, i32
  }
  func.func @transform_3(%arg0: i32) -> (i32, i32) {
    %c0_i32 = arith.constant 0 : i32
    %c0_i32_0 = arith.constant 0 : i32
    %c0_i32_1 = arith.constant 0 : i32
    return %c0_i32, %c0_i32_0 : i32, i32
  }
  func.func @transform_4(%arg0: i32) -> (i32, i32) {
    %c0_i32 = arith.constant 0 : i32
    %c0_i32_0 = arith.constant 0 : i32
    %c0_i32_1 = arith.constant 0 : i32
    return %c0_i32, %c0_i32_0 : i32, i32
  }
  func.func @transform_5(%arg0: i32) -> (i32, i32) {
    %c0_i32 = arith.constant 0 : i32
    %c0_i32_0 = arith.constant 0 : i32
    %c0_i32_1 = arith.constant 0 : i32
    return %c0_i32, %c0_i32_0 : i32, i32
  }
  func.func @transform_6(%arg0: i32) -> (i32, i32) {
    %c0_i32 = arith.constant 0 : i32
    %c0_i32_0 = arith.constant 0 : i32
    %c0_i32_1 = arith.constant 0 : i32
    return %c0_i32, %c0_i32_0 : i32, i32
  }
  func.func @transform_7(%arg0: i32) -> (i32, i32) {
    %c0_i32 = arith.constant 0 : i32
    %c0_i32_0 = arith.constant 0 : i32
    %c0_i32_1 = arith.constant 0 : i32
    return %c0_i32, %c0_i32_0 : i32, i32
  }
  func.func @transform_8(%arg0: i32) -> (i32, i32) {
    %c0_i32 = arith.constant 0 : i32
    %c0_i32_0 = arith.constant 0 : i32
    %c0_i32_1 = arith.constant 0 : i32
    return %c0_i32, %c0_i32_0 : i32, i32
  }
  func.func @transform_9(%arg0: i32) -> (i32, i32) {
    %c0_i32 = arith.constant 0 : i32
    %c0_i32_0 = arith.constant 0 : i32
    return %arg0, %c0_i32 : i32, i32
  }
}

</mosaic_0001>

<llo_original>
// kernel: tpu_custom_call.1
$region0: #{tpu_custom_call.1}
  #allocation0 [shape = 'u32[]', space=smem, size = 0x4, offset = 0x4, fixed_abs, tag = 'smem constant byte address 0x4 - core index']
  #allocation1 [shape = 'u32[144,128]{1,0:T(1,128)}', space=vmem, size = 0x12000, scoped, tag = 'internal scratch']
  %s0 = inlined_call_operand.vmem [shape: bf16[64,32], index: 0, kind: input, shape index: {}]
  %s1 = inlined_call_operand.vmem [shape: bf16[32,256], index: 1, kind: input, shape index: {}]
  %s2 = inlined_call_operand.vmem [shape: bf16[1,256], index: 2, kind: input, shape index: {}]
  %s3 = inlined_call_operand.hbm [shape: bf16[256,512], index: 3, kind: input, shape index: {}]
  %s4 = inlined_call_operand.vmem [shape: bf16[1,512], index: 4, kind: input, shape index: {}]
  %s5 = inlined_call_operand.hbm [shape: bf16[512,1024], index: 5, kind: input, shape index: {}]
  %s6 = inlined_call_operand.vmem [shape: bf16[1,1024], index: 6, kind: input, shape index: {}]
  %s7 = inlined_call_operand.hbm [shape: bf16[1024,128], index: 7, kind: input, shape index: {}]
  %s8 = inlined_call_operand.vmem [shape: f32[1,128], index: 8, kind: input, shape index: {}]
  %s9 = inlined_call_operand.hbm [shape: f32[64,128], index: 9, kind: output, shape index: {}]
  %s10 = sld [smem:[#allocation0]]
  $region81: #{tpu_custom_call.1} parent=0
    _
  %s12 = ssub.s32 1, %s10
  %s13 = scalar_select 0, %s12, %s10
  $region1: #{tpu_custom_call.1} parent=0
    #allocation2 [shape = 'u8[262144]{0}', space=vmem, size = 0x40000, scoped, tag = 'input window, operand 3, single buffered']
    #allocation3 [shape = 's32[2]{0}', space=sflag, size = 0x8, scoped, tag = 'scoped memory for tpu_custom_call.1']
    #allocation4 [shape = 's32[2]{0}', space=sflag, size = 0x8, scoped, tag = 'scoped memory for tpu_custom_call.1']
    #allocation5 [shape = 'u8[1048576]{0}', space=vmem, size = 0x100000, scoped, tag = 'input window, operand 5, single buffered']
    #allocation6 [shape = 's32[1]{0}', space=sflag, size = 0x4, scoped, tag = 'scoped memory for tpu_custom_call.1']
    #allocation7 [shape = 'u8[262144]{0}', space=vmem, size = 0x40000, scoped, tag = 'input window, operand 7, single buffered']
    #allocation8 [shape = 'u8[32768]{0}', space=vmem, size = 0x8000, scoped, tag = 'output window, operand 0']
    %14 = vsyncpa [#allocation3], 0
    %15 = vsyncpa [#allocation6], 0
    %16 = vsyncpa [#allocation4], 0
    %s17 = scalar_lea.sflag [#allocation4], 1
    %18 = vsyncpa %s17, 0
    loop: start=0, step=1, limit=4
    $region2: #{tpu_custom_call.1} parent=1 // loop_pre_header
      _
    $region3: #{tpu_custom_call.1} parent=1 // loop_header
      %s20 = sphi 0, %s24
      %p21 = scmp.ge.s32.totalorder %s20, 4
      %s30 = sphi 0, %s32
      %s33 = sphi 0, %s30
      %s34 = sphi 0, %s33
      %s50 = sphi 0, %s34
      %s54 = sphi 0, %s54
      %s56 = sphi 0, %s54
      %s57 = sphi 0, %s56
      %s71 = sphi 0, %s57
      %s75 = sphi 0, %s75
      %s77 = sphi 0, %s75
      %s78 = sphi 0, %s77
      %s92 = sphi 0, %s78
      %s96 = sphi 0, %s96
      %s98 = sphi 0, %s96
      %s99 = sphi 0, %s98
      %s113 = sphi 0, %s99
      %s117 = sphi 0, %s117
      %s119 = sphi 0, %s117
      %s120 = sphi 0, %s119
      %s134 = sphi 0, %s120
      %s138 = sphi 0, %s138
      %s140 = sphi 0, %s138
      %s141 = sphi 0, %s140
      %s155 = sphi 0, %s141
      %s159 = sphi 0, %s159
      %s161 = sphi 0, %s159
      %s162 = sphi 0, %s161
      %s176 = sphi 0, %s162
      %s180 = sphi 0, %s180
      %s182 = sphi 0, %s180
      %s183 = sphi 0, %s182
      %s197 = sphi 0, %s183
      %s201 = sphi 0, %s201
      %s203 = sphi 0, %s201
      %s204 = sphi 0, %s203
      %s218 = sphi 0, %s204
      %s224 = sphi 0, %s226
      %s227 = sphi 0, %s224
      %s228 = sphi 0, %s227
      %s244 = sphi 0, %s228
    $region4: #{tpu_custom_call.1} parent=1 // loop_header_branch
      %23 = sbr.rel (%p21) target = $region8
    $region5: #{tpu_custom_call.1} parent=1 // loop_body
      %s25 = ssub.s32 %s20, 1
      %s26 = ssub.s32 %s20, 2
      %s27 = sadd.s32 %s20, 1
      %s28 = ssub.s32 %s20, %s27
      %p29 = scmp.eq.s32.totalorder %s28, 0
      %s31 = sadd.s32 %s30, 1
      %s32 = scalar_select %p29, %s30, %s31
      %p35 = pneg %p29
      %p36 = scmp.eq.s32.totalorder %s20, 1
      %p37 = por %p35, %p36
      %p38 = scmp.ne.s32.totalorder %s30, %s33
      %p39 = scmp.eq.s32.totalorder %s20, 0
      %p40 = por %p38, %p39
      %p41 = scmp.ne.s32.totalorder %s30, %s33
      %p42 = scmp.eq.s32.totalorder %s25, 1
      %p43 = por %p41, %p42
      %p44 = scmp.ne.s32.totalorder %s33, %s34
      %p45 = scmp.eq.s32.totalorder %s25, 0
      %p46 = por %p44, %p45
      %p47 = scmp.ne.s32.totalorder %s33, %s34
      %p48 = scmp.eq.s32.totalorder %s26, 1
      %p49 = por %p47, %p48
      %p51 = scmp.ne.s32.totalorder %s34, %s50
      %p52 = scmp.eq.s32.totalorder %s26, 0
      %p53 = por %p51, %p52
      %s55 = sadd.s32 %s54, 1
      %p58 = scmp.eq.s32.totalorder %s20, 1
      %p59 = scmp.ne.s32.totalorder %s54, %s56
      %p60 = scmp.eq.s32.totalorder %s20, 0
      %p61 = por %p59, %p60
      %p62 = scmp.ne.s32.totalorder %s54, %s56
      %p63 = scmp.eq.s32.totalorder %s25, 1
      %p64 = por %p62, %p63
      %p65 = scmp.ne.s32.totalorder %s56, %s57
      %p66 = scmp.eq.s32.totalorder %s25, 0
      %p67 = por %p65, %p66
      %p68 = scmp.ne.s32.totalorder %s56, %s57
      %p69 = scmp.eq.s32.totalorder %s26, 1
      %p70 = por %p68, %p69
      %p72 = scmp.ne.s32.totalorder %s57, %s71
      %p73 = scmp.eq.s32.totalorder %s26, 0
      %p74 = por %p72, %p73
      %s76 = sadd.s32 %s75, 1
      %p79 = scmp.eq.s32.totalorder %s20, 1
      %p80 = scmp.ne.s32.totalorder %s75, %s77
      %p81 = scmp.eq.s32.totalorder %s20, 0
      %p82 = por %p80, %p81
      %p83 = scmp.ne.s32.totalorder %s75, %s77
      %p84 = scmp.eq.s32.totalorder %s25, 1
      %p85 = por %p83, %p84
      %p86 = scmp.ne.s32.totalorder %s77, %s78
      %p87 = scmp.eq.s32.totalorder %s25, 0
      %p88 = por %p86, %p87
      %p89 = scmp.ne.s32.totalorder %s77, %s78
      %p90 = scmp.eq.s32.totalorder %s26, 1
      %p91 = por %p89, %p90
      %p93 = scmp.ne.s32.totalorder %s78, %s92
      %p94 = scmp.eq.s32.totalorder %s26, 0
      %p95 = por %p93, %p94
      %s97 = sadd.s32 %s96, 1
      %p100 = scmp.eq.s32.totalorder %s20, 1
      %p101 = scmp.ne.s32.totalorder %s96, %s98
      %p102 = scmp.eq.s32.totalorder %s20, 0
      %p103 = por %p101, %p102
      %p104 = scmp.ne.s32.totalorder %s96, %s98
      %p105 = scmp.eq.s32.totalorder %s25, 1
      %p106 = por %p104, %p105
      %p107 = scmp.ne.s32.totalorder %s98, %s99
      %p108 = scmp.eq.s32.totalorder %s25, 0
      %p109 = por %p107, %p108
      %p110 = scmp.ne.s32.totalorder %s98, %s99
      %p111 = scmp.eq.s32.totalorder %s26, 1
      %p112 = por %p110, %p111
      %p114 = scmp.ne.s32.totalorder %s99, %s113
      %p115 = scmp.eq.s32.totalorder %s26, 0
      %p116 = por %p114, %p115
      %s118 = sadd.s32 %s117, 1
      %p121 = scmp.eq.s32.totalorder %s20, 1
      %p122 = scmp.ne.s32.totalorder %s117, %s119
      %p123 = scmp.eq.s32.totalorder %s20, 0
      %p124 = por %p122, %p123
      %p125 = scmp.ne.s32.totalorder %s117, %s119
      %p126 = scmp.eq.s32.totalorder %s25, 1
      %p127 = por %p125, %p126
      %p128 = scmp.ne.s32.totalorder %s119, %s120
      %p129 = scmp.eq.s32.totalorder %s25, 0
      %p130 = por %p128, %p129
      %p131 = scmp.ne.s32.totalorder %s119, %s120
      %p132 = scmp.eq.s32.totalorder %s26, 1
      %p133 = por %p131, %p132
      %p135 = scmp.ne.s32.totalorder %s120, %s134
      %p136 = scmp.eq.s32.totalorder %s26, 0
      %p137 = por %p135, %p136
      %s139 = sadd.s32 %s138, 1
      %p142 = scmp.eq.s32.totalorder %s20, 1
      %p143 = scmp.ne.s32.totalorder %s138, %s140
      %p144 = scmp.eq.s32.totalorder %s20, 0
      %p145 = por %p143, %p144
      %p146 = scmp.ne.s32.totalorder %s138, %s140
      %p147 = scmp.eq.s32.totalorder %s25, 1
      %p148 = por %p146, %p147
      %p149 = scmp.ne.s32.totalorder %s140, %s141
      %p150 = scmp.eq.s32.totalorder %s25, 0
      %p151 = por %p149, %p150
      %p152 = scmp.ne.s32.totalorder %s140, %s141
      %p153 = scmp.eq.s32.totalorder %s26, 1
      %p154 = por %p152, %p153
      %p156 = scmp.ne.s32.totalorder %s141, %s155
      %p157 = scmp.eq.s32.totalorder %s26, 0
      %p158 = por %p156, %p157
      %s160 = sadd.s32 %s159, 1
      %p163 = scmp.eq.s32.totalorder %s20, 1
      %p164 = scmp.ne.s32.totalorder %s159, %s161
      %p165 = scmp.eq.s32.totalorder %s20, 0
      %p166 = por %p164, %p165
      %p167 = scmp.ne.s32.totalorder %s159, %s161
      %p168 = scmp.eq.s32.totalorder %s25, 1
      %p169 = por %p167, %p168
      %p170 = scmp.ne.s32.totalorder %s161, %s162
      %p171 = scmp.eq.s32.totalorder %s25, 0
      %p172 = por %p170, %p171
      %p173 = scmp.ne.s32.totalorder %s161, %s162
      %p174 = scmp.eq.s32.totalorder %s26, 1
      %p175 = por %p173, %p174
      %p177 = scmp.ne.s32.totalorder %s162, %s176
      %p178 = scmp.eq.s32.totalorder %s26, 0
      %p179 = por %p177, %p178
      %s181 = sadd.s32 %s180, 1
      %p184 = scmp.eq.s32.totalorder %s20, 1
      %p185 = scmp.ne.s32.totalorder %s180, %s182
      %p186 = scmp.eq.s32.totalorder %s20, 0
      %p187 = por %p185, %p186
      %p188 = scmp.ne.s32.totalorder %s180, %s182
      %p189 = scmp.eq.s32.totalorder %s25, 1
      %p190 = por %p188, %p189
      %p191 = scmp.ne.s32.totalorder %s182, %s183
      %p192 = scmp.eq.s32.totalorder %s25, 0
      %p193 = por %p191, %p192
      %p194 = scmp.ne.s32.totalorder %s182, %s183
      %p195 = scmp.eq.s32.totalorder %s26, 1
      %p196 = por %p194, %p195
      %p198 = scmp.ne.s32.totalorder %s183, %s197
      %p199 = scmp.eq.s32.totalorder %s26, 0
      %p200 = por %p198, %p199
      %s202 = sadd.s32 %s201, 1
      %p205 = scmp.eq.s32.totalorder %s20, 1
      %p206 = scmp.ne.s32.totalorder %s201, %s203
      %p207 = scmp.eq.s32.totalorder %s20, 0
      %p208 = por %p206, %p207
      %p209 = scmp.ne.s32.totalorder %s201, %s203
      %p210 = scmp.eq.s32.totalorder %s25, 1
      %p211 = por %p209, %p210
      %p212 = scmp.ne.s32.totalorder %s203, %s204
      %p213 = scmp.eq.s32.totalorder %s25, 0
      %p214 = por %p212, %p213
      %p215 = scmp.ne.s32.totalorder %s203, %s204
      %p216 = scmp.eq.s32.totalorder %s26, 1
      %p217 = por %p215, %p216
      %p219 = scmp.ne.s32.totalorder %s204, %s218
      %p220 = scmp.eq.s32.totalorder %s26, 0
      %p221 = por %p219, %p220
      %s222 = ssub.s32 %s20, %s27
      %p223 = scmp.eq.s32.totalorder %s222, 0
      %s225 = sadd.s32 %s224, 1
      %s226 = scalar_select %p223, %s224, %s225
      %p229 = pneg %p223
      %p230 = scmp.eq.s32.totalorder %s20, 1
      %p231 = por %p229, %p230
      %p232 = scmp.ne.s32.totalorder %s224, %s227
      %p233 = scmp.eq.s32.totalorder %s20, 0
      %p234 = por %p232, %p233
      %p235 = scmp.ne.s32.totalorder %s224, %s227
      %p236 = scmp.eq.s32.totalorder %s25, 1
      %p237 = por %p235, %p236
      %p238 = scmp.ne.s32.totalorder %s227, %s228
      %p239 = scmp.eq.s32.totalorder %s25, 0
      %p240 = por %p238, %p239
      %p241 = scmp.ne.s32.totalorder %s227, %s228
      %p242 = scmp.eq.s32.totalorder %s26, 1
      %p243 = por %p241, %p242
      %p245 = scmp.ne.s32.totalorder %s228, %s244
      %p246 = scmp.eq.s32.totalorder %s26, 0
      %p247 = por %p245, %p246
      %p248 = scmp.le.s32.totalorder 1, %s20
      %p249 = scmp.lt.s32.totalorder %s20, 3
      %p250 = pnand %p248, %p249
      %p251 = pneg %p250
      // Predicated region
      $region9: #{tpu_custom_call.1} parent=5 // pred_check
        _
      $region10: #{tpu_custom_call.1} parent=5 // pred_check_branch
        %253 = sbr.rel (%p250) target = $region12
      $region11: #{tpu_custom_call.1} parent=5 // pred_region
        %s254 = ssub.s32 %s20, 1
        // Predicated region
        $region13: #{tpu_custom_call.1} parent=11 // pred_check
          %p255 = pneg %p67
        $region14: #{tpu_custom_call.1} parent=11 // pred_check_branch
          %257 = sbr.rel (%p255) target = $region16
        $region15: #{tpu_custom_call.1} parent=11 // pred_region
          _
        $region16: #{tpu_custom_call.1} parent=11 // pred_fallthru
          _
        // Predicated region
        $region17: #{tpu_custom_call.1} parent=11 // pred_check
          %p258 = pneg %p88
        $region18: #{tpu_custom_call.1} parent=11 // pred_check_branch
          %260 = sbr.rel (%p258) target = $region20
        $region19: #{tpu_custom_call.1} parent=11 // pred_region
          _
        $region20: #{tpu_custom_call.1} parent=11 // pred_fallthru
          _
        // Predicated region
        $region21: #{tpu_custom_call.1} parent=11 // pred_check
          %p261 = pneg %p109
        $region22: #{tpu_custom_call.1} parent=11 // pred_check_branch
          %263 = sbr.rel (%p261) target = $region24
        $region23: #{tpu_custom_call.1} parent=11 // pred_region
          %s265 = ssub.s32 8192, 8192
          %266 = vsyncadd [#allocation3], %s265
          %s267 = sshll.u32 [#allocation2], 4
          %s268 = int_to_ptr.vmem [resolvable:$true] %s267
          %273 = dma.hbm_to_vmem [thread:$0]  %s3, 8192, %s268, [#allocation3], 256, 256, 16
        $region24: #{tpu_custom_call.1} parent=11 // pred_fallthru
          _
        // Predicated region
        $region25: #{tpu_custom_call.1} parent=11 // pred_check
          %p274 = pneg %p130
        $region26: #{tpu_custom_call.1} parent=11 // pred_check_branch
          %276 = sbr.rel (%p274) target = $region28
        $region27: #{tpu_custom_call.1} parent=11 // pred_region
          _
        $region28: #{tpu_custom_call.1} parent=11 // pred_fallthru
          _
        // Predicated region
        $region29: #{tpu_custom_call.1} parent=11 // pred_check
          %p277 = pneg %p151
        $region30: #{tpu_custom_call.1} parent=11 // pred_check_branch
          %279 = sbr.rel (%p277) target = $region32
        $region31: #{tpu_custom_call.1} parent=11 // pred_region
          %s281 = ssub.s32 32768, 32768
          %282 = vsyncadd [#allocation6], %s281
          %s283 = sshll.u32 [#allocation5], 4
          %s284 = int_to_ptr.vmem [resolvable:$true] %s283
          %289 = dma.hbm_to_vmem [thread:$0]  %s5, 32768, %s284, [#allocation6], 512, 512, 32
        $region32: #{tpu_custom_call.1} parent=11 // pred_fallthru
          _
        // Predicated region
        $region33: #{tpu_custom_call.1} parent=11 // pred_check
          %p290 = pneg %p172
        $region34: #{tpu_custom_call.1} parent=11 // pred_check_branch
          %292 = sbr.rel (%p290) target = $region36
        $region35: #{tpu_custom_call.1} parent=11 // pred_region
          _
        $region36: #{tpu_custom_call.1} parent=11 // pred_fallthru
          _
        // Predicated region
        $region37: #{tpu_custom_call.1} parent=11 // pred_check
          %p293 = pneg %p193
        $region38: #{tpu_custom_call.1} parent=11 // pred_check_branch
          %295 = sbr.rel (%p293) target = $region40
        $region39: #{tpu_custom_call.1} parent=11 // pred_region
          %s297 = ssub.s32 8192, 8192
          %298 = vsyncadd [#allocation6], %s297
          %s299 = sshll.u32 [#allocation7], 4
          %s300 = int_to_ptr.vmem [resolvable:$true] %s299
          %305 = dma.hbm_to_vmem [thread:$0]  %s7, 8192, %s300, [#allocation6], 64, 64, 4
        $region40: #{tpu_custom_call.1} parent=11 // pred_fallthru
          _
        // Predicated region
        $region41: #{tpu_custom_call.1} parent=11 // pred_check
          %p306 = pneg %p214
        $region42: #{tpu_custom_call.1} parent=11 // pred_check_branch
          %308 = sbr.rel (%p306) target = $region44
        $region43: #{tpu_custom_call.1} parent=11 // pred_region
          _
        $region44: #{tpu_custom_call.1} parent=11 // pred_fallthru
          _
      $region12: #{tpu_custom_call.1} parent=5 // pred_fallthru
        _
      %p309 = scmp.lt.s32.totalorder %s20, 2
      // Predicated region
      $region45: #{tpu_custom_call.1} parent=5 // pred_check
        %p310 = pneg %p309
      $region46: #{tpu_custom_call.1} parent=5 // pred_check_branch
        %312 = sbr.rel (%p310) target = $region48
      $region47: #{tpu_custom_call.1} parent=5 // pred_region
        // Predicated region
        $region49: #{tpu_custom_call.1} parent=47 // pred_check
          %p313 = pneg %p40
        $region50: #{tpu_custom_call.1} parent=47 // pred_check_branch
          %315 = sbr.rel (%p313) target = $region52
        $region51: #{tpu_custom_call.1} parent=47 // pred_region
          %s316 = smul.u32 4, %s20
          %p317 = scmp.lt.s32.totalorder %s316, 7
          %s318 = scalar_select %p317, %s316, 7
          %s319 = smul.addr %s318, 4
          %s320 = scalar_lea.vmem %s0, %s319
          %s321 = smul.u32 4, %s20
        $region52: #{tpu_custom_call.1} parent=47 // pred_fallthru
          _
      $region48: #{tpu_custom_call.1} parent=5 // pred_fallthru
        _
      %p322 = scmp.le.s32.totalorder 1, %s20
      %p323 = scmp.lt.s32.totalorder %s20, 3
      %p324 = pnand %p322, %p323
      %p325 = pneg %p324
      // Predicated region
      $region53: #{tpu_custom_call.1} parent=5 // pred_check
        _
      $region54: #{tpu_custom_call.1} parent=5 // pred_check_branch
        %327 = sbr.rel (%p324) target = $region56
      $region55: #{tpu_custom_call.1} parent=5 // pred_region
        %s328 = ssub.s32 %s20, 1
        // Predicated region
        $region57: #{tpu_custom_call.1} parent=55 // pred_check
          %p329 = pneg %p109
        $region58: #{tpu_custom_call.1} parent=55 // pred_check_branch
          %331 = sbr.rel (%p329) target = $region60
        $region59: #{tpu_custom_call.1} parent=55 // pred_region
          %332 = dma.done [#allocation3], 8192
        $region60: #{tpu_custom_call.1} parent=55 // pred_fallthru
          _
        // Predicated region
        $region61: #{tpu_custom_call.1} parent=55 // pred_check
          %p333 = pneg %p151
        $region62: #{tpu_custom_call.1} parent=55 // pred_check_branch
          %335 = sbr.rel (%p333) target = $region64
        $region63: #{tpu_custom_call.1} parent=55 // pred_region
          %336 = dma.done [#allocation6], 32768
        $region64: #{tpu_custom_call.1} parent=55 // pred_fallthru
          _
        // Predicated region
        $region65: #{tpu_custom_call.1} parent=55 // pred_check
          %p337 = pneg %p193
        $region66: #{tpu_custom_call.1} parent=55 // pred_check_branch
          %339 = sbr.rel (%p337) target = $region68
        $region67: #{tpu_custom_call.1} parent=55 // pred_region
          %340 = dma.done [#allocation6], 8192
        $region68: #{tpu_custom_call.1} parent=55 // pred_fallthru
          _
        %s341 = smul.u32 4, %s25
        %p342 = scmp.lt.s32.totalorder %s341, 7
        %s343 = scalar_select %p342, %s341, 7
        %s344 = smul.addr %s343, 4
        %s345 = scalar_lea.vmem %s0, %s344
        %p346 = pneg %p46
        %p347 = pneg %p43
        %p348 = pneg %p67
        %p349 = pneg %p64
        %p350 = pneg %p88
        %p351 = pneg %p85
        %p352 = pneg %p109
        %p353 = pneg %p106
        %p354 = pneg %p130
        %p355 = pneg %p127
        %p356 = pneg %p151
        %p357 = pneg %p148
        %p358 = pneg %p172
        %p359 = pneg %p169
        %p360 = pneg %p193
        %p361 = pneg %p190
        %p362 = pneg %p214
        %p363 = pneg %p211
        %p364 = pneg %p240
        %p365 = pneg %p237
        %s366 = sand.u32 %s227, 1
        %s367 = scalar_lea.sflag [#allocation4], %s366
        %s368 = sand.u32 %s227, 1
        %s369 = smul.addr %s368, 32
        %s370 = scalar_lea.vmem [#allocation8], %s369
        %s371 = smul.u32 4, %s25
        %p372 = scmp.lt.s32.totalorder %s371, 7
        %s373 = scalar_select %p372, %s371, 7
        %s374 = smul.addr %s373, 4
        %s375 = scalar_lea.vmem %s0, %s374
        %s376 = smul.u32 4, %s25
        %s377 = smul.u32 4, %s25
        %v379 = vld [vmem:[%s375] sm:$0xf]
        %v380 = vld [vmem:[%s375 + $0x4] sm:$0xf]
        %v381 = vld [vmem:[%s375 + $0x8] sm:$0xf]
        %v382 = vld [vmem:[%s375 + $0xc] sm:$0xf]
        %v383 = vld [vmem:[%s1] sm:$0xff]
        %v384 = vld [vmem:[%s1 + $0x8] sm:$0xff]
        %v385 = vld [vmem:[%s1 + $0x10] sm:$0xff]
        %v386 = vld [vmem:[%s1 + $0x18] sm:$0xff]
        %v391 = vunpack.c.l.b16 %v379
        %v392 = vunpack.c.l.b16 %v380
        %v393 = vunpack.c.l.b16 %v381
        %v394 = vunpack.c.l.b16 %v382
        %v395 = vpack.c.b16 %v392, %v391
        %v396 = vpack.c.b16 %v394, %v393
        %v401 = vunpack.c.l.b16 %v383
        %v402 = vunpack.c.h.b16 %v383
        %v403 = vunpack.c.l.b16 %v384
        %v404 = vunpack.c.h.b16 %v384
        %v405 = vunpack.c.l.b16 %v385
        %v406 = vunpack.c.h.b16 %v385
        %v407 = vunpack.c.l.b16 %v386
        %v408 = vunpack.c.h.b16 %v386
        %v409 = vpack.c.b16 %v403, %v401
        %v410 = vpack.c.b16 %v404, %v402
        %v411 = vpack.c.b16 %v407, %v405
        %v412 = vpack.c.b16 %v408, %v406
        %vm417 = vcmask 261120
        %v419 = vsel %vm417, %v395, 0
        %v422 = vsel %vm417, %v396, 0
        %424 = vmatprep.subr.bf16.mxu0 0
        %425 = vmatpush1.bf16.msra.mxu0 0
        %426 = vmatprep.subr.bf16.mxu0 0
        %427 = vmatpush1.bf16.msra.mxu0 0
        %428 = vmatprep.subr.bf16.mxu0 0
        %429 = vmatpush1.bf16.msra.mxu0 0
        %430 = vmatprep.subr.bf16.mxu0 0
        %431 = vmatpush1.bf16.msra.mxu0 0
        %432 = vmatprep.subr.bf16.mxu0 0
        %433 = vmatpush1.bf16.msra.mxu0 0
        %434 = vmatprep.subr.bf16.mxu0 0
        %435 = vmatpush1.bf16.msra.mxu0 0
        %436 = vmatprep.subr.bf16.mxu0 %v412
        %437 = vmatpush1.bf16.msra.mxu0 %v411
        %438 = vmatprep.subr.bf16.mxu0 %v410
        %439 = vmatpush1.bf16.msra.mxu0 %v409
        %440 = vmatprep.subr.bf16.mxu0 0
        %441 = vmatpush2.bf16.msra.mxu0 0
        %442 = vmatprep.subr.bf16.mxu0 0
        %443 = vmatpush2.bf16.msra.mxu0 0
        %444 = vmatprep.subr.bf16.mxu0 0
        %445 = vmatpush2.bf16.msra.mxu0 0
        %446 = vmatprep.subr.bf16.mxu0 0
        %447 = vmatpush2.bf16.msra.mxu0 0
        %448 = vmatprep.subr.bf16.mxu0 0
        %449 = vmatpush2.bf16.msra.mxu0 0
        %450 = vmatprep.subr.bf16.mxu0 0
        %451 = vmatpush2.bf16.msra.mxu0 0
        %452 = vmatprep.subr.bf16.mxu0 0
        %453 = vmatpush2.bf16.msra.mxu0 0
        %454 = vmatprep.subr.bf16.mxu0 0
        %455 = vmatpush2.bf16.msra.mxu0 0
        %456 = vmatprep.mubr.bf16.mxu0 0
        %457 = vmatmul.mubr.bf16.gmra.mxu0 %v419
        %v458 = vpop.f32.mrf.mxu0
        %v459 = vadd.f32 0.0, %v458
        %v460 = vpop.f32.mrf.mxu0
        %v461 = vadd.f32 0.0, %v460
        %v462 = vpop.f32.mrf.mxu0
        %v463 = vadd.f32 0.0, %v462
        %v464 = vpop.f32.mrf.mxu0
        %v465 = vadd.f32 0.0, %v464
        %466 = vmatprep.mubr.bf16.mxu0 0
        %467 = vmatmul.mubr.bf16.gmra.mxu0 %v422
        %v468 = vpop.f32.mrf.mxu0
        %v469 = vadd.f32 0.0, %v468
        %v470 = vpop.f32.mrf.mxu0
        %v471 = vadd.f32 0.0, %v470
        %v472 = vpop.f32.mrf.mxu0
        %v473 = vadd.f32 0.0, %v472
        %v474 = vpop.f32.mrf.mxu0
        %v475 = vadd.f32 0.0, %v474
        %476 = vdwg.mxu0
        %v477 = vpack.c.bf16 %v463, %v459
        %v478 = vpack.c.bf16 %v465, %v461
        %v479 = vpack.c.bf16 %v473, %v469
        %v480 = vpack.c.bf16 %v475, %v471
        %v481 = vld [vmem:[%s2] sm:$0x3]
        %v484 = vunpack.c.l.s4 1966171168
        %v485 = vunpack.c.0.s8 %v484
        %v486 = vlaneseq
        %v487 = vshrl.u32 %v486, 7
        %v488 = vsub.s32 %v485, %v487
        %v489 = vrot.slane %v481, %v488
        %v490 = vcombine.high %v489, %v489
        %v492 = vunpack.c.l.s4 1966171168
        %v493 = vunpack.c.0.s8 %v492
        %v494 = vlaneseq
        %v495 = vshrl.u32 %v494, 7
        %v496 = vsub.s32 %v493, %v495
        %v497 = vrot.slane %v489, %v496
        %v499 = vunpack.c.l.s4 1966171168
        %v500 = vunpack.c.0.s8 %v499
        %v501 = vlaneseq
        %v502 = vshrl.u32 %v501, 7
        %v503 = vsub.s32 %v500, %v502
        %v504 = vrot.slane %v490, %v503
        %v506 = vpack.i.b16 %v497, %v497
        %v508 = vlaneseq
        %v509 = vshrl.u32 %v508, 7
        %v510 = vsub.s32 0, %v509
        %v511 = vrot.slane %v506, %v510
        %v513 = vpack.i.b16 %v504, %v504
        %v515 = vlaneseq
        %v516 = vshrl.u32 %v515, 7
        %v517 = vsub.s32 0, %v516
        %v518 = vrot.slane %v513, %v517
        %v519 = vadd.bf16 %v477, %v511
        %v520 = vadd.bf16 %v478, %v518
        %v521 = vadd.bf16 %v479, %v511
        %v522 = vadd.bf16 %v480, %v518
        %v523 = vmax.bf16 %v519, 0
        %v524 = vmax.bf16 %v520, 0
        %v525 = vmax.bf16 %v521, 0
        %v526 = vmax.bf16 %v522, 0
        %v527 = vld [vmem:[#allocation2] sm:$0xff]
        %v528 = vld [vmem:[#allocation2 + $0x8] sm:$0xff]
        %v529 = vld [vmem:[#allocation2 + $0x10] sm:$0xff]
        %v530 = vld [vmem:[#allocation2 + $0x18] sm:$0xff]
        %v531 = vld [vmem:[#allocation2 + $0x20] sm:$0xff]
        %v532 = vld [vmem:[#allocation2 + $0x28] sm:$0xff]
        %v533 = vld [vmem:[#allocation2 + $0x30] sm:$0xff]
        %v534 = vld [vmem:[#allocation2 + $0x38] sm:$0xff]
        %v535 = vld [vmem:[#allocation2 + $0x40] sm:$0xff]
        %v536 = vld [vmem:[#allocation2 + $0x48] sm:$0xff]
        %v537 = vld [vmem:[#allocation2 + $0x50] sm:$0xff]
        %v538 = vld [vmem:[#allocation2 + $0x58] sm:$0xff]
        %v539 = vld [vmem:[#allocation2 + $0x60] sm:$0xff]
        %v540 = vld [vmem:[#allocation2 + $0x68] sm:$0xff]
        %v541 = vld [vmem:[#allocation2 + $0x70] sm:$0xff]
        %v542 = vld [vmem:[#allocation2 + $0x78] sm:$0xff]
        %v543 = vld [vmem:[#allocation2 + $0x80] sm:$0xff]
        %v544 = vld [vmem:[#allocation2 + $0x88] sm:$0xff]
        %v545 = vld [vmem:[#allocation2 + $0x90] sm:$0xff]
        %v546 = vld [vmem:[#allocation2 + $0x98] sm:$0xff]
        %v547 = vld [vmem:[#allocation2 + $0xa0] sm:$0xff]
        %v548 = vld [vmem:[#allocation2 + $0xa8] sm:$0xff]
        %v549 = vld [vmem:[#allocation2 + $0xb0] sm:$0xff]
        %v550 = vld [vmem:[#allocation2 + $0xb8] sm:$0xff]
        %v551 = vld [vmem:[#allocation2 + $0xc0] sm:$0xff]
        %v552 = vld [vmem:[#allocation2 + $0xc8] sm:$0xff]
        %v553 = vld [vmem:[#allocation2 + $0xd0] sm:$0xff]
        %v554 = vld [vmem:[#allocation2 + $0xd8] sm:$0xff]
        %v555 = vld [vmem:[#allocation2 + $0xe0] sm:$0xff]
        %v556 = vld [vmem:[#allocation2 + $0xe8] sm:$0xff]
        %v557 = vld [vmem:[#allocation2 + $0xf0] sm:$0xff]
        %v558 = vld [vmem:[#allocation2 + $0xf8] sm:$0xff]
        %v559 = vld [vmem:[#allocation2 + $0x100] sm:$0xff]
        %v560 = vld [vmem:[#allocation2 + $0x108] sm:$0xff]
        %v561 = vld [vmem:[#allocation2 + $0x110] sm:$0xff]
        %v562 = vld [vmem:[#allocation2 + $0x118] sm:$0xff]
        %v563 = vld [vmem:[#allocation2 + $0x120] sm:$0xff]
        %v564 = vld [vmem:[#allocation2 + $0x128] sm:$0xff]
        %v565 = vld [vmem:[#allocation2 + $0x130] sm:$0xff]
        %v566 = vld [vmem:[#allocation2 + $0x138] sm:$0xff]
        %v567 = vld [vmem:[#allocation2 + $0x140] sm:$0xff]
        %v568 = vld [vmem:[#allocation2 + $0x148] sm:$0xff]
        %v569 = vld [vmem:[#allocation2 + $0x150] sm:$0xff]
        %v570 = vld [vmem:[#allocation2 + $0x158] sm:$0xff]
        %v571 = vld [vmem:[#allocation2 + $0x160] sm:$0xff]
        %v572 = vld [vmem:[#allocation2 + $0x168] sm:$0xff]
        %v573 = vld [vmem:[#allocation2 + $0x170] sm:$0xff]
        %v574 = vld [vmem:[#allocation2 + $0x178] sm:$0xff]
        %v575 = vld [vmem:[#allocation2 + $0x180] sm:$0xff]
        %v576 = vld [vmem:[#allocation2 + $0x188] sm:$0xff]
        %v577 = vld [vmem:[#allocation2 + $0x190] sm:$0xff]
        %v578 = vld [vmem:[#allocation2 + $0x198] sm:$0xff]
        %v579 = vld [vmem:[#allocation2 + $0x1a0] sm:$0xff]
        %v580 = vld [vmem:[#allocation2 + $0x1a8] sm:$0xff]
        %v581 = vld [vmem:[#allocation2 + $0x1b0] sm:$0xff]
        %v582 = vld [vmem:[#allocation2 + $0x1b8] sm:$0xff]
        %v583 = vld [vmem:[#allocation2 + $0x1c0] sm:$0xff]
        %v584 = vld [vmem:[#allocation2 + $0x1c8] sm:$0xff]
        %v585 = vld [vmem:[#allocation2 + $0x1d0] sm:$0xff]
        %v586 = vld [vmem:[#allocation2 + $0x1d8] sm:$0xff]
        %v587 = vld [vmem:[#allocation2 + $0x1e0] sm:$0xff]
        %v588 = vld [vmem:[#allocation2 + $0x1e8] sm:$0xff]
        %v589 = vld [vmem:[#allocation2 + $0x1f0] sm:$0xff]
        %v590 = vld [vmem:[#allocation2 + $0x1f8] sm:$0xff]
        %v655 = vunpack.c.l.b16 %v527
        %v656 = vunpack.c.h.b16 %v527
        %v657 = vunpack.c.l.b16 %v528
        %v658 = vunpack.c.h.b16 %v528
        %v659 = vunpack.c.l.b16 %v529
        %v660 = vunpack.c.h.b16 %v529
        %v661 = vunpack.c.l.b16 %v530
        %v662 = vunpack.c.h.b16 %v530
        %v663 = vunpack.c.l.b16 %v531
        %v664 = vunpack.c.h.b16 %v531
        %v665 = vunpack.c.l.b16 %v532
        %v666 = vunpack.c.h.b16 %v532
        %v667 = vunpack.c.l.b16 %v533
        %v668 = vunpack.c.h.b16 %v533
        %v669 = vunpack.c.l.b16 %v534
        %v670 = vunpack.c.h.b16 %v534
        %v671 = vunpack.c.l.b16 %v535
        %v672 = vunpack.c.h.b16 %v535
        %v673 = vunpack.c.l.b16 %v536
        %v674 = vunpack.c.h.b16 %v536
        %v675 = vunpack.c.l.b16 %v537
        %v676 = vunpack.c.h.b16 %v537
        %v677 = vunpack.c.l.b16 %v538
        %v678 = vunpack.c.h.b16 %v538
        %v679 = vunpack.c.l.b16 %v539
        %v680 = vunpack.c.h.b16 %v539
        %v681 = vunpack.c.l.b16 %v540
        %v682 = vunpack.c.h.b16 %v540
        %v683 = vunpack.c.l.b16 %v541
        %v684 = vunpack.c.h.b16 %v541
        %v685 = vunpack.c.l.b16 %v542
        %v686 = vunpack.c.h.b16 %v542
        %v687 = vunpack.c.l.b16 %v543
        %v688 = vunpack.c.h.b16 %v543
        %v689 = vunpack.c.l.b16 %v544
        %v690 = vunpack.c.h.b16 %v544
        %v691 = vunpack.c.l.b16 %v545
        %v692 = vunpack.c.h.b16 %v545
        %v693 = vunpack.c.l.b16 %v546
        %v694 = vunpack.c.h.b16 %v546
        %v695 = vunpack.c.l.b16 %v547
        %v696 = vunpack.c.h.b16 %v547
        %v697 = vunpack.c.l.b16 %v548
        %v698 = vunpack.c.h.b16 %v548
        %v699 = vunpack.c.l.b16 %v549
        %v700 = vunpack.c.h.b16 %v549
        %v701 = vunpack.c.l.b16 %v550
        %v702 = vunpack.c.h.b16 %v550
        %v703 = vunpack.c.l.b16 %v551
        %v704 = vunpack.c.h.b16 %v551
        %v705 = vunpack.c.l.b16 %v552
        %v706 = vunpack.c.h.b16 %v552
        %v707 = vunpack.c.l.b16 %v553
        %v708 = vunpack.c.h.b16 %v553
        %v709 = vunpack.c.l.b16 %v554
        %v710 = vunpack.c.h.b16 %v554
        %v711 = vunpack.c.l.b16 %v555
        %v712 = vunpack.c.h.b16 %v555
        %v713 = vunpack.c.l.b16 %v556
        %v714 = vunpack.c.h.b16 %v556
        %v715 = vunpack.c.l.b16 %v557
        %v716 = vunpack.c.h.b16 %v557
        %v717 = vunpack.c.l.b16 %v558
        %v718 = vunpack.c.h.b16 %v558
        %v719 = vunpack.c.l.b16 %v559
        %v720 = vunpack.c.h.b16 %v559
        %v721 = vunpack.c.l.b16 %v560
        %v722 = vunpack.c.h.b16 %v560
        %v723 = vunpack.c.l.b16 %v561
        %v724 = vunpack.c.h.b16 %v561
        %v725 = vunpack.c.l.b16 %v562
        %v726 = vunpack.c.h.b16 %v562
        %v727 = vunpack.c.l.b16 %v563
        %v728 = vunpack.c.h.b16 %v563
        %v729 = vunpack.c.l.b16 %v564
        %v730 = vunpack.c.h.b16 %v564
        %v731 = vunpack.c.l.b16 %v565
        %v732 = vunpack.c.h.b16 %v565
        %v733 = vunpack.c.l.b16 %v566
        %v734 = vunpack.c.h.b16 %v566
        %v735 = vunpack.c.l.b16 %v567
        %v736 = vunpack.c.h.b16 %v567
        %v737 = vunpack.c.l.b16 %v568
        %v738 = vunpack.c.h.b16 %v568
        %v739 = vunpack.c.l.b16 %v569
        %v740 = vunpack.c.h.b16 %v569
        %v741 = vunpack.c.l.b16 %v570
        %v742 = vunpack.c.h.b16 %v570
        %v743 = vunpack.c.l.b16 %v571
        %v744 = vunpack.c.h.b16 %v571
        %v745 = vunpack.c.l.b16 %v572
        %v746 = vunpack.c.h.b16 %v572
        %v747 = vunpack.c.l.b16 %v573
        %v748 = vunpack.c.h.b16 %v573
        %v749 = vunpack.c.l.b16 %v574
        %v750 = vunpack.c.h.b16 %v574
        %v751 = vunpack.c.l.b16 %v575
        %v752 = vunpack.c.h.b16 %v575
        %v753 = vunpack.c.l.b16 %v576
        %v754 = vunpack.c.h.b16 %v576
        %v755 = vunpack.c.l.b16 %v577
        %v756 = vunpack.c.h.b16 %v577
        %v757 = vunpack.c.l.b16 %v578
        %v758 = vunpack.c.h.b16 %v578
        %v759 = vunpack.c.l.b16 %v579
        %v760 = vunpack.c.h.b16 %v579
        %v761 = vunpack.c.l.b16 %v580
        %v762 = vunpack.c.h.b16 %v580
        %v763 = vunpack.c.l.b16 %v581
        %v764 = vunpack.c.h.b16 %v581
        %v765 = vunpack.c.l.b16 %v582
        %v766 = vunpack.c.h.b16 %v582
        %v767 = vunpack.c.l.b16 %v583
        %v768 = vunpack.c.h.b16 %v583
        %v769 = vunpack.c.l.b16 %v584
        %v770 = vunpack.c.h.b16 %v584
        %v771 = vunpack.c.l.b16 %v585
        %v772 = vunpack.c.h.b16 %v585
        %v773 = vunpack.c.l.b16 %v586
        %v774 = vunpack.c.h.b16 %v586
        %v775 = vunpack.c.l.b16 %v587
        %v776 = vunpack.c.h.b16 %v587
        %v777 = vunpack.c.l.b16 %v588
        %v778 = vunpack.c.h.b16 %v588
        %v779 = vunpack.c.l.b16 %v589
        %v780 = vunpack.c.h.b16 %v589
        %v781 = vunpack.c.l.b16 %v590
        %v782 = vunpack.c.h.b16 %v590
        %v783 = vpack.c.b16 %v659, %v655
        %v784 = vpack.c.b16 %v660, %v656
        %v785 = vpack.c.b16 %v661, %v657
        %v786 = vpack.c.b16 %v662, %v658
        %v787 = vpack.c.b16 %v667, %v663
        %v788 = vpack.c.b16 %v668, %v664
        %v789 = vpack.c.b16 %v669, %v665
        %v790 = vpack.c.b16 %v670, %v666
        %v791 = vpack.c.b16 %v675, %v671
        %v792 = vpack.c.b16 %v676, %v672
        %v793 = vpack.c.b16 %v677, %v673
        %v794 = vpack.c.b16 %v678, %v674
        %v795 = vpack.c.b16 %v683, %v679
        %v796 = vpack.c.b16 %v684, %v680
        %v797 = vpack.c.b16 %v685, %v681
        %v798 = vpack.c.b16 %v686, %v682
        %v799 = vpack.c.b16 %v691, %v687
        %v800 = vpack.c.b16 %v692, %v688
        %v801 = vpack.c.b16 %v693, %v689
        %v802 = vpack.c.b16 %v694, %v690
        %v803 = vpack.c.b16 %v699, %v695
        %v804 = vpack.c.b16 %v700, %v696
        %v805 = vpack.c.b16 %v701, %v697
        %v806 = vpack.c.b16 %v702, %v698
        %v807 = vpack.c.b16 %v707, %v703
        %v808 = vpack.c.b16 %v708, %v704
        %v809 = vpack.c.b16 %v709, %v705
        %v810 = vpack.c.b16 %v710, %v706
        %v811 = vpack.c.b16 %v715, %v711
        %v812 = vpack.c.b16 %v716, %v712
        %v813 = vpack.c.b16 %v717, %v713
        %v814 = vpack.c.b16 %v718, %v714
        %v815 = vpack.c.b16 %v723, %v719
        %v816 = vpack.c.b16 %v724, %v720
        %v817 = vpack.c.b16 %v725, %v721
        %v818 = vpack.c.b16 %v726, %v722
        %v819 = vpack.c.b16 %v731, %v727
        %v820 = vpack.c.b16 %v732, %v728
        %v821 = vpack.c.b16 %v733, %v729
        %v822 = vpack.c.b16 %v734, %v730
        %v823 = vpack.c.b16 %v739, %v735
        %v824 = vpack.c.b16 %v740, %v736
        %v825 = vpack.c.b16 %v741, %v737
        %v826 = vpack.c.b16 %v742, %v738
        %v827 = vpack.c.b16 %v747, %v743
        %v828 = vpack.c.b16 %v748, %v744
        %v829 = vpack.c.b16 %v749, %v745
        %v830 = vpack.c.b16 %v750, %v746
        %v831 = vpack.c.b16 %v755, %v751
        %v832 = vpack.c.b16 %v756, %v752
        %v833 = vpack.c.b16 %v757, %v753
        %v834 = vpack.c.b16 %v758, %v754
        %v835 = vpack.c.b16 %v763, %v759
        %v836 = vpack.c.b16 %v764, %v760
        %v837 = vpack.c.b16 %v765, %v761
        %v838 = vpack.c.b16 %v766, %v762
        %v839 = vpack.c.b16 %v771, %v767
        %v840 = vpack.c.b16 %v772, %v768
        %v841 = vpack.c.b16 %v773, %v769
        %v842 = vpack.c.b16 %v774, %v770
        %v843 = vpack.c.b16 %v779, %v775
        %v844 = vpack.c.b16 %v780, %v776
        %v845 = vpack.c.b16 %v781, %v777
        %v846 = vpack.c.b16 %v782, %v778
        %911 = vmatprep.subr.bf16.mxu0 %v812
        %912 = vmatpush1.bf16.msra.mxu0 %v811
        %913 = vmatprep.subr.bf16.mxu0 %v808
        %914 = vmatpush1.bf16.msra.mxu0 %v807
        %915 = vmatprep.subr.bf16.mxu0 %v804
        %916 = vmatpush1.bf16.msra.mxu0 %v803
        %917 = vmatprep.subr.bf16.mxu0 %v800
        %918 = vmatpush1.bf16.msra.mxu0 %v799
        %919 = vmatprep.subr.bf16.mxu0 %v796
        %920 = vmatpush1.bf16.msra.mxu0 %v795
        %921 = vmatprep.subr.bf16.mxu0 %v792
        %922 = vmatpush1.bf16.msra.mxu0 %v791
        %923 = vmatprep.subr.bf16.mxu0 %v788
        %924 = vmatpush1.bf16.msra.mxu0 %v787
        %925 = vmatprep.subr.bf16.mxu0 %v784
        %926 = vmatpush1.bf16.msra.mxu0 %v783
        %927 = vmatprep.subr.bf16.mxu0 %v844
        %928 = vmatpush2.bf16.msra.mxu0 %v843
        %929 = vmatprep.subr.bf16.mxu0 %v840
        %930 = vmatpush2.bf16.msra.mxu0 %v839
        %931 = vmatprep.subr.bf16.mxu0 %v836
        %932 = vmatpush2.bf16.msra.mxu0 %v835
        %933 = vmatprep.subr.bf16.mxu0 %v832
        %934 = vmatpush2.bf16.msra.mxu0 %v831
        %935 = vmatprep.subr.bf16.mxu0 %v828
        %936 = vmatpush2.bf16.msra.mxu0 %v827
        %937 = vmatprep.subr.bf16.mxu0 %v824
        %938 = vmatpush2.bf16.msra.mxu0 %v823
        %939 = vmatprep.subr.bf16.mxu0 %v820
        %940 = vmatpush2.bf16.msra.mxu0 %v819
        %941 = vmatprep.subr.bf16.mxu0 %v816
        %942 = vmatpush2.bf16.msra.mxu0 %v815
        %943 = vmatprep.mubr.bf16.mxu0 %v524
        %944 = vmatmul.mubr.bf16.gmra.mxu0 %v523
        %v945 = vpop.f32.mrf.mxu0
        %v946 = vadd.f32 0.0, %v945
        %v947 = vpop.f32.mrf.mxu0
        %v948 = vadd.f32 0.0, %v947
        %v949 = vpop.f32.mrf.mxu0
        %v950 = vadd.f32 0.0, %v949
        %v951 = vpop.f32.mrf.mxu0
        %v952 = vadd.f32 0.0, %v951
        %953 = vmatprep.mubr.bf16.mxu0 %v526
        %954 = vmatmul.mubr.bf16.gmra.mxu0 %v525
        %v955 = vpop.f32.mrf.mxu0
        %v956 = vadd.f32 0.0, %v955
        %v957 = vpop.f32.mrf.mxu0
        %v958 = vadd.f32 0.0, %v957
        %v959 = vpop.f32.mrf.mxu0
        %v960 = vadd.f32 0.0, %v959
        %v961 = vpop.f32.mrf.mxu0
        %v962 = vadd.f32 0.0, %v961
        %963 = vdwg.mxu0
        %964 = vmatprep.subr.bf16.mxu0 %v814
        %965 = vmatpush1.bf16.msra.mxu0 %v813
        %966 = vmatprep.subr.bf16.mxu0 %v810
        %967 = vmatpush1.bf16.msra.mxu0 %v809
        %968 = vmatprep.subr.bf16.mxu0 %v806
        %969 = vmatpush1.bf16.msra.mxu0 %v805
        %970 = vmatprep.subr.bf16.mxu0 %v802
        %971 = vmatpush1.bf16.msra.mxu0 %v801
        %972 = vmatprep.subr.bf16.mxu0 %v798
        %973 = vmatpush1.bf16.msra.mxu0 %v797
        %974 = vmatprep.subr.bf16.mxu0 %v794
        %975 = vmatpush1.bf16.msra.mxu0 %v793
        %976 = vmatprep.subr.bf16.mxu0 %v790
        %977 = vmatpush1.bf16.msra.mxu0 %v789
        %978 = vmatprep.subr.bf16.mxu0 %v786
        %979 = vmatpush1.bf16.msra.mxu0 %v785
        %980 = vmatprep.subr.bf16.mxu0 %v846
        %981 = vmatpush2.bf16.msra.mxu0 %v845
        %982 = vmatprep.subr.bf16.mxu0 %v842
        %983 = vmatpush2.bf16.msra.mxu0 %v841
        %984 = vmatprep.subr.bf16.mxu0 %v838
        %985 = vmatpush2.bf16.msra.mxu0 %v837
        %986 = vmatprep.subr.bf16.mxu0 %v834
        %987 = vmatpush2.bf16.msra.mxu0 %v833
        %988 = vmatprep.subr.bf16.mxu0 %v830
        %989 = vmatpush2.bf16.msra.mxu0 %v829
        %990 = vmatprep.subr.bf16.mxu0 %v826
        %991 = vmatpush2.bf16.msra.mxu0 %v825
        %992 = vmatprep.subr.bf16.mxu0 %v822
        %993 = vmatpush2.bf16.msra.mxu0 %v821
        %994 = vmatprep.subr.bf16.mxu0 %v818
        %995 = vmatpush2.bf16.msra.mxu0 %v817
        %996 = vmatprep.mubr.bf16.mxu0 %v524
        %997 = vmatmul.mubr.bf16.gmra.mxu0 %v523
        %v998 = vpop.f32.mrf.mxu0
        %v999 = vadd.f32 0.0, %v998
        %v1000 = vpop.f32.mrf.mxu0
        %v1001 = vadd.f32 0.0, %v1000
        %v1002 = vpop.f32.mrf.mxu0
        %v1003 = vadd.f32 0.0, %v1002
        %v1004 = vpop.f32.mrf.mxu0
        %v1005 = vadd.f32 0.0, %v1004
        %1006 = vmatprep.mubr.bf16.mxu0 %v526
        %1007 = vmatmul.mubr.bf16.gmra.mxu0 %v525
        %v1008 = vpop.f32.mrf.mxu0
        %v1009 = vadd.f32 0.0, %v1008
        %v1010 = vpop.f32.mrf.mxu0
        %v1011 = vadd.f32 0.0, %v1010
        %v1012 = vpop.f32.mrf.mxu0
        %v1013 = vadd.f32 0.0, %v1012
        %v1014 = vpop.f32.mrf.mxu0
        %v1015 = vadd.f32 0.0, %v1014
        %1016 = vdwg.mxu0
        %v1017 = vpack.c.bf16 %v950, %v946
        %v1018 = vpack.c.bf16 %v952, %v948
        %v1019 = vpack.c.bf16 %v1003, %v999
        %v1020 = vpack.c.bf16 %v1005, %v1001
        %v1021 = vpack.c.bf16 %v960, %v956
        %v1022 = vpack.c.bf16 %v962, %v958
        %v1023 = vpack.c.bf16 %v1013, %v1009
        %v1024 = vpack.c.bf16 %v1015, %v1011
        %v1025 = vld [vmem:[%s4] sm:$0xf]
        %v1028 = vunpack.c.l.s4 1966171168
        %v1029 = vunpack.c.0.s8 %v1028
        %v1030 = vlaneseq
        %v1031 = vshrl.u32 %v1030, 7
        %v1032 = vsub.s32 %v1029, %v1031
        %v1033 = vrot.slane %v1025, %v1032
        %v1034 = vcombine.high %v1033, %v1033
        %v1036 = vunpack.c.l.s4 1966171168
        %v1037 = vunpack.c.0.s8 %v1036
        %v1038 = vlaneseq
        %v1039 = vshrl.u32 %v1038, 7
        %v1040 = vsub.s32 %v1037, %v1039
        %v1041 = vrot.slane %v1033, %v1040
        %v1043 = vunpack.c.l.s4 1966171168
        %v1044 = vunpack.c.0.s8 %v1043
        %v1045 = vlaneseq
        %v1046 = vshrl.u32 %v1045, 7
        %v1047 = vsub.s32 %v1044, %v1046
        %v1048 = vrot.slane %v1034, %v1047
        %v1049 = vcombine.high %v1041, %v1041
        %v1050 = vcombine.high %v1048, %v1048
        %v1052 = vpack.i.b16 %v1041, %v1041
        %v1054 = vlaneseq
        %v1055 = vshrl.u32 %v1054, 7
        %v1056 = vsub.s32 0, %v1055
        %v1057 = vrot.slane %v1052, %v1056
        %v1059 = vpack.i.b16 %v1048, %v1048
        %v1061 = vlaneseq
        %v1062 = vshrl.u32 %v1061, 7
        %v1063 = vsub.s32 0, %v1062
        %v1064 = vrot.slane %v1059, %v1063
        %v1066 = vpack.i.b16 %v1049, %v1049
        %v1068 = vlaneseq
        %v1069 = vshrl.u32 %v1068, 7
        %v1070 = vsub.s32 0, %v1069
        %v1071 = vrot.slane %v1066, %v1070
        %v1073 = vpack.i.b16 %v1050, %v1050
        %v1075 = vlaneseq
        %v1076 = vshrl.u32 %v1075, 7
        %v1077 = vsub.s32 0, %v1076
        %v1078 = vrot.slane %v1073, %v1077
        %v1079 = vadd.bf16 %v1017, %v1057
        %v1080 = vadd.bf16 %v1018, %v1064
        %v1081 = vadd.bf16 %v1019, %v1071
        %v1082 = vadd.bf16 %v1020, %v1078
        %v1083 = vadd.bf16 %v1021, %v1057
        %v1084 = vadd.bf16 %v1022, %v1064
        %v1085 = vadd.bf16 %v1023, %v1071
        %v1086 = vadd.bf16 %v1024, %v1078
        %v1087 = vmax.bf16 %v1079, 0
        %v1088 = vmax.bf16 %v1080, 0
        %v1089 = vmax.bf16 %v1081, 0
        %v1090 = vmax.bf16 %v1082, 0
        %v1091 = vmax.bf16 %v1083, 0
        %v1092 = vmax.bf16 %v1084, 0
        %v1093 = vmax.bf16 %v1085, 0
        %v1094 = vmax.bf16 %v1086, 0
        %v1095 = vld [vmem:[#allocation5] sm:$0xff]
        %v1096 = vld [vmem:[#allocation5 + $0x8] sm:$0xff]
        %v1097 = vld [vmem:[#allocation5 + $0x10] sm:$0xff]
        %v1098 = vld [vmem:[#allocation5 + $0x18] sm:$0xff]
        %v1099 = vld [vmem:[#allocation5 + $0x20] sm:$0xff]
        %v1100 = vld [vmem:[#allocation5 + $0x28] sm:$0xff]
        %v1101 = vld [vmem:[#allocation5 + $0x30] sm:$0xff]
        %v1102 = vld [vmem:[#allocation5 + $0x38] sm:$0xff]
        %v1103 = vld [vmem:[#allocation5 + $0x40] sm:$0xff]
        %v1104 = vld [vmem:[#allocation5 + $0x48] sm:$0xff]
        %v1105 = vld [vmem:[#allocation5 + $0x50] sm:$0xff]
        %v1106 = vld [vmem:[#allocation5 + $0x58] sm:$0xff]
        %v1107 = vld [vmem:[#allocation5 + $0x60] sm:$0xff]
        %v1108 = vld [vmem:[#allocation5 + $0x68] sm:$0xff]
        %v1109 = vld [vmem:[#allocation5 + $0x70] sm:$0xff]
        %v1110 = vld [vmem:[#allocation5 + $0x78] sm:$0xff]
        %v1111 = vld [vmem:[#allocation5 + $0x80] sm:$0xff]
        %v1112 = vld [vmem:[#allocation5 + $0x88] sm:$0xff]
        %v1113 = vld [vmem:[#allocation5 + $0x90] sm:$0xff]
        %v1114 = vld [vmem:[#allocation5 + $0x98] sm:$0xff]
        %v1115 = vld [vmem:[#allocation5 + $0xa0] sm:$0xff]
        %v1116 = vld [vmem:[#allocation5 + $0xa8] sm:$0xff]
        %v1117 = vld [vmem:[#allocation5 + $0xb0] sm:$0xff]
        %v1118 = vld [vmem:[#allocation5 + $0xb8] sm:$0xff]
        %v1119 = vld [vmem:[#allocation5 + $0xc0] sm:$0xff]
        %v1120 = vld [vmem:[#allocation5 + $0xc8] sm:$0xff]
        %v1121 = vld [vmem:[#allocation5 + $0xd0] sm:$0xff]
        %v1122 = vld [vmem:[#allocation5 + $0xd8] sm:$0xff]
        %v1123 = vld [vmem:[#allocation5 + $0xe0] sm:$0xff]
        %v1124 = vld [vmem:[#allocation5 + $0xe8] sm:$0xff]
        %v1125 = vld [vmem:[#allocation5 + $0xf0] sm:$0xff]
        %v1126 = vld [vmem:[#allocation5 + $0xf8] sm:$0xff]
        %v1127 = vld [vmem:[#allocation5 + $0x100] sm:$0xff]
        %v1128 = vld [vmem:[#allocation5 + $0x108] sm:$0xff]
        %v1129 = vld [vmem:[#allocation5 + $0x110] sm:$0xff]
        %v1130 = vld [vmem:[#allocation5 + $0x118] sm:$0xff]
        %v1131 = vld [vmem:[#allocation5 + $0x120] sm:$0xff]
        %v1132 = vld [vmem:[#allocation5 + $0x128] sm:$0xff]
        %v1133 = vld [vmem:[#allocation5 + $0x130] sm:$0xff]
        %v1134 = vld [vmem:[#allocation5 + $0x138] sm:$0xff]
        %v1135 = vld [vmem:[#allocation5 + $0x140] sm:$0xff]
        %v1136 = vld [vmem:[#allocation5 + $0x148] sm:$0xff]
        %v1137 = vld [vmem:[#allocation5 + $0x150] sm:$0xff]
        %v1138 = vld [vmem:[#allocation5 + $0x158] sm:$0xff]
        %v1139 = vld [vmem:[#allocation5 + $0x160] sm:$0xff]
        %v1140 = vld [vmem:[#allocation5 + $0x168] sm:$0xff]
        %v1141 = vld [vmem:[#allocation5 + $0x170] sm:$0xff]
        %v1142 = vld [vmem:[#allocation5 + $0x178] sm:$0xff]
        %v1143 = vld [vmem:[#allocation5 + $0x180] sm:$0xff]
        %v1144 = vld [vmem:[#allocation5 + $0x188] sm:$0xff]
        %v1145 = vld [vmem:[#allocation5 + $0x190] sm:$0xff]
        %v1146 = vld [vmem:[#allocation5 + $0x198] sm:$0xff]
        %v1147 = vld [vmem:[#allocation5 + $0x1a0] sm:$0xff]
        %v1148 = vld [vmem:[#allocation5 + $0x1a8] sm:$0xff]
        %v1149 = vld [vmem:[#allocation5 + $0x1b0] sm:$0xff]
        %v1150 = vld [vmem:[#allocation5 + $0x1b8] sm:$0xff]
        %v1151 = vld [vmem:[#allocation5 + $0x1c0] sm:$0xff]
        %v1152 = vld [vmem:[#allocation5 + $0x1c8] sm:$0xff]
        %v1153 = vld [vmem:[#allocation5 + $0x1d0] sm:$0xff]
        %v1154 = vld [vmem:[#allocation5 + $0x1d8] sm:$0xff]
        %v1155 = vld [vmem:[#allocation5 + $0x1e0] sm:$0xff]
        %v1156 = vld [vmem:[#allocation5 + $0x1e8] sm:$0xff]
        %v1157 = vld [vmem:[#allocation5 + $0x1f0] sm:$0xff]
        %v1158 = vld [vmem:[#allocation5 + $0x1f8] sm:$0xff]
        %v1159 = vld [vmem:[#allocation5 + $0x200] sm:$0xff]
        %v1160 = vld [vmem:[#allocation5 + $0x208] sm:$0xff]
        %v1161 = vld [vmem:[#allocation5 + $0x210] sm:$0xff]
        %v1162 = vld [vmem:[#allocation5 + $0x218] sm:$0xff]
        %v1163 = vld [vmem:[#allocation5 + $0x220] sm:$0xff]
        %v1164 = vld [vmem:[#allocation5 + $0x228] sm:$0xff]
        %v1165 = vld [vmem:[#allocation5 + $0x230] sm:$0xff]
        %v1166 = vld [vmem:[#allocation5 + $0x238] sm:$0xff]
        %v1167 = vld [vmem:[#allocation5 + $0x240] sm:$0xff]
        %v1168 = vld [vmem:[#allocation5 + $0x248] sm:$0xff]
        %v1169 = vld [vmem:[#allocation5 + $0x250] sm:$0xff]
        %v1170 = vld [vmem:[#allocation5 + $0x258] sm:$0xff]
        %v1171 = vld [vmem:[#allocation5 + $0x260] sm:$0xff]
        %v1172 = vld [vmem:[#allocation5 + $0x268] sm:$0xff]
        %v1173 = vld [vmem:[#allocation5 + $0x270] sm:$0xff]
        %v1174 = vld [vmem:[#allocation5 + $0x278] sm:$0xff]
        %v1175 = vld [vmem:[#allocation5 + $0x280] sm:$0xff]
        %v1176 = vld [vmem:[#allocation5 + $0x288] sm:$0xff]
        %v1177 = vld [vmem:[#allocation5 + $0x290] sm:$0xff]
        %v1178 = vld [vmem:[#allocation5 + $0x298] sm:$0xff]
        %v1179 = vld [vmem:[#allocation5 + $0x2a0] sm:$0xff]
        %v1180 = vld [vmem:[#allocation5 + $0x2a8] sm:$0xff]
        %v1181 = vld [vmem:[#allocation5 + $0x2b0] sm:$0xff]
        %v1182 = vld [vmem:[#allocation5 + $0x2b8] sm:$0xff]
        %v1183 = vld [vmem:[#allocation5 + $0x2c0] sm:$0xff]
        %v1184 = vld [vmem:[#allocation5 + $0x2c8] sm:$0xff]
        %v1185 = vld [vmem:[#allocation5 + $0x2d0] sm:$0xff]
        %v1186 = vld [vmem:[#allocation5 + $0x2d8] sm:$0xff]
        %v1187 = vld [vmem:[#allocation5 + $0x2e0] sm:$0xff]
        %v1188 = vld [vmem:[#allocation5 + $0x2e8] sm:$0xff]
        %v1189 = vld [vmem:[#allocation5 + $0x2f0] sm:$0xff]
        %v1190 = vld [vmem:[#allocation5 + $0x2f8] sm:$0xff]
        %v1191 = vld [vmem:[#allocation5 + $0x300] sm:$0xff]
        %v1192 = vld [vmem:[#allocation5 + $0x308] sm:$0xff]
        %v1193 = vld [vmem:[#allocation5 + $0x310] sm:$0xff]
        %v1194 = vld [vmem:[#allocation5 + $0x318] sm:$0xff]
        %v1195 = vld [vmem:[#allocation5 + $0x320] sm:$0xff]
        %v1196 = vld [vmem:[#allocation5 + $0x328] sm:$0xff]
        %v1197 = vld [vmem:[#allocation5 + $0x330] sm:$0xff]
        %v1198 = vld [vmem:[#allocation5 + $0x338] sm:$0xff]
        %v1199 = vld [vmem:[#allocation5 + $0x340] sm:$0xff]
        %v1200 = vld [vmem:[#allocation5 + $0x348] sm:$0xff]
        %v1201 = vld [vmem:[#allocation5 + $0x350] sm:$0xff]
        %v1202 = vld [vmem:[#allocation5 + $0x358] sm:$0xff]
        %v1203 = vld [vmem:[#allocation5 + $0x360] sm:$0xff]
        %v1204 = vld [vmem:[#allocation5 + $0x368] sm:$0xff]
        %v1205 = vld [vmem:[#allocation5 + $0x370] sm:$0xff]
        %v1206 = vld [vmem:[#allocation5 + $0x378] sm:$0xff]
        %v1207 = vld [vmem:[#allocation5 + $0x380] sm:$0xff]
        %v1208 = vld [vmem:[#allocation5 + $0x388] sm:$0xff]
        %v1209 = vld [vmem:[#allocation5 + $0x390] sm:$0xff]
        %v1210 = vld [vmem:[#allocation5 + $0x398] sm:$0xff]
        %v1211 = vld [vmem:[#allocation5 + $0x3a0] sm:$0xff]
        %v1212 = vld [vmem:[#allocation5 + $0x3a8] sm:$0xff]
        %v1213 = vld [vmem:[#allocation5 + $0x3b0] sm:$0xff]
        %v1214 = vld [vmem:[#allocation5 + $0x3b8] sm:$0xff]
        %v1215 = vld [vmem:[#allocation5 + $0x3c0] sm:$0xff]
        %v1216 = vld [vmem:[#allocation5 + $0x3c8] sm:$0xff]
        %v1217 = vld [vmem:[#allocation5 + $0x3d0] sm:$0xff]
        %v1218 = vld [vmem:[#allocation5 + $0x3d8] sm:$0xff]
        %v1219 = vld [vmem:[#allocation5 + $0x3e0] sm:$0xff]
        %v1220 = vld [vmem:[#allocation5 + $0x3e8] sm:$0xff]
        %v1221 = vld [vmem:[#allocation5 + $0x3f0] sm:$0xff]
        %v1222 = vld [vmem:[#allocation5 + $0x3f8] sm:$0xff]
        %v1223 = vld [vmem:[#allocation5 + $0x400] sm:$0xff]
        %v1224 = vld [vmem:[#allocation5 + $0x408] sm:$0xff]
        %v1225 = vld [vmem:[#allocation5 + $0x410] sm:$0xff]
        %v1226 = vld [vmem:[#allocation5 + $0x418] sm:$0xff]
        %v1227 = vld [vmem:[#allocation5 + $0x420] sm:$0xff]
        %v1228 = vld [vmem:[#allocation5 + $0x428] sm:$0xff]
        %v1229 = vld [vmem:[#allocation5 + $0x430] sm:$0xff]
        %v1230 = vld [vmem:[#allocation5 + $0x438] sm:$0xff]
        %v1231 = vld [vmem:[#allocation5 + $0x440] sm:$0xff]
        %v1232 = vld [vmem:[#allocation5 + $0x448] sm:$0xff]
        %v1233 = vld [vmem:[#allocation5 + $0x450] sm:$0xff]
        %v1234 = vld [vmem:[#allocation5 + $0x458] sm:$0xff]
        %v1235 = vld [vmem:[#allocation5 + $0x460] sm:$0xff]
        %v1236 = vld [vmem:[#allocation5 + $0x468] sm:$0xff]
        %v1237 = vld [vmem:[#allocation5 + $0x470] sm:$0xff]
        %v1238 = vld [vmem:[#allocation5 + $0x478] sm:$0xff]
        %v1239 = vld [vmem:[#allocation5 + $0x480] sm:$0xff]
        %v1240 = vld [vmem:[#allocation5 + $0x488] sm:$0xff]
        %v1241 = vld [vmem:[#allocation5 + $0x490] sm:$0xff]
        %v1242 = vld [vmem:[#allocation5 + $0x498] sm:$0xff]
        %v1243 = vld [vmem:[#allocation5 + $0x4a0] sm:$0xff]
        %v1244 = vld [vmem:[#allocation5 + $0x4a8] sm:$0xff]
        %v1245 = vld [vmem:[#allocation5 + $0x4b0] sm:$0xff]
        %v1246 = vld [vmem:[#allocation5 + $0x4b8] sm:$0xff]
        %v1247 = vld [vmem:[#allocation5 + $0x4c0] sm:$0xff]
        %v1248 = vld [vmem:[#allocation5 + $0x4c8] sm:$0xff]
        %v1249 = vld [vmem:[#allocation5 + $0x4d0] sm:$0xff]
        %v1250 = vld [vmem:[#allocation5 + $0x4d8] sm:$0xff]
        %v1251 = vld [vmem:[#allocation5 + $0x4e0] sm:$0xff]
        %v1252 = vld [vmem:[#allocation5 + $0x4e8] sm:$0xff]
        %v1253 = vld [vmem:[#allocation5 + $0x4f0] sm:$0xff]
        %v1254 = vld [vmem:[#allocation5 + $0x4f8] sm:$0xff]
        %v1255 = vld [vmem:[#allocation5 + $0x500] sm:$0xff]
        %v1256 = vld [vmem:[#allocation5 + $0x508] sm:$0xff]
        %v1257 = vld [vmem:[#allocation5 + $0x510] sm:$0xff]
        %v1258 = vld [vmem:[#allocation5 + $0x518] sm:$0xff]
        %v1259 = vld [vmem:[#allocation5 + $0x520] sm:$0xff]
        %v1260 = vld [vmem:[#allocation5 + $0x528] sm:$0xff]
        %v1261 = vld [vmem:[#allocation5 + $0x530] sm:$0xff]
        %v1262 = vld [vmem:[#allocation5 + $0x538] sm:$0xff]
        %v1263 = vld [vmem:[#allocation5 + $0x540] sm:$0xff]
        %v1264 = vld [vmem:[#allocation5 + $0x548] sm:$0xff]
        %v1265 = vld [vmem:[#allocation5 + $0x550] sm:$0xff]
        %v1266 = vld [vmem:[#allocation5 + $0x558] sm:$0xff]
        %v1267 = vld [vmem:[#allocation5 + $0x560] sm:$0xff]
        %v1268 = vld [vmem:[#allocation5 + $0x568] sm:$0xff]
        %v1269 = vld [vmem:[#allocation5 + $0x570] sm:$0xff]
        %v1270 = vld [vmem:[#allocation5 + $0x578] sm:$0xff]
        %v1271 = vld [vmem:[#allocation5 + $0x580] sm:$0xff]
        %v1272 = vld [vmem:[#allocation5 + $0x588] sm:$0xff]
        %v1273 = vld [vmem:[#allocation5 + $0x590] sm:$0xff]
        %v1274 = vld [vmem:[#allocation5 + $0x598] sm:$0xff]
        %v1275 = vld [vmem:[#allocation5 + $0x5a0] sm:$0xff]
        %v1276 = vld [vmem:[#allocation5 + $0x5a8] sm:$0xff]
        %v1277 = vld [vmem:[#allocation5 + $0x5b0] sm:$0xff]
        %v1278 = vld [vmem:[#allocation5 + $0x5b8] sm:$0xff]
        %v1279 = vld [vmem:[#allocation5 + $0x5c0] sm:$0xff]
        %v1280 = vld [vmem:[#allocation5 + $0x5c8] sm:$0xff]
        %v1281 = vld [vmem:[#allocation5 + $0x5d0] sm:$0xff]
        %v1282 = vld [vmem:[#allocation5 + $0x5d8] sm:$0xff]
        %v1283 = vld [vmem:[#allocation5 + $0x5e0] sm:$0xff]
        %v1284 = vld [vmem:[#allocation5 + $0x5e8] sm:$0xff]
        %v1285 = vld [vmem:[#allocation5 + $0x5f0] sm:$0xff]
        %v1286 = vld [vmem:[#allocation5 + $0x5f8] sm:$0xff]
        %v1287 = vld [vmem:[#allocation5 + $0x600] sm:$0xff]
        %v1288 = vld [vmem:[#allocation5 + $0x608] sm:$0xff]
        %v1289 = vld [vmem:[#allocation5 + $0x610] sm:$0xff]
        %v1290 = vld [vmem:[#allocation5 + $0x618] sm:$0xff]
        %v1291 = vld [vmem:[#allocation5 + $0x620] sm:$0xff]
        %v1292 = vld [vmem:[#allocation5 + $0x628] sm:$0xff]
        %v1293 = vld [vmem:[#allocation5 + $0x630] sm:$0xff]
        %v1294 = vld [vmem:[#allocation5 + $0x638] sm:$0xff]
        %v1295 = vld [vmem:[#allocation5 + $0x640] sm:$0xff]
        %v1296 = vld [vmem:[#allocation5 + $0x648] sm:$0xff]
        %v1297 = vld [vmem:[#allocation5 + $0x650] sm:$0xff]
        %v1298 = vld [vmem:[#allocation5 + $0x658] sm:$0xff]
        %v1299 = vld [vmem:[#allocation5 + $0x660] sm:$0xff]
        %v1300 = vld [vmem:[#allocation5 + $0x668] sm:$0xff]
        %v1301 = vld [vmem:[#allocation5 + $0x670] sm:$0xff]
        %v1302 = vld [vmem:[#allocation5 + $0x678] sm:$0xff]
        %v1303 = vld [vmem:[#allocation5 + $0x680] sm:$0xff]
        %v1304 = vld [vmem:[#allocation5 + $0x688] sm:$0xff]
        %v1305 = vld [vmem:[#allocation5 + $0x690] sm:$0xff]
        %v1306 = vld [vmem:[#allocation5 + $0x698] sm:$0xff]
        %v1307 = vld [vmem:[#allocation5 + $0x6a0] sm:$0xff]
        %v1308 = vld [vmem:[#allocation5 + $0x6a8] sm:$0xff]
        %v1309 = vld [vmem:[#allocation5 + $0x6b0] sm:$0xff]
        %v1310 = vld [vmem:[#allocation5 + $0x6b8] sm:$0xff]
        %v1311 = vld [vmem:[#allocation5 + $0x6c0] sm:$0xff]
        %v1312 = vld [vmem:[#allocation5 + $0x6c8] sm:$0xff]
        %v1313 = vld [vmem:[#allocation5 + $0x6d0] sm:$0xff]
        %v1314 = vld [vmem:[#allocation5 + $0x6d8] sm:$0xff]
        %v1315 = vld [vmem:[#allocation5 + $0x6e0] sm:$0xff]
        %v1316 = vld [vmem:[#allocation5 + $0x6e8] sm:$0xff]
        %v1317 = vld [vmem:[#allocation5 + $0x6f0] sm:$0xff]
        %v1318 = vld [vmem:[#allocation5 + $0x6f8] sm:$0xff]
        %v1319 = vld [vmem:[#allocation5 + $0x700] sm:$0xff]
        %v1320 = vld [vmem:[#allocation5 + $0x708] sm:$0xff]
        %v1321 = vld [vmem:[#allocation5 + $0x710] sm:$0xff]
        %v1322 = vld [vmem:[#allocation5 + $0x718] sm:$0xff]
        %v1323 = vld [vmem:[#allocation5 + $0x720] sm:$0xff]
        %v1324 = vld [vmem:[#allocation5 + $0x728] sm:$0xff]
        %v1325 = vld [vmem:[#allocation5 + $0x730] sm:$0xff]
        %v1326 = vld [vmem:[#allocation5 + $0x738] sm:$0xff]
        %v1327 = vld [vmem:[#allocation5 + $0x740] sm:$0xff]
        %v1328 = vld [vmem:[#allocation5 + $0x748] sm:$0xff]
        %v1329 = vld [vmem:[#allocation5 + $0x750] sm:$0xff]
        %v1330 = vld [vmem:[#allocation5 + $0x758] sm:$0xff]
        %v1331 = vld [vmem:[#allocation5 + $0x760] sm:$0xff]
        %v1332 = vld [vmem:[#allocation5 + $0x768] sm:$0xff]
        %v1333 = vld [vmem:[#allocation5 + $0x770] sm:$0xff]
        %v1334 = vld [vmem:[#allocation5 + $0x778] sm:$0xff]
        %v1335 = vld [vmem:[#allocation5 + $0x780] sm:$0xff]
        %v1336 = vld [vmem:[#allocation5 + $0x788] sm:$0xff]
        %v1337 = vld [vmem:[#allocation5 + $0x790] sm:$0xff]
        %v1338 = vld [vmem:[#allocation5 + $0x798] sm:$0xff]
        %v1339 = vld [vmem:[#allocation5 + $0x7a0] sm:$0xff]
        %v1340 = vld [vmem:[#allocation5 + $0x7a8] sm:$0xff]
        %v1341 = vld [vmem:[#allocation5 + $0x7b0] sm:$0xff]
        %v1342 = vld [vmem:[#allocation5 + $0x7b8] sm:$0xff]
        %v1343 = vld [vmem:[#allocation5 + $0x7c0] sm:$0xff]
        %v1344 = vld [vmem:[#allocation5 + $0x7c8] sm:$0xff]
        %v1345 = vld [vmem:[#allocation5 + $0x7d0] sm:$0xff]
        %v1346 = vld [vmem:[#allocation5 + $0x7d8] sm:$0xff]
        %v1347 = vld [vmem:[#allocation5 + $0x7e0] sm:$0xff]
        %v1348 = vld [vmem:[#allocation5 + $0x7e8] sm:$0xff]
        %v1349 = vld [vmem:[#allocation5 + $0x7f0] sm:$0xff]
        %v1350 = vld [vmem:[#allocation5 + $0x7f8] sm:$0xff]
        %v1607 = vunpack.c.l.b16 %v1095
        %v1608 = vunpack.c.h.b16 %v1095
        %v1609 = vunpack.c.l.b16 %v1096
        %v1610 = vunpack.c.h.b16 %v1096
        %v1611 = vunpack.c.l.b16 %v1097
        %v1612 = vunpack.c.h.b16 %v1097
        %v1613 = vunpack.c.l.b16 %v1098
        %v1614 = vunpack.c.h.b16 %v1098
        %v1615 = vunpack.c.l.b16 %v1099
        %v1616 = vunpack.c.h.b16 %v1099
        %v1617 = vunpack.c.l.b16 %v1100
        %v1618 = vunpack.c.h.b16 %v1100
        %v1619 = vunpack.c.l.b16 %v1101
        %v1620 = vunpack.c.h.b16 %v1101
        %v1621 = vunpack.c.l.b16 %v1102
        %v1622 = vunpack.c.h.b16 %v1102
        %v1623 = vunpack.c.l.b16 %v1103
        %v1624 = vunpack.c.h.b16 %v1103
        %v1625 = vunpack.c.l.b16 %v1104
        %v1626 = vunpack.c.h.b16 %v1104
        %v1627 = vunpack.c.l.b16 %v1105
        %v1628 = vunpack.c.h.b16 %v1105
        %v1629 = vunpack.c.l.b16 %v1106
        %v1630 = vunpack.c.h.b16 %v1106
        %v1631 = vunpack.c.l.b16 %v1107
        %v1632 = vunpack.c.h.b16 %v1107
        %v1633 = vunpack.c.l.b16 %v1108
        %v1634 = vunpack.c.h.b16 %v1108
        %v1635 = vunpack.c.l.b16 %v1109
        %v1636 = vunpack.c.h.b16 %v1109
        %v1637 = vunpack.c.l.b16 %v1110
        %v1638 = vunpack.c.h.b16 %v1110
        %v1639 = vunpack.c.l.b16 %v1111
        %v1640 = vunpack.c.h.b16 %v1111
        %v1641 = vunpack.c.l.b16 %v1112
        %v1642 = vunpack.c.h.b16 %v1112
        %v1643 = vunpack.c.l.b16 %v1113
        %v1644 = vunpack.c.h.b16 %v1113
        %v1645 = vunpack.c.l.b16 %v1114
        %v1646 = vunpack.c.h.b16 %v1114
        %v1647 = vunpack.c.l.b16 %v1115
        %v1648 = vunpack.c.h.b16 %v1115
        %v1649 = vunpack.c.l.b16 %v1116
        %v1650 = vunpack.c.h.b16 %v1116
        %v1651 = vunpack.c.l.b16 %v1117
        %v1652 = vunpack.c.h.b16 %v1117
        %v1653 = vunpack.c.l.b16 %v1118
        %v1654 = vunpack.c.h.b16 %v1118
        %v1655 = vunpack.c.l.b16 %v1119
        %v1656 = vunpack.c.h.b16 %v1119
        %v1657 = vunpack.c.l.b16 %v1120
        %v1658 = vunpack.c.h.b16 %v1120
        %v1659 = vunpack.c.l.b16 %v1121
        %v1660 = vunpack.c.h.b16 %v1121
        %v1661 = vunpack.c.l.b16 %v1122
        %v1662 = vunpack.c.h.b16 %v1122
        %v1663 = vunpack.c.l.b16 %v1123
        %v1664 = vunpack.c.h.b16 %v1123
        %v1665 = vunpack.c.l.b16 %v1124
        %v1666 = vunpack.c.h.b16 %v1124
        %v1667 = vunpack.c.l.b16 %v1125
        %v1668 = vunpack.c.h.b16 %v1125
        %v1669 = vunpack.c.l.b16 %v1126
        %v1670 = vunpack.c.h.b16 %v1126
        %v1671 = vunpack.c.l.b16 %v1127
        %v1672 = vunpack.c.h.b16 %v1127
        %v1673 = vunpack.c.l.b16 %v1128
        %v1674 = vunpack.c.h.b16 %v1128
        %v1675 = vunpack.c.l.b16 %v1129
        %v1676 = vunpack.c.h.b16 %v1129
        %v1677 = vunpack.c.l.b16 %v1130
        %v1678 = vunpack.c.h.b16 %v1130
        %v1679 = vunpack.c.l.b16 %v1131
        %v1680 = vunpack.c.h.b16 %v1131
        %v1681 = vunpack.c.l.b16 %v1132
        %v1682 = vunpack.c.h.b16 %v1132
        %v1683 = vunpack.c.l.b16 %v1133
        %v1684 = vunpack.c.h.b16 %v1133
        %v1685 = vunpack.c.l.b16 %v1134
        %v1686 = vunpack.c.h.b16 %v1134
        %v1687 = vunpack.c.l.b16 %v1135
        %v1688 = vunpack.c.h.b16 %v1135
        %v1689 = vunpack.c.l.b16 %v1136
        %v1690 = vunpack.c.h.b16 %v1136
        %v1691 = vunpack.c.l.b16 %v1137
        %v1692 = vunpack.c.h.b16 %v1137
        %v1693 = vunpack.c.l.b16 %v1138
        %v1694 = vunpack.c.h.b16 %v1138
        %v1695 = vunpack.c.l.b16 %v1139
        %v1696 = vunpack.c.h.b16 %v1139
        %v1697 = vunpack.c.l.b16 %v1140
        %v1698 = vunpack.c.h.b16 %v1140
        %v1699 = vunpack.c.l.b16 %v1141
        %v1700 = vunpack.c.h.b16 %v1141
        %v1701 = vunpack.c.l.b16 %v1142
        %v1702 = vunpack.c.h.b16 %v1142
        %v1703 = vunpack.c.l.b16 %v1143
        %v1704 = vunpack.c.h.b16 %v1143
        %v1705 = vunpack.c.l.b16 %v1144
        %v1706 = vunpack.c.h.b16 %v1144
        %v1707 = vunpack.c.l.b16 %v1145
        %v1708 = vunpack.c.h.b16 %v1145
        %v1709 = vunpack.c.l.b16 %v1146
        %v1710 = vunpack.c.h.b16 %v1146
        %v1711 = vunpack.c.l.b16 %v1147
        %v1712 = vunpack.c.h.b16 %v1147
        %v1713 = vunpack.c.l.b16 %v1148
        %v1714 = vunpack.c.h.b16 %v1148
        %v1715 = vunpack.c.l.b16 %v1149
        %v1716 = vunpack.c.h.b16 %v1149
        %v1717 = vunpack.c.l.b16 %v1150
        %v1718 = vunpack.c.h.b16 %v1150
        %v1719 = vunpack.c.l.b16 %v1151
        %v1720 = vunpack.c.h.b16 %v1151
        %v1721 = vunpack.c.l.b16 %v1152
        %v1722 = vunpack.c.h.b16 %v1152
        %v1723 = vunpack.c.l.b16 %v1153
        %v1724 = vunpack.c.h.b16 %v1153
        %v1725 = vunpack.c.l.b16 %v1154
        %v1726 = vunpack.c.h.b16 %v1154
        %v1727 = vunpack.c.l.b16 %v1155
        %v1728 = vunpack.c.h.b16 %v1155
        %v1729 = vunpack.c.l.b16 %v1156
        %v1730 = vunpack.c.h.b16 %v1156
        %v1731 = vunpack.c.l.b16 %v1157
        %v1732 = vunpack.c.h.b16 %v1157
        %v1733 = vunpack.c.l.b16 %v1158
        %v1734 = vunpack.c.h.b16 %v1158
        %v1735 = vunpack.c.l.b16 %v1159
        %v1736 = vunpack.c.h.b16 %v1159
        %v1737 = vunpack.c.l.b16 %v1160
        %v1738 = vunpack.c.h.b16 %v1160
        %v1739 = vunpack.c.l.b16 %v1161
        %v1740 = vunpack.c.h.b16 %v1161
        %v1741 = vunpack.c.l.b16 %v1162
        %v1742 = vunpack.c.h.b16 %v1162
        %v1743 = vunpack.c.l.b16 %v1163
        %v1744 = vunpack.c.h.b16 %v1163
        %v1745 = vunpack.c.l.b16 %v1164
        %v1746 = vunpack.c.h.b16 %v1164
        %v1747 = vunpack.c.l.b16 %v1165
        %v1748 = vunpack.c.h.b16 %v1165
        %v1749 = vunpack.c.l.b16 %v1166
        %v1750 = vunpack.c.h.b16 %v1166
        %v1751 = vunpack.c.l.b16 %v1167
        %v1752 = vunpack.c.h.b16 %v1167
        %v1753 = vunpack.c.l.b16 %v1168
        %v1754 = vunpack.c.h.b16 %v1168
        %v1755 = vunpack.c.l.b16 %v1169
        %v1756 = vunpack.c.h.b16 %v1169
        %v1757 = vunpack.c.l.b16 %v1170
        %v1758 = vunpack.c.h.b16 %v1170
        %v1759 = vunpack.c.l.b16 %v1171
        %v1760 = vunpack.c.h.b16 %v1171
        %v1761 = vunpack.c.l.b16 %v1172
        %v1762 = vunpack.c.h.b16 %v1172
        %v1763 = vunpack.c.l.b16 %v1173
        %v1764 = vunpack.c.h.b16 %v1173
        %v1765 = vunpack.c.l.b16 %v1174
        %v1766 = vunpack.c.h.b16 %v1174
        %v1767 = vunpack.c.l.b16 %v1175
        %v1768 = vunpack.c.h.b16 %v1175
        %v1769 = vunpack.c.l.b16 %v1176
        %v1770 = vunpack.c.h.b16 %v1176
        %v1771 = vunpack.c.l.b16 %v1177
        %v1772 = vunpack.c.h.b16 %v1177
        %v1773 = vunpack.c.l.b16 %v1178
        %v1774 = vunpack.c.h.b16 %v1178
        %v1775 = vunpack.c.l.b16 %v1179
        %v1776 = vunpack.c.h.b16 %v1179
        %v1777 = vunpack.c.l.b16 %v1180
        %v1778 = vunpack.c.h.b16 %v1180
        %v1779 = vunpack.c.l.b16 %v1181
        %v1780 = vunpack.c.h.b16 %v1181
        %v1781 = vunpack.c.l.b16 %v1182
        %v1782 = vunpack.c.h.b16 %v1182
        %v1783 = vunpack.c.l.b16 %v1183
        %v1784 = vunpack.c.h.b16 %v1183
        %v1785 = vunpack.c.l.b16 %v1184
        %v1786 = vunpack.c.h.b16 %v1184
        %v1787 = vunpack.c.l.b16 %v1185
        %v1788 = vunpack.c.h.b16 %v1185
        %v1789 = vunpack.c.l.b16 %v1186
        %v1790 = vunpack.c.h.b16 %v1186
        %v1791 = vunpack.c.l.b16 %v1187
        %v1792 = vunpack.c.h.b16 %v1187
        %v1793 = vunpack.c.l.b16 %v1188
        %v1794 = vunpack.c.h.b16 %v1188
        %v1795 = vunpack.c.l.b16 %v1189
        %v1796 = vunpack.c.h.b16 %v1189
        %v1797 = vunpack.c.l.b16 %v1190
        %v1798 = vunpack.c.h.b16 %v1190
        %v1799 = vunpack.c.l.b16 %v1191
        %v1800 = vunpack.c.h.b16 %v1191
        %v1801 = vunpack.c.l.b16 %v1192
        %v1802 = vunpack.c.h.b16 %v1192
        %v1803 = vunpack.c.l.b16 %v1193
        %v1804 = vunpack.c.h.b16 %v1193
        %v1805 = vunpack.c.l.b16 %v1194
        %v1806 = vunpack.c.h.b16 %v1194
        %v1807 = vunpack.c.l.b16 %v1195
        %v1808 = vunpack.c.h.b16 %v1195
        %v1809 = vunpack.c.l.b16 %v1196
        %v1810 = vunpack.c.h.b16 %v1196
        %v1811 = vunpack.c.l.b16 %v1197
        %v1812 = vunpack.c.h.b16 %v1197
        %v1813 = vunpack.c.l.b16 %v1198
        %v1814 = vunpack.c.h.b16 %v1198
        %v1815 = vunpack.c.l.b16 %v1199
        %v1816 = vunpack.c.h.b16 %v1199
        %v1817 = vunpack.c.l.b16 %v1200
        %v1818 = vunpack.c.h.b16 %v1200
        %v1819 = vunpack.c.l.b16 %v1201
        %v1820 = vunpack.c.h.b16 %v1201
        %v1821 = vunpack.c.l.b16 %v1202
        %v1822 = vunpack.c.h.b16 %v1202
        %v1823 = vunpack.c.l.b16 %v1203
        %v1824 = vunpack.c.h.b16 %v1203
        %v1825 = vunpack.c.l.b16 %v1204
        %v1826 = vunpack.c.h.b16 %v1204
        %v1827 = vunpack.c.l.b16 %v1205
        %v1828 = vunpack.c.h.b16 %v1205
        %v1829 = vunpack.c.l.b16 %v1206
        %v1830 = vunpack.c.h.b16 %v1206
        %v1831 = vunpack.c.l.b16 %v1207
        %v1832 = vunpack.c.h.b16 %v1207
        %v1833 = vunpack.c.l.b16 %v1208
        %v1834 = vunpack.c.h.b16 %v1208
        %v1835 = vunpack.c.l.b16 %v1209
        %v1836 = vunpack.c.h.b16 %v1209
        %v1837 = vunpack.c.l.b16 %v1210
        %v1838 = vunpack.c.h.b16 %v1210
        %v1839 = vunpack.c.l.b16 %v1211
        %v1840 = vunpack.c.h.b16 %v1211
        %v1841 = vunpack.c.l.b16 %v1212
        %v1842 = vunpack.c.h.b16 %v1212
        %v1843 = vunpack.c.l.b16 %v1213
        %v1844 = vunpack.c.h.b16 %v1213
        %v1845 = vunpack.c.l.b16 %v1214
        %v1846 = vunpack.c.h.b16 %v1214
        %v1847 = vunpack.c.l.b16 %v1215
        %v1848 = vunpack.c.h.b16 %v1215
        %v1849 = vunpack.c.l.b16 %v1216
        %v1850 = vunpack.c.h.b16 %v1216
        %v1851 = vunpack.c.l.b16 %v1217
        %v1852 = vunpack.c.h.b16 %v1217
        %v1853 = vunpack.c.l.b16 %v1218
        %v1854 = vunpack.c.h.b16 %v1218
        %v1855 = vunpack.c.l.b16 %v1219
        %v1856 = vunpack.c.h.b16 %v1219
        %v1857 = vunpack.c.l.b16 %v1220
        %v1858 = vunpack.c.h.b16 %v1220
        %v1859 = vunpack.c.l.b16 %v1221
        %v1860 = vunpack.c.h.b16 %v1221
        %v1861 = vunpack.c.l.b16 %v1222
        %v1862 = vunpack.c.h.b16 %v1222
        %v1863 = vunpack.c.l.b16 %v1223
        %v1864 = vunpack.c.h.b16 %v1223
        %v1865 = vunpack.c.l.b16 %v1224
        %v1866 = vunpack.c.h.b16 %v1224
        %v1867 = vunpack.c.l.b16 %v1225
        %v1868 = vunpack.c.h.b16 %v1225
        %v1869 = vunpack.c.l.b16 %v1226
        %v1870 = vunpack.c.h.b16 %v1226
        %v1871 = vunpack.c.l.b16 %v1227
        %v1872 = vunpack.c.h.b16 %v1227
        %v1873 = vunpack.c.l.b16 %v1228
        %v1874 = vunpack.c.h.b16 %v1228
        %v1875 = vunpack.c.l.b16 %v1229
        %v1876 = vunpack.c.h.b16 %v1229
        %v1877 = vunpack.c.l.b16 %v1230
        %v1878 = vunpack.c.h.b16 %v1230
        %v1879 = vunpack.c.l.b16 %v1231
        %v1880 = vunpack.c.h.b16 %v1231
        %v1881 = vunpack.c.l.b16 %v1232
        %v1882 = vunpack.c.h.b16 %v1232
        %v1883 = vunpack.c.l.b16 %v1233
        %v1884 = vunpack.c.h.b16 %v1233
        %v1885 = vunpack.c.l.b16 %v1234
        %v1886 = vunpack.c.h.b16 %v1234
        %v1887 = vunpack.c.l.b16 %v1235
        %v1888 = vunpack.c.h.b16 %v1235
        %v1889 = vunpack.c.l.b16 %v1236
        %v1890 = vunpack.c.h.b16 %v1236
        %v1891 = vunpack.c.l.b16 %v1237
        %v1892 = vunpack.c.h.b16 %v1237
        %v1893 = vunpack.c.l.b16 %v1238
        %v1894 = vunpack.c.h.b16 %v1238
        %v1895 = vunpack.c.l.b16 %v1239
        %v1896 = vunpack.c.h.b16 %v1239
        %v1897 = vunpack.c.l.b16 %v1240
        %v1898 = vunpack.c.h.b16 %v1240
        %v1899 = vunpack.c.l.b16 %v1241
        %v1900 = vunpack.c.h.b16 %v1241
        %v1901 = vunpack.c.l.b16 %v1242
        %v1902 = vunpack.c.h.b16 %v1242
        %v1903 = vunpack.c.l.b16 %v1243
        %v1904 = vunpack.c.h.b16 %v1243
        %v1905 = vunpack.c.l.b16 %v1244
        %v1906 = vunpack.c.h.b16 %v1244
        %v1907 = vunpack.c.l.b16 %v1245
        %v1908 = vunpack.c.h.b16 %v1245
        %v1909 = vunpack.c.l.b16 %v1246
        %v1910 = vunpack.c.h.b16 %v1246
        %v1911 = vunpack.c.l.b16 %v1247
        %v1912 = vunpack.c.h.b16 %v1247
        %v1913 = vunpack.c.l.b16 %v1248
        %v1914 = vunpack.c.h.b16 %v1248
        %v1915 = vunpack.c.l.b16 %v1249
        %v1916 = vunpack.c.h.b16 %v1249
        %v1917 = vunpack.c.l.b16 %v1250
        %v1918 = vunpack.c.h.b16 %v1250
        %v1919 = vunpack.c.l.b16 %v1251
        %v1920 = vunpack.c.h.b16 %v1251
        %v1921 = vunpack.c.l.b16 %v1252
        %v1922 = vunpack.c.h.b16 %v1252
        %v1923 = vunpack.c.l.b16 %v1253
        %v1924 = vunpack.c.h.b16 %v1253
        %v1925 = vunpack.c.l.b16 %v1254
        %v1926 = vunpack.c.h.b16 %v1254
        %v1927 = vunpack.c.l.b16 %v1255
        %v1928 = vunpack.c.h.b16 %v1255
        %v1929 = vunpack.c.l.b16 %v1256
        %v1930 = vunpack.c.h.b16 %v1256
        %v1931 = vunpack.c.l.b16 %v1257
        %v1932 = vunpack.c.h.b16 %v1257
        %v1933 = vunpack.c.l.b16 %v1258
        %v1934 = vunpack.c.h.b16 %v1258
        %v1935 = vunpack.c.l.b16 %v1259
        %v1936 = vunpack.c.h.b16 %v1259
        %v1937 = vunpack.c.l.b16 %v1260
        %v1938 = vunpack.c.h.b16 %v1260
        %v1939 = vunpack.c.l.b16 %v1261
        %v1940 = vunpack.c.h.b16 %v1261
        %v1941 = vunpack.c.l.b16 %v1262
        %v1942 = vunpack.c.h.b16 %v1262
        %v1943 = vunpack.c.l.b16 %v1263
        %v1944 = vunpack.c.h.b16 %v1263
        %v1945 = vunpack.c.l.b16 %v1264
        %v1946 = vunpack.c.h.b16 %v1264
        %v1947 = vunpack.c.l.b16 %v1265
        %v1948 = vunpack.c.h.b16 %v1265
        %v1949 = vunpack.c.l.b16 %v1266
        %v1950 = vunpack.c.h.b16 %v1266
        %v1951 = vunpack.c.l.b16 %v1267
        %v1952 = vunpack.c.h.b16 %v1267
        %v1953 = vunpack.c.l.b16 %v1268
        %v1954 = vunpack.c.h.b16 %v1268
        %v1955 = vunpack.c.l.b16 %v1269
        %v1956 = vunpack.c.h.b16 %v1269
        %v1957 = vunpack.c.l.b16 %v1270
        %v1958 = vunpack.c.h.b16 %v1270
        %v1959 = vunpack.c.l.b16 %v1271
        %v1960 = vunpack.c.h.b16 %v1271
        %v1961 = vunpack.c.l.b16 %v1272
        %v1962 = vunpack.c.h.b16 %v1272
        %v1963 = vunpack.c.l.b16 %v1273
        %v1964 = vunpack.c.h.b16 %v1273
        %v1965 = vunpack.c.l.b16 %v1274
        %v1966 = vunpack.c.h.b16 %v1274
        %v1967 = vunpack.c.l.b16 %v1275
        %v1968 = vunpack.c.h.b16 %v1275
        %v1969 = vunpack.c.l.b16 %v1276
        %v1970 = vunpack.c.h.b16 %v1276
        %v1971 = vunpack.c.l.b16 %v1277
        %v1972 = vunpack.c.h.b16 %v1277
        %v1973 = vunpack.c.l.b16 %v1278
        %v1974 = vunpack.c.h.b16 %v1278
        %v1975 = vunpack.c.l.b16 %v1279
        %v1976 = vunpack.c.h.b16 %v1279
        %v1977 = vunpack.c.l.b16 %v1280
        %v1978 = vunpack.c.h.b16 %v1280
        %v1979 = vunpack.c.l.b16 %v1281
        %v1980 = vunpack.c.h.b16 %v1281
        %v1981 = vunpack.c.l.b16 %v1282
        %v1982 = vunpack.c.h.b16 %v1282
        %v1983 = vunpack.c.l.b16 %v1283
        %v1984 = vunpack.c.h.b16 %v1283
        %v1985 = vunpack.c.l.b16 %v1284
        %v1986 = vunpack.c.h.b16 %v1284
        %v1987 = vunpack.c.l.b16 %v1285
        %v1988 = vunpack.c.h.b16 %v1285
        %v1989 = vunpack.c.l.b16 %v1286
        %v1990 = vunpack.c.h.b16 %v1286
        %v1991 = vunpack.c.l.b16 %v1287
        %v1992 = vunpack.c.h.b16 %v1287
        %v1993 = vunpack.c.l.b16 %v1288
        %v1994 = vunpack.c.h.b16 %v1288
        %v1995 = vunpack.c.l.b16 %v1289
        %v1996 = vunpack.c.h.b16 %v1289
        %v1997 = vunpack.c.l.b16 %v1290
        %v1998 = vunpack.c.h.b16 %v1290
        %v1999 = vunpack.c.l.b16 %v1291
        %v2000 = vunpack.c.h.b16 %v1291
        %v2001 = vunpack.c.l.b16 %v1292
        %v2002 = vunpack.c.h.b16 %v1292
        %v2003 = vunpack.c.l.b16 %v1293
        %v2004 = vunpack.c.h.b16 %v1293
        %v2005 = vunpack.c.l.b16 %v1294
        %v2006 = vunpack.c.h.b16 %v1294
        %v2007 = vunpack.c.l.b16 %v1295
        %v2008 = vunpack.c.h.b16 %v1295
        %v2009 = vunpack.c.l.b16 %v1296
        %v2010 = vunpack.c.h.b16 %v1296
        %v2011 = vunpack.c.l.b16 %v1297
        %v2012 = vunpack.c.h.b16 %v1297
        %v2013 = vunpack.c.l.b16 %v1298
        %v2014 = vunpack.c.h.b16 %v1298
        %v2015 = vunpack.c.l.b16 %v1299
        %v2016 = vunpack.c.h.b16 %v1299
        %v2017 = vunpack.c.l.b16 %v1300
        %v2018 = vunpack.c.h.b16 %v1300
        %v2019 = vunpack.c.l.b16 %v1301
        %v2020 = vunpack.c.h.b16 %v1301
        %v2021 = vunpack.c.l.b16 %v1302
        %v2022 = vunpack.c.h.b16 %v1302
        %v2023 = vunpack.c.l.b16 %v1303
        %v2024 = vunpack.c.h.b16 %v1303
        %v2025 = vunpack.c.l.b16 %v1304
        %v2026 = vunpack.c.h.b16 %v1304
        %v2027 = vunpack.c.l.b16 %v1305
        %v2028 = vunpack.c.h.b16 %v1305
        %v2029 = vunpack.c.l.b16 %v1306
        %v2030 = vunpack.c.h.b16 %v1306
        %v2031 = vunpack.c.l.b16 %v1307
        %v2032 = vunpack.c.h.b16 %v1307
        %v2033 = vunpack.c.l.b16 %v1308
        %v2034 = vunpack.c.h.b16 %v1308
        %v2035 = vunpack.c.l.b16 %v1309
        %v2036 = vunpack.c.h.b16 %v1309
        %v2037 = vunpack.c.l.b16 %v1310
        %v2038 = vunpack.c.h.b16 %v1310
        %v2039 = vunpack.c.l.b16 %v1311
        %v2040 = vunpack.c.h.b16 %v1311
        %v2041 = vunpack.c.l.b16 %v1312
        %v2042 = vunpack.c.h.b16 %v1312
        %v2043 = vunpack.c.l.b16 %v1313
        %v2044 = vunpack.c.h.b16 %v1313
        %v2045 = vunpack.c.l.b16 %v1314
        %v2046 = vunpack.c.h.b16 %v1314
        %v2047 = vunpack.c.l.b16 %v1315
        %v2048 = vunpack.c.h.b16 %v1315
        %v2049 = vunpack.c.l.b16 %v1316
        %v2050 = vunpack.c.h.b16 %v1316
        %v2051 = vunpack.c.l.b16 %v1317
        %v2052 = vunpack.c.h.b16 %v1317
        %v2053 = vunpack.c.l.b16 %v1318
        %v2054 = vunpack.c.h.b16 %v1318
        %v2055 = vunpack.c.l.b16 %v1319
        %v2056 = vunpack.c.h.b16 %v1319
        %v2057 = vunpack.c.l.b16 %v1320
        %v2058 = vunpack.c.h.b16 %v1320
        %v2059 = vunpack.c.l.b16 %v1321
        %v2060 = vunpack.c.h.b16 %v1321
        %v2061 = vunpack.c.l.b16 %v1322
        %v2062 = vunpack.c.h.b16 %v1322
        %v2063 = vunpack.c.l.b16 %v1323
        %v2064 = vunpack.c.h.b16 %v1323
        %v2065 = vunpack.c.l.b16 %v1324
        %v2066 = vunpack.c.h.b16 %v1324
        %v2067 = vunpack.c.l.b16 %v1325
        %v2068 = vunpack.c.h.b16 %v1325
        %v2069 = vunpack.c.l.b16 %v1326
        %v2070 = vunpack.c.h.b16 %v1326
        %v2071 = vunpack.c.l.b16 %v1327
        %v2072 = vunpack.c.h.b16 %v1327
        %v2073 = vunpack.c.l.b16 %v1328
        %v2074 = vunpack.c.h.b16 %v1328
        %v2075 = vunpack.c.l.b16 %v1329
        %v2076 = vunpack.c.h.b16 %v1329
        %v2077 = vunpack.c.l.b16 %v1330
        %v2078 = vunpack.c.h.b16 %v1330
        %v2079 = vunpack.c.l.b16 %v1331
        %v2080 = vunpack.c.h.b16 %v1331
        %v2081 = vunpack.c.l.b16 %v1332
        %v2082 = vunpack.c.h.b16 %v1332
        %v2083 = vunpack.c.l.b16 %v1333
        %v2084 = vunpack.c.h.b16 %v1333
        %v2085 = vunpack.c.l.b16 %v1334
        %v2086 = vunpack.c.h.b16 %v1334
        %v2087 = vunpack.c.l.b16 %v1335
        %v2088 = vunpack.c.h.b16 %v1335
        %v2089 = vunpack.c.l.b16 %v1336
        %v2090 = vunpack.c.h.b16 %v1336
        %v2091 = vunpack.c.l.b16 %v1337
        %v2092 = vunpack.c.h.b16 %v1337
        %v2093 = vunpack.c.l.b16 %v1338
        %v2094 = vunpack.c.h.b16 %v1338
        %v2095 = vunpack.c.l.b16 %v1339
        %v2096 = vunpack.c.h.b16 %v1339
        %v2097 = vunpack.c.l.b16 %v1340
        %v2098 = vunpack.c.h.b16 %v1340
        %v2099 = vunpack.c.l.b16 %v1341
        %v2100 = vunpack.c.h.b16 %v1341
        %v2101 = vunpack.c.l.b16 %v1342
        %v2102 = vunpack.c.h.b16 %v1342
        %v2103 = vunpack.c.l.b16 %v1343
        %v2104 = vunpack.c.h.b16 %v1343
        %v2105 = vunpack.c.l.b16 %v1344
        %v2106 = vunpack.c.h.b16 %v1344
        %v2107 = vunpack.c.l.b16 %v1345
        %v2108 = vunpack.c.h.b16 %v1345
        %v2109 = vunpack.c.l.b16 %v1346
        %v2110 = vunpack.c.h.b16 %v1346
        %v2111 = vunpack.c.l.b16 %v1347
        %v2112 = vunpack.c.h.b16 %v1347
        %v2113 = vunpack.c.l.b16 %v1348
        %v2114 = vunpack.c.h.b16 %v1348
        %v2115 = vunpack.c.l.b16 %v1349
        %v2116 = vunpack.c.h.b16 %v1349
        %v2117 = vunpack.c.l.b16 %v1350
        %v2118 = vunpack.c.h.b16 %v1350
        %v2119 = vpack.c.b16 %v1615, %v1607
        %v2120 = vpack.c.b16 %v1616, %v1608
        %v2121 = vpack.c.b16 %v1617, %v1609
        %v2122 = vpack.c.b16 %v1618, %v1610
        %v2123 = vpack.c.b16 %v1619, %v1611
        %v2124 = vpack.c.b16 %v1620, %v1612
        %v2125 = vpack.c.b16 %v1621, %v1613
        %v2126 = vpack.c.b16 %v1622, %v1614
        %v2127 = vpack.c.b16 %v1631, %v1623
        %v2128 = vpack.c.b16 %v1632, %v1624
        %v2129 = vpack.c.b16 %v1633, %v1625
        %v2130 = vpack.c.b16 %v1634, %v1626
        %v2131 = vpack.c.b16 %v1635, %v1627
        %v2132 = vpack.c.b16 %v1636, %v1628
        %v2133 = vpack.c.b16 %v1637, %v1629
        %v2134 = vpack.c.b16 %v1638, %v1630
        %v2135 = vpack.c.b16 %v1647, %v1639
        %v2136 = vpack.c.b16 %v1648, %v1640
        %v2137 = vpack.c.b16 %v1649, %v1641
        %v2138 = vpack.c.b16 %v1650, %v1642
        %v2139 = vpack.c.b16 %v1651, %v1643
        %v2140 = vpack.c.b16 %v1652, %v1644
        %v2141 = vpack.c.b16 %v1653, %v1645
        %v2142 = vpack.c.b16 %v1654, %v1646
        %v2143 = vpack.c.b16 %v1663, %v1655
        %v2144 = vpack.c.b16 %v1664, %v1656
        %v2145 = vpack.c.b16 %v1665, %v1657
        %v2146 = vpack.c.b16 %v1666, %v1658
        %v2147 = vpack.c.b16 %v1667, %v1659
        %v2148 = vpack.c.b16 %v1668, %v1660
        %v2149 = vpack.c.b16 %v1669, %v1661
        %v2150 = vpack.c.b16 %v1670, %v1662
        %v2151 = vpack.c.b16 %v1679, %v1671
        %v2152 = vpack.c.b16 %v1680, %v1672
        %v2153 = vpack.c.b16 %v1681, %v1673
        %v2154 = vpack.c.b16 %v1682, %v1674
        %v2155 = vpack.c.b16 %v1683, %v1675
        %v2156 = vpack.c.b16 %v1684, %v1676
        %v2157 = vpack.c.b16 %v1685, %v1677
        %v2158 = vpack.c.b16 %v1686, %v1678
        %v2159 = vpack.c.b16 %v1695, %v1687
        %v2160 = vpack.c.b16 %v1696, %v1688
        %v2161 = vpack.c.b16 %v1697, %v1689
        %v2162 = vpack.c.b16 %v1698, %v1690
        %v2163 = vpack.c.b16 %v1699, %v1691
        %v2164 = vpack.c.b16 %v1700, %v1692
        %v2165 = vpack.c.b16 %v1701, %v1693
        %v2166 = vpack.c.b16 %v1702, %v1694
        %v2167 = vpack.c.b16 %v1711, %v1703
        %v2168 = vpack.c.b16 %v1712, %v1704
        %v2169 = vpack.c.b16 %v1713, %v1705
        %v2170 = vpack.c.b16 %v1714, %v1706
        %v2171 = vpack.c.b16 %v1715, %v1707
        %v2172 = vpack.c.b16 %v1716, %v1708
        %v2173 = vpack.c.b16 %v1717, %v1709
        %v2174 = vpack.c.b16 %v1718, %v1710
        %v2175 = vpack.c.b16 %v1727, %v1719
        %v2176 = vpack.c.b16 %v1728, %v1720
        %v2177 = vpack.c.b16 %v1729, %v1721
        %v2178 = vpack.c.b16 %v1730, %v1722
        %v2179 = vpack.c.b16 %v1731, %v1723
        %v2180 = vpack.c.b16 %v1732, %v1724
        %v2181 = vpack.c.b16 %v1733, %v1725
        %v2182 = vpack.c.b16 %v1734, %v1726
        %v2183 = vpack.c.b16 %v1743, %v1735
        %v2184 = vpack.c.b16 %v1744, %v1736
        %v2185 = vpack.c.b16 %v1745, %v1737
        %v2186 = vpack.c.b16 %v1746, %v1738
        %v2187 = vpack.c.b16 %v1747, %v1739
        %v2188 = vpack.c.b16 %v1748, %v1740
        %v2189 = vpack.c.b16 %v1749, %v1741
        %v2190 = vpack.c.b16 %v1750, %v1742
        %v2191 = vpack.c.b16 %v1759, %v1751
        %v2192 = vpack.c.b16 %v1760, %v1752
        %v2193 = vpack.c.b16 %v1761, %v1753
        %v2194 = vpack.c.b16 %v1762, %v1754
        %v2195 = vpack.c.b16 %v1763, %v1755
        %v2196 = vpack.c.b16 %v1764, %v1756
        %v2197 = vpack.c.b16 %v1765, %v1757
        %v2198 = vpack.c.b16 %v1766, %v1758
        %v2199 = vpack.c.b16 %v1775, %v1767
        %v2200 = vpack.c.b16 %v1776, %v1768
        %v2201 = vpack.c.b16 %v1777, %v1769
        %v2202 = vpack.c.b16 %v1778, %v1770
        %v2203 = vpack.c.b16 %v1779, %v1771
        %v2204 = vpack.c.b16 %v1780, %v1772
        %v2205 = vpack.c.b16 %v1781, %v1773
        %v2206 = vpack.c.b16 %v1782, %v1774
        %v2207 = vpack.c.b16 %v1791, %v1783
        %v2208 = vpack.c.b16 %v1792, %v1784
        %v2209 = vpack.c.b16 %v1793, %v1785
        %v2210 = vpack.c.b16 %v1794, %v1786
        %v2211 = vpack.c.b16 %v1795, %v1787
        %v2212 = vpack.c.b16 %v1796, %v1788
        %v2213 = vpack.c.b16 %v1797, %v1789
        %v2214 = vpack.c.b16 %v1798, %v1790
        %v2215 = vpack.c.b16 %v1807, %v1799
        %v2216 = vpack.c.b16 %v1808, %v1800
        %v2217 = vpack.c.b16 %v1809, %v1801
        %v2218 = vpack.c.b16 %v1810, %v1802
        %v2219 = vpack.c.b16 %v1811, %v1803
        %v2220 = vpack.c.b16 %v1812, %v1804
        %v2221 = vpack.c.b16 %v1813, %v1805
        %v2222 = vpack.c.b16 %v1814, %v1806
        %v2223 = vpack.c.b16 %v1823, %v1815
        %v2224 = vpack.c.b16 %v1824, %v1816
        %v2225 = vpack.c.b16 %v1825, %v1817
        %v2226 = vpack.c.b16 %v1826, %v1818
        %v2227 = vpack.c.b16 %v1827, %v1819
        %v2228 = vpack.c.b16 %v1828, %v1820
        %v2229 = vpack.c.b16 %v1829, %v1821
        %v2230 = vpack.c.b16 %v1830, %v1822
        %v2231 = vpack.c.b16 %v1839, %v1831
        %v2232 = vpack.c.b16 %v1840, %v1832
        %v2233 = vpack.c.b16 %v1841, %v1833
        %v2234 = vpack.c.b16 %v1842, %v1834
        %v2235 = vpack.c.b16 %v1843, %v1835
        %v2236 = vpack.c.b16 %v1844, %v1836
        %v2237 = vpack.c.b16 %v1845, %v1837
        %v2238 = vpack.c.b16 %v1846, %v1838
        %v2239 = vpack.c.b16 %v1855, %v1847
        %v2240 = vpack.c.b16 %v1856, %v1848
        %v2241 = vpack.c.b16 %v1857, %v1849
        %v2242 = vpack.c.b16 %v1858, %v1850
        %v2243 = vpack.c.b16 %v1859, %v1851
        %v2244 = vpack.c.b16 %v1860, %v1852
        %v2245 = vpack.c.b16 %v1861, %v1853
        %v2246 = vpack.c.b16 %v1862, %v1854
        %v2247 = vpack.c.b16 %v1871, %v1863
        %v2248 = vpack.c.b16 %v1872, %v1864
        %v2249 = vpack.c.b16 %v1873, %v1865
        %v2250 = vpack.c.b16 %v1874, %v1866
        %v2251 = vpack.c.b16 %v1875, %v1867
        %v2252 = vpack.c.b16 %v1876, %v1868
        %v2253 = vpack.c.b16 %v1877, %v1869
        %v2254 = vpack.c.b16 %v1878, %v1870
        %v2255 = vpack.c.b16 %v1887, %v1879
        %v2256 = vpack.c.b16 %v1888, %v1880
        %v2257 = vpack.c.b16 %v1889, %v1881
        %v2258 = vpack.c.b16 %v1890, %v1882
        %v2259 = vpack.c.b16 %v1891, %v1883
        %v2260 = vpack.c.b16 %v1892, %v1884
        %v2261 = vpack.c.b16 %v1893, %v1885
        %v2262 = vpack.c.b16 %v1894, %v1886
        %v2263 = vpack.c.b16 %v1903, %v1895
        %v2264 = vpack.c.b16 %v1904, %v1896
        %v2265 = vpack.c.b16 %v1905, %v1897
        %v2266 = vpack.c.b16 %v1906, %v1898
        %v2267 = vpack.c.b16 %v1907, %v1899
        %v2268 = vpack.c.b16 %v1908, %v1900
        %v2269 = vpack.c.b16 %v1909, %v1901
        %v2270 = vpack.c.b16 %v1910, %v1902
        %v2271 = vpack.c.b16 %v1919, %v1911
        %v2272 = vpack.c.b16 %v1920, %v1912
        %v2273 = vpack.c.b16 %v1921, %v1913
        %v2274 = vpack.c.b16 %v1922, %v1914
        %v2275 = vpack.c.b16 %v1923, %v1915
        %v2276 = vpack.c.b16 %v1924, %v1916
        %v2277 = vpack.c.b16 %v1925, %v1917
        %v2278 = vpack.c.b16 %v1926, %v1918
        %v2279 = vpack.c.b16 %v1935, %v1927
        %v2280 = vpack.c.b16 %v1936, %v1928
        %v2281 = vpack.c.b16 %v1937, %v1929
        %v2282 = vpack.c.b16 %v1938, %v1930
        %v2283 = vpack.c.b16 %v1939, %v1931
        %v2284 = vpack.c.b16 %v1940, %v1932
        %v2285 = vpack.c.b16 %v1941, %v1933
        %v2286 = vpack.c.b16 %v1942, %v1934
        %v2287 = vpack.c.b16 %v1951, %v1943
        %v2288 = vpack.c.b16 %v1952, %v1944
        %v2289 = vpack.c.b16 %v1953, %v1945
        %v2290 = vpack.c.b16 %v1954, %v1946
        %v2291 = vpack.c.b16 %v1955, %v1947
        %v2292 = vpack.c.b16 %v1956, %v1948
        %v2293 = vpack.c.b16 %v1957, %v1949
        %v2294 = vpack.c.b16 %v1958, %v1950
        %v2295 = vpack.c.b16 %v1967, %v1959
        %v2296 = vpack.c.b16 %v1968, %v1960
        %v2297 = vpack.c.b16 %v1969, %v1961
        %v2298 = vpack.c.b16 %v1970, %v1962
        %v2299 = vpack.c.b16 %v1971, %v1963
        %v2300 = vpack.c.b16 %v1972, %v1964
        %v2301 = vpack.c.b16 %v1973, %v1965
        %v2302 = vpack.c.b16 %v1974, %v1966
        %v2303 = vpack.c.b16 %v1983, %v1975
        %v2304 = vpack.c.b16 %v1984, %v1976
        %v2305 = vpack.c.b16 %v1985, %v1977
        %v2306 = vpack.c.b16 %v1986, %v1978
        %v2307 = vpack.c.b16 %v1987, %v1979
        %v2308 = vpack.c.b16 %v1988, %v1980
        %v2309 = vpack.c.b16 %v1989, %v1981
        %v2310 = vpack.c.b16 %v1990, %v1982
        %v2311 = vpack.c.b16 %v1999, %v1991
        %v2312 = vpack.c.b16 %v2000, %v1992
        %v2313 = vpack.c.b16 %v2001, %v1993
        %v2314 = vpack.c.b16 %v2002, %v1994
        %v2315 = vpack.c.b16 %v2003, %v1995
        %v2316 = vpack.c.b16 %v2004, %v1996
        %v2317 = vpack.c.b16 %v2005, %v1997
        %v2318 = vpack.c.b16 %v2006, %v1998
        %v2319 = vpack.c.b16 %v2015, %v2007
        %v2320 = vpack.c.b16 %v2016, %v2008
        %v2321 = vpack.c.b16 %v2017, %v2009
        %v2322 = vpack.c.b16 %v2018, %v2010
        %v2323 = vpack.c.b16 %v2019, %v2011
        %v2324 = vpack.c.b16 %v2020, %v2012
        %v2325 = vpack.c.b16 %v2021, %v2013
        %v2326 = vpack.c.b16 %v2022, %v2014
        %v2327 = vpack.c.b16 %v2031, %v2023
        %v2328 = vpack.c.b16 %v2032, %v2024
        %v2329 = vpack.c.b16 %v2033, %v2025
        %v2330 = vpack.c.b16 %v2034, %v2026
        %v2331 = vpack.c.b16 %v2035, %v2027
        %v2332 = vpack.c.b16 %v2036, %v2028
        %v2333 = vpack.c.b16 %v2037, %v2029
        %v2334 = vpack.c.b16 %v2038, %v2030
        %v2335 = vpack.c.b16 %v2047, %v2039
        %v2336 = vpack.c.b16 %v2048, %v2040
        %v2337 = vpack.c.b16 %v2049, %v2041
        %v2338 = vpack.c.b16 %v2050, %v2042
        %v2339 = vpack.c.b16 %v2051, %v2043
        %v2340 = vpack.c.b16 %v2052, %v2044
        %v2341 = vpack.c.b16 %v2053, %v2045
        %v2342 = vpack.c.b16 %v2054, %v2046
        %v2343 = vpack.c.b16 %v2063, %v2055
        %v2344 = vpack.c.b16 %v2064, %v2056
        %v2345 = vpack.c.b16 %v2065, %v2057
        %v2346 = vpack.c.b16 %v2066, %v2058
        %v2347 = vpack.c.b16 %v2067, %v2059
        %v2348 = vpack.c.b16 %v2068, %v2060
        %v2349 = vpack.c.b16 %v2069, %v2061
        %v2350 = vpack.c.b16 %v2070, %v2062
        %v2351 = vpack.c.b16 %v2079, %v2071
        %v2352 = vpack.c.b16 %v2080, %v2072
        %v2353 = vpack.c.b16 %v2081, %v2073
        %v2354 = vpack.c.b16 %v2082, %v2074
        %v2355 = vpack.c.b16 %v2083, %v2075
        %v2356 = vpack.c.b16 %v2084, %v2076
        %v2357 = vpack.c.b16 %v2085, %v2077
        %v2358 = vpack.c.b16 %v2086, %v2078
        %v2359 = vpack.c.b16 %v2095, %v2087
        %v2360 = vpack.c.b16 %v2096, %v2088
        %v2361 = vpack.c.b16 %v2097, %v2089
        %v2362 = vpack.c.b16 %v2098, %v2090
        %v2363 = vpack.c.b16 %v2099, %v2091
        %v2364 = vpack.c.b16 %v2100, %v2092
        %v2365 = vpack.c.b16 %v2101, %v2093
        %v2366 = vpack.c.b16 %v2102, %v2094
        %v2367 = vpack.c.b16 %v2111, %v2103
        %v2368 = vpack.c.b16 %v2112, %v2104
        %v2369 = vpack.c.b16 %v2113, %v2105
        %v2370 = vpack.c.b16 %v2114, %v2106
        %v2371 = vpack.c.b16 %v2115, %v2107
        %v2372 = vpack.c.b16 %v2116, %v2108
        %v2373 = vpack.c.b16 %v2117, %v2109
        %v2374 = vpack.c.b16 %v2118, %v2110
        %2631 = vmatprep.subr.bf16.mxu0 %v2176
        %2632 = vmatpush1.bf16.msra.mxu0 %v2175
        %2633 = vmatprep.subr.bf16.mxu0 %v2168
        %2634 = vmatpush1.bf16.msra.mxu0 %v2167
        %2635 = vmatprep.subr.bf16.mxu0 %v2160
        %2636 = vmatpush1.bf16.msra.mxu0 %v2159
        %2637 = vmatprep.subr.bf16.mxu0 %v2152
        %2638 = vmatpush1.bf16.msra.mxu0 %v2151
        %2639 = vmatprep.subr.bf16.mxu0 %v2144
        %2640 = vmatpush1.bf16.msra.mxu0 %v2143
        %2641 = vmatprep.subr.bf16.mxu0 %v2136
        %2642 = vmatpush1.bf16.msra.mxu0 %v2135
        %2643 = vmatprep.subr.bf16.mxu0 %v2128
        %2644 = vmatpush1.bf16.msra.mxu0 %v2127
        %2645 = vmatprep.subr.bf16.mxu0 %v2120
        %2646 = vmatpush1.bf16.msra.mxu0 %v2119
        %2647 = vmatprep.subr.bf16.mxu0 %v2240
        %2648 = vmatpush2.bf16.msra.mxu0 %v2239
        %2649 = vmatprep.subr.bf16.mxu0 %v2232
        %2650 = vmatpush2.bf16.msra.mxu0 %v2231
        %2651 = vmatprep.subr.bf16.mxu0 %v2224
        %2652 = vmatpush2.bf16.msra.mxu0 %v2223
        %2653 = vmatprep.subr.bf16.mxu0 %v2216
        %2654 = vmatpush2.bf16.msra.mxu0 %v2215
        %2655 = vmatprep.subr.bf16.mxu0 %v2208
        %2656 = vmatpush2.bf16.msra.mxu0 %v2207
        %2657 = vmatprep.subr.bf16.mxu0 %v2200
        %2658 = vmatpush2.bf16.msra.mxu0 %v2199
        %2659 = vmatprep.subr.bf16.mxu0 %v2192
        %2660 = vmatpush2.bf16.msra.mxu0 %v2191
        %2661 = vmatprep.subr.bf16.mxu0 %v2184
        %2662 = vmatpush2.bf16.msra.mxu0 %v2183
        %2663 = vmatprep.mubr.bf16.mxu0 %v1088
        %2664 = vmatmul.mubr.bf16.gmra.mxu0 %v1087
        %v2665 = vpop.f32.mrf.mxu0
        %v2666 = vadd.f32 0.0, %v2665
        %v2667 = vpop.f32.mrf.mxu0
        %v2668 = vadd.f32 0.0, %v2667
        %v2669 = vpop.f32.mrf.mxu0
        %v2670 = vadd.f32 0.0, %v2669
        %v2671 = vpop.f32.mrf.mxu0
        %v2672 = vadd.f32 0.0, %v2671
        %2673 = vmatprep.mubr.bf16.mxu0 %v1092
        %2674 = vmatmul.mubr.bf16.gmra.mxu0 %v1091
        %v2675 = vpop.f32.mrf.mxu0
        %v2676 = vadd.f32 0.0, %v2675
        %v2677 = vpop.f32.mrf.mxu0
        %v2678 = vadd.f32 0.0, %v2677
        %v2679 = vpop.f32.mrf.mxu0
        %v2680 = vadd.f32 0.0, %v2679
        %v2681 = vpop.f32.mrf.mxu0
        %v2682 = vadd.f32 0.0, %v2681
        %2683 = vdwg.mxu0
        %2684 = vmatprep.subr.bf16.mxu0 %v2304
        %2685 = vmatpush1.bf16.msra.mxu0 %v2303
        %2686 = vmatprep.subr.bf16.mxu0 %v2296
        %2687 = vmatpush1.bf16.msra.mxu0 %v2295
        %2688 = vmatprep.subr.bf16.mxu0 %v2288
        %2689 = vmatpush1.bf16.msra.mxu0 %v2287
        %2690 = vmatprep.subr.bf16.mxu0 %v2280
        %2691 = vmatpush1.bf16.msra.mxu0 %v2279
        %2692 = vmatprep.subr.bf16.mxu0 %v2272
        %2693 = vmatpush1.bf16.msra.mxu0 %v2271
        %2694 = vmatprep.subr.bf16.mxu0 %v2264
        %2695 = vmatpush1.bf16.msra.mxu0 %v2263
        %2696 = vmatprep.subr.bf16.mxu0 %v2256
        %2697 = vmatpush1.bf16.msra.mxu0 %v2255
        %2698 = vmatprep.subr.bf16.mxu0 %v2248
        %2699 = vmatpush1.bf16.msra.mxu0 %v2247
        %2700 = vmatprep.subr.bf16.mxu0 %v2368
        %2701 = vmatpush2.bf16.msra.mxu0 %v2367
        %2702 = vmatprep.subr.bf16.mxu0 %v2360
        %2703 = vmatpush2.bf16.msra.mxu0 %v2359
        %2704 = vmatprep.subr.bf16.mxu0 %v2352
        %2705 = vmatpush2.bf16.msra.mxu0 %v2351
        %2706 = vmatprep.subr.bf16.mxu0 %v2344
        %2707 = vmatpush2.bf16.msra.mxu0 %v2343
        %2708 = vmatprep.subr.bf16.mxu0 %v2336
        %2709 = vmatpush2.bf16.msra.mxu0 %v2335
        %2710 = vmatprep.subr.bf16.mxu0 %v2328
        %2711 = vmatpush2.bf16.msra.mxu0 %v2327
        %2712 = vmatprep.subr.bf16.mxu0 %v2320
        %2713 = vmatpush2.bf16.msra.mxu0 %v2319
        %2714 = vmatprep.subr.bf16.mxu0 %v2312
        %2715 = vmatpush2.bf16.msra.mxu0 %v2311
        %2716 = vmatprep.mubr.bf16.mxu0 %v1090
        %2717 = vmatmul.mubr.bf16.gmra.mxu0 %v1089
        %v2718 = vpop.f32.mrf.mxu0
        %v2719 = vadd.f32 %v2666, %v2718
        %v2720 = vpop.f32.mrf.mxu0
        %v2721 = vadd.f32 %v2668, %v2720
        %v2722 = vpop.f32.mrf.mxu0
        %v2723 = vadd.f32 %v2670, %v2722
        %v2724 = vpop.f32.mrf.mxu0
        %v2725 = vadd.f32 %v2672, %v2724
        %2726 = vmatprep.mubr.bf16.mxu0 %v1094
        %2727 = vmatmul.mubr.bf16.gmra.mxu0 %v1093
        %v2728 = vpop.f32.mrf.mxu0
        %v2729 = vadd.f32 %v2676, %v2728
        %v2730 = vpop.f32.mrf.mxu0
        %v2731 = vadd.f32 %v2678, %v2730
        %v2732 = vpop.f32.mrf.mxu0
        %v2733 = vadd.f32 %v2680, %v2732
        %v2734 = vpop.f32.mrf.mxu0
        %v2735 = vadd.f32 %v2682, %v2734
        %2736 = vdwg.mxu0
        %2737 = vmatprep.subr.bf16.mxu0 %v2178
        %2738 = vmatpush1.bf16.msra.mxu0 %v2177
        %2739 = vmatprep.subr.bf16.mxu0 %v2170
        %2740 = vmatpush1.bf16.msra.mxu0 %v2169
        %2741 = vmatprep.subr.bf16.mxu0 %v2162
        %2742 = vmatpush1.bf16.msra.mxu0 %v2161
        %2743 = vmatprep.subr.bf16.mxu0 %v2154
        %2744 = vmatpush1.bf16.msra.mxu0 %v2153
        %2745 = vmatprep.subr.bf16.mxu0 %v2146
        %2746 = vmatpush1.bf16.msra.mxu0 %v2145
        %2747 = vmatprep.subr.bf16.mxu0 %v2138
        %2748 = vmatpush1.bf16.msra.mxu0 %v2137
        %2749 = vmatprep.subr.bf16.mxu0 %v2130
        %2750 = vmatpush1.bf16.msra.mxu0 %v2129
        %2751 = vmatprep.subr.bf16.mxu0 %v2122
        %2752 = vmatpush1.bf16.msra.mxu0 %v2121
        %2753 = vmatprep.subr.bf16.mxu0 %v2242
        %2754 = vmatpush2.bf16.msra.mxu0 %v2241
        %2755 = vmatprep.subr.bf16.mxu0 %v2234
        %2756 = vmatpush2.bf16.msra.mxu0 %v2233
        %2757 = vmatprep.subr.bf16.mxu0 %v2226
        %2758 = vmatpush2.bf16.msra.mxu0 %v2225
        %2759 = vmatprep.subr.bf16.mxu0 %v2218
        %2760 = vmatpush2.bf16.msra.mxu0 %v2217
        %2761 = vmatprep.subr.bf16.mxu0 %v2210
        %2762 = vmatpush2.bf16.msra.mxu0 %v2209
        %2763 = vmatprep.subr.bf16.mxu0 %v2202
        %2764 = vmatpush2.bf16.msra.mxu0 %v2201
        %2765 = vmatprep.subr.bf16.mxu0 %v2194
        %2766 = vmatpush2.bf16.msra.mxu0 %v2193
        %2767 = vmatprep.subr.bf16.mxu0 %v2186
        %2768 = vmatpush2.bf16.msra.mxu0 %v2185
        %2769 = vmatprep.mubr.bf16.mxu0 %v1088
        %2770 = vmatmul.mubr.bf16.gmra.mxu0 %v1087
        %v2771 = vpop.f32.mrf.mxu0
        %v2772 = vadd.f32 0.0, %v2771
        %v2773 = vpop.f32.mrf.mxu0
        %v2774 = vadd.f32 0.0, %v2773
        %v2775 = vpop.f32.mrf.mxu0
        %v2776 = vadd.f32 0.0, %v2775
        %v2777 = vpop.f32.mrf.mxu0
        %v2778 = vadd.f32 0.0, %v2777
        %2779 = vmatprep.mubr.bf16.mxu0 %v1092
        %2780 = vmatmul.mubr.bf16.gmra.mxu0 %v1091
        %v2781 = vpop.f32.mrf.mxu0
        %v2782 = vadd.f32 0.0, %v2781
        %v2783 = vpop.f32.mrf.mxu0
        %v2784 = vadd.f32 0.0, %v2783
        %v2785 = vpop.f32.mrf.mxu0
        %v2786 = vadd.f32 0.0, %v2785
        %v2787 = vpop.f32.mrf.mxu0
        %v2788 = vadd.f32 0.0, %v2787
        %2789 = vdwg.mxu0
        %2790 = vmatprep.subr.bf16.mxu0 %v2306
        %2791 = vmatpush1.bf16.msra.mxu0 %v2305
        %2792 = vmatprep.subr.bf16.mxu0 %v2298
        %2793 = vmatpush1.bf16.msra.mxu0 %v2297
        %2794 = vmatprep.subr.bf16.mxu0 %v2290
        %2795 = vmatpush1.bf16.msra.mxu0 %v2289
        %2796 = vmatprep.subr.bf16.mxu0 %v2282
        %2797 = vmatpush1.bf16.msra.mxu0 %v2281
        %2798 = vmatprep.subr.bf16.mxu0 %v2274
        %2799 = vmatpush1.bf16.msra.mxu0 %v2273
        %2800 = vmatprep.subr.bf16.mxu0 %v2266
        %2801 = vmatpush1.bf16.msra.mxu0 %v2265
        %2802 = vmatprep.subr.bf16.mxu0 %v2258
        %2803 = vmatpush1.bf16.msra.mxu0 %v2257
        %2804 = vmatprep.subr.bf16.mxu0 %v2250
        %2805 = vmatpush1.bf16.msra.mxu0 %v2249
        %2806 = vmatprep.subr.bf16.mxu0 %v2370
        %2807 = vmatpush2.bf16.msra.mxu0 %v2369
        %2808 = vmatprep.subr.bf16.mxu0 %v2362
        %2809 = vmatpush2.bf16.msra.mxu0 %v2361
        %2810 = vmatprep.subr.bf16.mxu0 %v2354
        %2811 = vmatpush2.bf16.msra.mxu0 %v2353
        %2812 = vmatprep.subr.bf16.mxu0 %v2346
        %2813 = vmatpush2.bf16.msra.mxu0 %v2345
        %2814 = vmatprep.subr.bf16.mxu0 %v2338
        %2815 = vmatpush2.bf16.msra.mxu0 %v2337
        %2816 = vmatprep.subr.bf16.mxu0 %v2330
        %2817 = vmatpush2.bf16.msra.mxu0 %v2329
        %2818 = vmatprep.subr.bf16.mxu0 %v2322
        %2819 = vmatpush2.bf16.msra.mxu0 %v2321
        %2820 = vmatprep.subr.bf16.mxu0 %v2314
        %2821 = vmatpush2.bf16.msra.mxu0 %v2313
        %2822 = vmatprep.mubr.bf16.mxu0 %v1090
        %2823 = vmatmul.mubr.bf16.gmra.mxu0 %v1089
        %v2824 = vpop.f32.mrf.mxu0
        %v2825 = vadd.f32 %v2772, %v2824
        %v2826 = vpop.f32.mrf.mxu0
        %v2827 = vadd.f32 %v2774, %v2826
        %v2828 = vpop.f32.mrf.mxu0
        %v2829 = vadd.f32 %v2776, %v2828
        %v2830 = vpop.f32.mrf.mxu0
        %v2831 = vadd.f32 %v2778, %v2830
        %2832 = vmatprep.mubr.bf16.mxu0 %v1094
        %2833 = vmatmul.mubr.bf16.gmra.mxu0 %v1093
        %v2834 = vpop.f32.mrf.mxu0
        %v2835 = vadd.f32 %v2782, %v2834
        %v2836 = vpop.f32.mrf.mxu0
        %v2837 = vadd.f32 %v2784, %v2836
        %v2838 = vpop.f32.mrf.mxu0
        %v2839 = vadd.f32 %v2786, %v2838
        %v2840 = vpop.f32.mrf.mxu0
        %v2841 = vadd.f32 %v2788, %v2840
        %2842 = vdwg.mxu0
        %2843 = vmatprep.subr.bf16.mxu0 %v2180
        %2844 = vmatpush1.bf16.msra.mxu0 %v2179
        %2845 = vmatprep.subr.bf16.mxu0 %v2172
        %2846 = vmatpush1.bf16.msra.mxu0 %v2171
        %2847 = vmatprep.subr.bf16.mxu0 %v2164
        %2848 = vmatpush1.bf16.msra.mxu0 %v2163
        %2849 = vmatprep.subr.bf16.mxu0 %v2156
        %2850 = vmatpush1.bf16.msra.mxu0 %v2155
        %2851 = vmatprep.subr.bf16.mxu0 %v2148
        %2852 = vmatpush1.bf16.msra.mxu0 %v2147
        %2853 = vmatprep.subr.bf16.mxu0 %v2140
        %2854 = vmatpush1.bf16.msra.mxu0 %v2139
        %2855 = vmatprep.subr.bf16.mxu0 %v2132
        %2856 = vmatpush1.bf16.msra.mxu0 %v2131
        %2857 = vmatprep.subr.bf16.mxu0 %v2124
        %2858 = vmatpush1.bf16.msra.mxu0 %v2123
        %2859 = vmatprep.subr.bf16.mxu0 %v2244
        %2860 = vmatpush2.bf16.msra.mxu0 %v2243
        %2861 = vmatprep.subr.bf16.mxu0 %v2236
        %2862 = vmatpush2.bf16.msra.mxu0 %v2235
        %2863 = vmatprep.subr.bf16.mxu0 %v2228
        %2864 = vmatpush2.bf16.msra.mxu0 %v2227
        %2865 = vmatprep.subr.bf16.mxu0 %v2220
        %2866 = vmatpush2.bf16.msra.mxu0 %v2219
        %2867 = vmatprep.subr.bf16.mxu0 %v2212
        %2868 = vmatpush2.bf16.msra.mxu0 %v2211
        %2869 = vmatprep.subr.bf16.mxu0 %v2204
        %2870 = vmatpush2.bf16.msra.mxu0 %v2203
        %2871 = vmatprep.subr.bf16.mxu0 %v2196
        %2872 = vmatpush2.bf16.msra.mxu0 %v2195
        %2873 = vmatprep.subr.bf16.mxu0 %v2188
        %2874 = vmatpush2.bf16.msra.mxu0 %v2187
        %2875 = vmatprep.mubr.bf16.mxu0 %v1088
        %2876 = vmatmul.mubr.bf16.gmra.mxu0 %v1087
        %v2877 = vpop.f32.mrf.mxu0
        %v2878 = vadd.f32 0.0, %v2877
        %v2879 = vpop.f32.mrf.mxu0
        %v2880 = vadd.f32 0.0, %v2879
        %v2881 = vpop.f32.mrf.mxu0
        %v2882 = vadd.f32 0.0, %v2881
        %v2883 = vpop.f32.mrf.mxu0
        %v2884 = vadd.f32 0.0, %v2883
        %2885 = vmatprep.mubr.bf16.mxu0 %v1092
        %2886 = vmatmul.mubr.bf16.gmra.mxu0 %v1091
        %v2887 = vpop.f32.mrf.mxu0
        %v2888 = vadd.f32 0.0, %v2887
        %v2889 = vpop.f32.mrf.mxu0
        %v2890 = vadd.f32 0.0, %v2889
        %v2891 = vpop.f32.mrf.mxu0
        %v2892 = vadd.f32 0.0, %v2891
        %v2893 = vpop.f32.mrf.mxu0
        %v2894 = vadd.f32 0.0, %v2893
        %2895 = vdwg.mxu0
        %2896 = vmatprep.subr.bf16.mxu0 %v2308
        %2897 = vmatpush1.bf16.msra.mxu0 %v2307
        %2898 = vmatprep.subr.bf16.mxu0 %v2300
        %2899 = vmatpush1.bf16.msra.mxu0 %v2299
        %2900 = vmatprep.subr.bf16.mxu0 %v2292
        %2901 = vmatpush1.bf16.msra.mxu0 %v2291
        %2902 = vmatprep.subr.bf16.mxu0 %v2284
        %2903 = vmatpush1.bf16.msra.mxu0 %v2283
        %2904 = vmatprep.subr.bf16.mxu0 %v2276
        %2905 = vmatpush1.bf16.msra.mxu0 %v2275
        %2906 = vmatprep.subr.bf16.mxu0 %v2268
        %2907 = vmatpush1.bf16.msra.mxu0 %v2267
        %2908 = vmatprep.subr.bf16.mxu0 %v2260
        %2909 = vmatpush1.bf16.msra.mxu0 %v2259
        %2910 = vmatprep.subr.bf16.mxu0 %v2252
        %2911 = vmatpush1.bf16.msra.mxu0 %v2251
        %2912 = vmatprep.subr.bf16.mxu0 %v2372
        %2913 = vmatpush2.bf16.msra.mxu0 %v2371
        %2914 = vmatprep.subr.bf16.mxu0 %v2364
        %2915 = vmatpush2.bf16.msra.mxu0 %v2363
        %2916 = vmatprep.subr.bf16.mxu0 %v2356
        %2917 = vmatpush2.bf16.msra.mxu0 %v2355
        %2918 = vmatprep.subr.bf16.mxu0 %v2348
        %2919 = vmatpush2.bf16.msra.mxu0 %v2347
        %2920 = vmatprep.subr.bf16.mxu0 %v2340
        %2921 = vmatpush2.bf16.msra.mxu0 %v2339
        %2922 = vmatprep.subr.bf16.mxu0 %v2332
        %2923 = vmatpush2.bf16.msra.mxu0 %v2331
        %2924 = vmatprep.subr.bf16.mxu0 %v2324
        %2925 = vmatpush2.bf16.msra.mxu0 %v2323
        %2926 = vmatprep.subr.bf16.mxu0 %v2316
        %2927 = vmatpush2.bf16.msra.mxu0 %v2315
        %2928 = vmatprep.mubr.bf16.mxu0 %v1090
        %2929 = vmatmul.mubr.bf16.gmra.mxu0 %v1089
        %v2930 = vpop.f32.mrf.mxu0
        %v2931 = vadd.f32 %v2878, %v2930
        %v2932 = vpop.f32.mrf.mxu0
        %v2933 = vadd.f32 %v2880, %v2932
        %v2934 = vpop.f32.mrf.mxu0
        %v2935 = vadd.f32 %v2882, %v2934
        %v2936 = vpop.f32.mrf.mxu0
        %v2937 = vadd.f32 %v2884, %v2936
        %2938 = vmatprep.mubr.bf16.mxu0 %v1094
        %2939 = vmatmul.mubr.bf16.gmra.mxu0 %v1093
        %v2940 = vpop.f32.mrf.mxu0
        %v2941 = vadd.f32 %v2888, %v2940
        %v2942 = vpop.f32.mrf.mxu0
        %v2943 = vadd.f32 %v2890, %v2942
        %v2944 = vpop.f32.mrf.mxu0
        %v2945 = vadd.f32 %v2892, %v2944
        %v2946 = vpop.f32.mrf.mxu0
        %v2947 = vadd.f32 %v2894, %v2946
        %2948 = vdwg.mxu0
        %2949 = vmatprep.subr.bf16.mxu0 %v2182
        %2950 = vmatpush1.bf16.msra.mxu0 %v2181
        %2951 = vmatprep.subr.bf16.mxu0 %v2174
        %2952 = vmatpush1.bf16.msra.mxu0 %v2173
        %2953 = vmatprep.subr.bf16.mxu0 %v2166
        %2954 = vmatpush1.bf16.msra.mxu0 %v2165
        %2955 = vmatprep.subr.bf16.mxu0 %v2158
        %2956 = vmatpush1.bf16.msra.mxu0 %v2157
        %2957 = vmatprep.subr.bf16.mxu0 %v2150
        %2958 = vmatpush1.bf16.msra.mxu0 %v2149
        %2959 = vmatprep.subr.bf16.mxu0 %v2142
        %2960 = vmatpush1.bf16.msra.mxu0 %v2141
        %2961 = vmatprep.subr.bf16.mxu0 %v2134
        %2962 = vmatpush1.bf16.msra.mxu0 %v2133
        %2963 = vmatprep.subr.bf16.mxu0 %v2126
        %2964 = vmatpush1.bf16.msra.mxu0 %v2125
        %2965 = vmatprep.subr.bf16.mxu0 %v2246
        %2966 = vmatpush2.bf16.msra.mxu0 %v2245
        %2967 = vmatprep.subr.bf16.mxu0 %v2238
        %2968 = vmatpush2.bf16.msra.mxu0 %v2237
        %2969 = vmatprep.subr.bf16.mxu0 %v2230
        %2970 = vmatpush2.bf16.msra.mxu0 %v2229
        %2971 = vmatprep.subr.bf16.mxu0 %v2222
        %2972 = vmatpush2.bf16.msra.mxu0 %v2221
        %2973 = vmatprep.subr.bf16.mxu0 %v2214
        %2974 = vmatpush2.bf16.msra.mxu0 %v2213
        %2975 = vmatprep.subr.bf16.mxu0 %v2206
        %2976 = vmatpush2.bf16.msra.mxu0 %v2205
        %2977 = vmatprep.subr.bf16.mxu0 %v2198
        %2978 = vmatpush2.bf16.msra.mxu0 %v2197
        %2979 = vmatprep.subr.bf16.mxu0 %v2190
        %2980 = vmatpush2.bf16.msra.mxu0 %v2189
        %2981 = vmatprep.mubr.bf16.mxu0 %v1088
        %2982 = vmatmul.mubr.bf16.gmra.mxu0 %v1087
        %v2983 = vpop.f32.mrf.mxu0
        %v2984 = vadd.f32 0.0, %v2983
        %v2985 = vpop.f32.mrf.mxu0
        %v2986 = vadd.f32 0.0, %v2985
        %v2987 = vpop.f32.mrf.mxu0
        %v2988 = vadd.f32 0.0, %v2987
        %v2989 = vpop.f32.mrf.mxu0
        %v2990 = vadd.f32 0.0, %v2989
        %2991 = vmatprep.mubr.bf16.mxu0 %v1092
        %2992 = vmatmul.mubr.bf16.gmra.mxu0 %v1091
        %v2993 = vpop.f32.mrf.mxu0
        %v2994 = vadd.f32 0.0, %v2993
        %v2995 = vpop.f32.mrf.mxu0
        %v2996 = vadd.f32 0.0, %v2995
        %v2997 = vpop.f32.mrf.mxu0
        %v2998 = vadd.f32 0.0, %v2997
        %v2999 = vpop.f32.mrf.mxu0
        %v3000 = vadd.f32 0.0, %v2999
        %3001 = vdwg.mxu0
        %3002 = vmatprep.subr.bf16.mxu0 %v2310
        %3003 = vmatpush1.bf16.msra.mxu0 %v2309
        %3004 = vmatprep.subr.bf16.mxu0 %v2302
        %3005 = vmatpush1.bf16.msra.mxu0 %v2301
        %3006 = vmatprep.subr.bf16.mxu0 %v2294
        %3007 = vmatpush1.bf16.msra.mxu0 %v2293
        %3008 = vmatprep.subr.bf16.mxu0 %v2286
        %3009 = vmatpush1.bf16.msra.mxu0 %v2285
        %3010 = vmatprep.subr.bf16.mxu0 %v2278
        %3011 = vmatpush1.bf16.msra.mxu0 %v2277
        %3012 = vmatprep.subr.bf16.mxu0 %v2270
        %3013 = vmatpush1.bf16.msra.mxu0 %v2269
        %3014 = vmatprep.subr.bf16.mxu0 %v2262
        %3015 = vmatpush1.bf16.msra.mxu0 %v2261
        %3016 = vmatprep.subr.bf16.mxu0 %v2254
        %3017 = vmatpush1.bf16.msra.mxu0 %v2253
        %3018 = vmatprep.subr.bf16.mxu0 %v2374
        %3019 = vmatpush2.bf16.msra.mxu0 %v2373
        %3020 = vmatprep.subr.bf16.mxu0 %v2366
        %3021 = vmatpush2.bf16.msra.mxu0 %v2365
        %3022 = vmatprep.subr.bf16.mxu0 %v2358
        %3023 = vmatpush2.bf16.msra.mxu0 %v2357
        %3024 = vmatprep.subr.bf16.mxu0 %v2350
        %3025 = vmatpush2.bf16.msra.mxu0 %v2349
        %3026 = vmatprep.subr.bf16.mxu0 %v2342
        %3027 = vmatpush2.bf16.msra.mxu0 %v2341
        %3028 = vmatprep.subr.bf16.mxu0 %v2334
        %3029 = vmatpush2.bf16.msra.mxu0 %v2333
        %3030 = vmatprep.subr.bf16.mxu0 %v2326
        %3031 = vmatpush2.bf16.msra.mxu0 %v2325
        %3032 = vmatprep.subr.bf16.mxu0 %v2318
        %3033 = vmatpush2.bf16.msra.mxu0 %v2317
        %3034 = vmatprep.mubr.bf16.mxu0 %v1090
        %3035 = vmatmul.mubr.bf16.gmra.mxu0 %v1089
        %v3036 = vpop.f32.mrf.mxu0
        %v3037 = vadd.f32 %v2984, %v3036
        %v3038 = vpop.f32.mrf.mxu0
        %v3039 = vadd.f32 %v2986, %v3038
        %v3040 = vpop.f32.mrf.mxu0
        %v3041 = vadd.f32 %v2988, %v3040
        %v3042 = vpop.f32.mrf.mxu0
        %v3043 = vadd.f32 %v2990, %v3042
        %3044 = vmatprep.mubr.bf16.mxu0 %v1094
        %3045 = vmatmul.mubr.bf16.gmra.mxu0 %v1093
        %v3046 = vpop.f32.mrf.mxu0
        %v3047 = vadd.f32 %v2994, %v3046
        %v3048 = vpop.f32.mrf.mxu0
        %v3049 = vadd.f32 %v2996, %v3048
        %v3050 = vpop.f32.mrf.mxu0
        %v3051 = vadd.f32 %v2998, %v3050
        %v3052 = vpop.f32.mrf.mxu0
        %v3053 = vadd.f32 %v3000, %v3052
        %3054 = vdwg.mxu0
        %v3055 = vpack.c.bf16 %v2723, %v2719
        %v3056 = vpack.c.bf16 %v2725, %v2721
        %v3057 = vpack.c.bf16 %v2829, %v2825
        %v3058 = vpack.c.bf16 %v2831, %v2827
        %v3059 = vpack.c.bf16 %v2935, %v2931
        %v3060 = vpack.c.bf16 %v2937, %v2933
        %v3061 = vpack.c.bf16 %v3041, %v3037
        %v3062 = vpack.c.bf16 %v3043, %v3039
        %v3063 = vpack.c.bf16 %v2733, %v2729
        %v3064 = vpack.c.bf16 %v2735, %v2731
        %v3065 = vpack.c.bf16 %v2839, %v2835
        %v3066 = vpack.c.bf16 %v2841, %v2837
        %v3067 = vpack.c.bf16 %v2945, %v2941
        %v3068 = vpack.c.bf16 %v2947, %v2943
        %v3069 = vpack.c.bf16 %v3051, %v3047
        %v3070 = vpack.c.bf16 %v3053, %v3049
        %v3071 = vld [vmem:[%s6] sm:$0xff]
        %v3073 = vcombine.high %v3071, %v3071
        %v3075 = vunpack.c.l.s4 1966171168
        %v3076 = vunpack.c.0.s8 %v3075
        %v3077 = vlaneseq
        %v3078 = vshrl.u32 %v3077, 7
        %v3079 = vsub.s32 %v3076, %v3078
        %v3080 = vrot.slane %v3071, %v3079
        %v3082 = vunpack.c.l.s4 1966171168
        %v3083 = vunpack.c.0.s8 %v3082
        %v3084 = vlaneseq
        %v3085 = vshrl.u32 %v3084, 7
        %v3086 = vsub.s32 %v3083, %v3085
        %v3087 = vrot.slane %v3073, %v3086
        %v3088 = vcombine.high %v3080, %v3080
        %v3089 = vcombine.high %v3087, %v3087
        %v3091 = vunpack.c.l.s4 1966171168
        %v3092 = vunpack.c.0.s8 %v3091
        %v3093 = vlaneseq
        %v3094 = vshrl.u32 %v3093, 7
        %v3095 = vsub.s32 %v3092, %v3094
        %v3096 = vrot.slane %v3080, %v3095
        %v3098 = vunpack.c.l.s4 1966171168
        %v3099 = vunpack.c.0.s8 %v3098
        %v3100 = vlaneseq
        %v3101 = vshrl.u32 %v3100, 7
        %v3102 = vsub.s32 %v3099, %v3101
        %v3103 = vrot.slane %v3087, %v3102
        %v3105 = vunpack.c.l.s4 1966171168
        %v3106 = vunpack.c.0.s8 %v3105
        %v3107 = vlaneseq
        %v3108 = vshrl.u32 %v3107, 7
        %v3109 = vsub.s32 %v3106, %v3108
        %v3110 = vrot.slane %v3088, %v3109
        %v3112 = vunpack.c.l.s4 1966171168
        %v3113 = vunpack.c.0.s8 %v3112
        %v3114 = vlaneseq
        %v3115 = vshrl.u32 %v3114, 7
        %v3116 = vsub.s32 %v3113, %v3115
        %v3117 = vrot.slane %v3089, %v3116
        %v3118 = vcombine.high %v3096, %v3096
        %v3119 = vcombine.high %v3103, %v3103
        %v3120 = vcombine.high %v3110, %v3110
        %v3121 = vcombine.high %v3117, %v3117
        %v3123 = vpack.i.b16 %v3096, %v3096
        %v3125 = vlaneseq
        %v3126 = vshrl.u32 %v3125, 7
        %v3127 = vsub.s32 0, %v3126
        %v3128 = vrot.slane %v3123, %v3127
        %v3130 = vpack.i.b16 %v3110, %v3110
        %v3132 = vlaneseq
        %v3133 = vshrl.u32 %v3132, 7
        %v3134 = vsub.s32 0, %v3133
        %v3135 = vrot.slane %v3130, %v3134
        %v3137 = vpack.i.b16 %v3118, %v3118
        %v3139 = vlaneseq
        %v3140 = vshrl.u32 %v3139, 7
        %v3141 = vsub.s32 0, %v3140
        %v3142 = vrot.slane %v3137, %v3141
        %v3144 = vpack.i.b16 %v3120, %v3120
        %v3146 = vlaneseq
        %v3147 = vshrl.u32 %v3146, 7
        %v3148 = vsub.s32 0, %v3147
        %v3149 = vrot.slane %v3144, %v3148
        %v3151 = vpack.i.b16 %v3103, %v3103
        %v3153 = vlaneseq
        %v3154 = vshrl.u32 %v3153, 7
        %v3155 = vsub.s32 0, %v3154
        %v3156 = vrot.slane %v3151, %v3155
        %v3158 = vpack.i.b16 %v3117, %v3117
        %v3160 = vlaneseq
        %v3161 = vshrl.u32 %v3160, 7
        %v3162 = vsub.s32 0, %v3161
        %v3163 = vrot.slane %v3158, %v3162
        %v3165 = vpack.i.b16 %v3119, %v3119
        %v3167 = vlaneseq
        %v3168 = vshrl.u32 %v3167, 7
        %v3169 = vsub.s32 0, %v3168
        %v3170 = vrot.slane %v3165, %v3169
        %v3172 = vpack.i.b16 %v3121, %v3121
        %v3174 = vlaneseq
        %v3175 = vshrl.u32 %v3174, 7
        %v3176 = vsub.s32 0, %v3175
        %v3177 = vrot.slane %v3172, %v3176
        %v3178 = vadd.bf16 %v3055, %v3128
        %v3179 = vadd.bf16 %v3056, %v3135
        %v3180 = vadd.bf16 %v3057, %v3142
        %v3181 = vadd.bf16 %v3058, %v3149
        %v3182 = vadd.bf16 %v3059, %v3156
        %v3183 = vadd.bf16 %v3060, %v3163
        %v3184 = vadd.bf16 %v3061, %v3170
        %v3185 = vadd.bf16 %v3062, %v3177
        %v3186 = vadd.bf16 %v3063, %v3128
        %v3187 = vadd.bf16 %v3064, %v3135
        %v3188 = vadd.bf16 %v3065, %v3142
        %v3189 = vadd.bf16 %v3066, %v3149
        %v3190 = vadd.bf16 %v3067, %v3156
        %v3191 = vadd.bf16 %v3068, %v3163
        %v3192 = vadd.bf16 %v3069, %v3170
        %v3193 = vadd.bf16 %v3070, %v3177
        %v3194 = vmax.bf16 %v3178, 0
        %v3195 = vmax.bf16 %v3179, 0
        %v3196 = vmax.bf16 %v3180, 0
        %v3197 = vmax.bf16 %v3181, 0
        %v3198 = vmax.bf16 %v3182, 0
        %v3199 = vmax.bf16 %v3183, 0
        %v3200 = vmax.bf16 %v3184, 0
        %v3201 = vmax.bf16 %v3185, 0
        %v3202 = vmax.bf16 %v3186, 0
        %v3203 = vmax.bf16 %v3187, 0
        %v3204 = vmax.bf16 %v3188, 0
        %v3205 = vmax.bf16 %v3189, 0
        %v3206 = vmax.bf16 %v3190, 0
        %v3207 = vmax.bf16 %v3191, 0
        %v3208 = vmax.bf16 %v3192, 0
        %v3209 = vmax.bf16 %v3193, 0
        %v3210 = vld [vmem:[#allocation7] sm:$0xf]
        %v3211 = vld [vmem:[#allocation7 + $0x4] sm:$0xf]
        %v3212 = vld [vmem:[#allocation7 + $0x8] sm:$0xf]
        %v3213 = vld [vmem:[#allocation7 + $0xc] sm:$0xf]
        %v3214 = vld [vmem:[#allocation7 + $0x10] sm:$0xf]
        %v3215 = vld [vmem:[#allocation7 + $0x14] sm:$0xf]
        %v3216 = vld [vmem:[#allocation7 + $0x18] sm:$0xf]
        %v3217 = vld [vmem:[#allocation7 + $0x1c] sm:$0xf]
        %v3218 = vld [vmem:[#allocation7 + $0x20] sm:$0xf]
        %v3219 = vld [vmem:[#allocation7 + $0x24] sm:$0xf]
        %v3220 = vld [vmem:[#allocation7 + $0x28] sm:$0xf]
        %v3221 = vld [vmem:[#allocation7 + $0x2c] sm:$0xf]
        %v3222 = vld [vmem:[#allocation7 + $0x30] sm:$0xf]
        %v3223 = vld [vmem:[#allocation7 + $0x34] sm:$0xf]
        %v3224 = vld [vmem:[#allocation7 + $0x38] sm:$0xf]
        %v3225 = vld [vmem:[#allocation7 + $0x3c] sm:$0xf]
        %v3226 = vld [vmem:[#allocation7 + $0x40] sm:$0xf]
        %v3227 = vld [vmem:[#allocation7 + $0x44] sm:$0xf]
        %v3228 = vld [vmem:[#allocation7 + $0x48] sm:$0xf]
        %v3229 = vld [vmem:[#allocation7 + $0x4c] sm:$0xf]
        %v3230 = vld [vmem:[#allocation7 + $0x50] sm:$0xf]
        %v3231 = vld [vmem:[#allocation7 + $0x54] sm:$0xf]
        %v3232 = vld [vmem:[#allocation7 + $0x58] sm:$0xf]
        %v3233 = vld [vmem:[#allocation7 + $0x5c] sm:$0xf]
        %v3234 = vld [vmem:[#allocation7 + $0x60] sm:$0xf]
        %v3235 = vld [vmem:[#allocation7 + $0x64] sm:$0xf]
        %v3236 = vld [vmem:[#allocation7 + $0x68] sm:$0xf]
        %v3237 = vld [vmem:[#allocation7 + $0x6c] sm:$0xf]
        %v3238 = vld [vmem:[#allocation7 + $0x70] sm:$0xf]
        %v3239 = vld [vmem:[#allocation7 + $0x74] sm:$0xf]
        %v3240 = vld [vmem:[#allocation7 + $0x78] sm:$0xf]
        %v3241 = vld [vmem:[#allocation7 + $0x7c] sm:$0xf]
        %v3242 = vld [vmem:[#allocation7 + $0x80] sm:$0xf]
        %v3243 = vld [vmem:[#allocation7 + $0x84] sm:$0xf]
        %v3244 = vld [vmem:[#allocation7 + $0x88] sm:$0xf]
        %v3245 = vld [vmem:[#allocation7 + $0x8c] sm:$0xf]
        %v3246 = vld [vmem:[#allocation7 + $0x90] sm:$0xf]
        %v3247 = vld [vmem:[#allocation7 + $0x94] sm:$0xf]
        %v3248 = vld [vmem:[#allocation7 + $0x98] sm:$0xf]
        %v3249 = vld [vmem:[#allocation7 + $0x9c] sm:$0xf]
        %v3250 = vld [vmem:[#allocation7 + $0xa0] sm:$0xf]
        %v3251 = vld [vmem:[#allocation7 + $0xa4] sm:$0xf]
        %v3252 = vld [vmem:[#allocation7 + $0xa8] sm:$0xf]
        %v3253 = vld [vmem:[#allocation7 + $0xac] sm:$0xf]
        %v3254 = vld [vmem:[#allocation7 + $0xb0] sm:$0xf]
        %v3255 = vld [vmem:[#allocation7 + $0xb4] sm:$0xf]
        %v3256 = vld [vmem:[#allocation7 + $0xb8] sm:$0xf]
        %v3257 = vld [vmem:[#allocation7 + $0xbc] sm:$0xf]
        %v3258 = vld [vmem:[#allocation7 + $0xc0] sm:$0xf]
        %v3259 = vld [vmem:[#allocation7 + $0xc4] sm:$0xf]
        %v3260 = vld [vmem:[#allocation7 + $0xc8] sm:$0xf]
        %v3261 = vld [vmem:[#allocation7 + $0xcc] sm:$0xf]
        %v3262 = vld [vmem:[#allocation7 + $0xd0] sm:$0xf]
        %v3263 = vld [vmem:[#allocation7 + $0xd4] sm:$0xf]
        %v3264 = vld [vmem:[#allocation7 + $0xd8] sm:$0xf]
        %v3265 = vld [vmem:[#allocation7 + $0xdc] sm:$0xf]
        %v3266 = vld [vmem:[#allocation7 + $0xe0] sm:$0xf]
        %v3267 = vld [vmem:[#allocation7 + $0xe4] sm:$0xf]
        %v3268 = vld [vmem:[#allocation7 + $0xe8] sm:$0xf]
        %v3269 = vld [vmem:[#allocation7 + $0xec] sm:$0xf]
        %v3270 = vld [vmem:[#allocation7 + $0xf0] sm:$0xf]
        %v3271 = vld [vmem:[#allocation7 + $0xf4] sm:$0xf]
        %v3272 = vld [vmem:[#allocation7 + $0xf8] sm:$0xf]
        %v3273 = vld [vmem:[#allocation7 + $0xfc] sm:$0xf]
        %v3274 = vld [vmem:[#allocation7 + $0x100] sm:$0xf]
        %v3275 = vld [vmem:[#allocation7 + $0x104] sm:$0xf]
        %v3276 = vld [vmem:[#allocation7 + $0x108] sm:$0xf]
        %v3277 = vld [vmem:[#allocation7 + $0x10c] sm:$0xf]
        %v3278 = vld [vmem:[#allocation7 + $0x110] sm:$0xf]
        %v3279 = vld [vmem:[#allocation7 + $0x114] sm:$0xf]
        %v3280 = vld [vmem:[#allocation7 + $0x118] sm:$0xf]
        %v3281 = vld [vmem:[#allocation7 + $0x11c] sm:$0xf]
        %v3282 = vld [vmem:[#allocation7 + $0x120] sm:$0xf]
        %v3283 = vld [vmem:[#allocation7 + $0x124] sm:$0xf]
        %v3284 = vld [vmem:[#allocation7 + $0x128] sm:$0xf]
        %v3285 = vld [vmem:[#allocation7 + $0x12c] sm:$0xf]
        %v3286 = vld [vmem:[#allocation7 + $0x130] sm:$0xf]
        %v3287 = vld [vmem:[#allocation7 + $0x134] sm:$0xf]
        %v3288 = vld [vmem:[#allocation7 + $0x138] sm:$0xf]
        %v3289 = vld [vmem:[#allocation7 + $0x13c] sm:$0xf]
        %v3290 = vld [vmem:[#allocation7 + $0x140] sm:$0xf]
        %v3291 = vld [vmem:[#allocation7 + $0x144] sm:$0xf]
        %v3292 = vld [vmem:[#allocation7 + $0x148] sm:$0xf]
        %v3293 = vld [vmem:[#allocation7 + $0x14c] sm:$0xf]
        %v3294 = vld [vmem:[#allocation7 + $0x150] sm:$0xf]
        %v3295 = vld [vmem:[#allocation7 + $0x154] sm:$0xf]
        %v3296 = vld [vmem:[#allocation7 + $0x158] sm:$0xf]
        %v3297 = vld [vmem:[#allocation7 + $0x15c] sm:$0xf]
        %v3298 = vld [vmem:[#allocation7 + $0x160] sm:$0xf]
        %v3299 = vld [vmem:[#allocation7 + $0x164] sm:$0xf]
        %v3300 = vld [vmem:[#allocation7 + $0x168] sm:$0xf]
        %v3301 = vld [vmem:[#allocation7 + $0x16c] sm:$0xf]
        %v3302 = vld [vmem:[#allocation7 + $0x170] sm:$0xf]
        %v3303 = vld [vmem:[#allocation7 + $0x174] sm:$0xf]
        %v3304 = vld [vmem:[#allocation7 + $0x178] sm:$0xf]
        %v3305 = vld [vmem:[#allocation7 + $0x17c] sm:$0xf]
        %v3306 = vld [vmem:[#allocation7 + $0x180] sm:$0xf]
        %v3307 = vld [vmem:[#allocation7 + $0x184] sm:$0xf]
        %v3308 = vld [vmem:[#allocation7 + $0x188] sm:$0xf]
        %v3309 = vld [vmem:[#allocation7 + $0x18c] sm:$0xf]
        %v3310 = vld [vmem:[#allocation7 + $0x190] sm:$0xf]
        %v3311 = vld [vmem:[#allocation7 + $0x194] sm:$0xf]
        %v3312 = vld [vmem:[#allocation7 + $0x198] sm:$0xf]
        %v3313 = vld [vmem:[#allocation7 + $0x19c] sm:$0xf]
        %v3314 = vld [vmem:[#allocation7 + $0x1a0] sm:$0xf]
        %v3315 = vld [vmem:[#allocation7 + $0x1a4] sm:$0xf]
        %v3316 = vld [vmem:[#allocation7 + $0x1a8] sm:$0xf]
        %v3317 = vld [vmem:[#allocation7 + $0x1ac] sm:$0xf]
        %v3318 = vld [vmem:[#allocation7 + $0x1b0] sm:$0xf]
        %v3319 = vld [vmem:[#allocation7 + $0x1b4] sm:$0xf]
        %v3320 = vld [vmem:[#allocation7 + $0x1b8] sm:$0xf]
        %v3321 = vld [vmem:[#allocation7 + $0x1bc] sm:$0xf]
        %v3322 = vld [vmem:[#allocation7 + $0x1c0] sm:$0xf]
        %v3323 = vld [vmem:[#allocation7 + $0x1c4] sm:$0xf]
        %v3324 = vld [vmem:[#allocation7 + $0x1c8] sm:$0xf]
        %v3325 = vld [vmem:[#allocation7 + $0x1cc] sm:$0xf]
        %v3326 = vld [vmem:[#allocation7 + $0x1d0] sm:$0xf]
        %v3327 = vld [vmem:[#allocation7 + $0x1d4] sm:$0xf]
        %v3328 = vld [vmem:[#allocation7 + $0x1d8] sm:$0xf]
        %v3329 = vld [vmem:[#allocation7 + $0x1dc] sm:$0xf]
        %v3330 = vld [vmem:[#allocation7 + $0x1e0] sm:$0xf]
        %v3331 = vld [vmem:[#allocation7 + $0x1e4] sm:$0xf]
        %v3332 = vld [vmem:[#allocation7 + $0x1e8] sm:$0xf]
        %v3333 = vld [vmem:[#allocation7 + $0x1ec] sm:$0xf]
        %v3334 = vld [vmem:[#allocation7 + $0x1f0] sm:$0xf]
        %v3335 = vld [vmem:[#allocation7 + $0x1f4] sm:$0xf]
        %v3336 = vld [vmem:[#allocation7 + $0x1f8] sm:$0xf]
        %v3337 = vld [vmem:[#allocation7 + $0x1fc] sm:$0xf]
        %v3338 = vld [vmem:[%s8] sm:$0x1]
        %v3340 = vlaneseq
        %v3341 = vshrl.u32 %v3340, 7
        %v3342 = vsub.s32 0, %v3341
        %v3343 = vrot.slane %v3338, %v3342
        %v3473 = vunpack.c.l.b16 %v3210
        %v3474 = vunpack.c.l.b16 %v3211
        %v3475 = vunpack.c.l.b16 %v3212
        %v3476 = vunpack.c.l.b16 %v3213
        %v3477 = vunpack.c.l.b16 %v3214
        %v3478 = vunpack.c.l.b16 %v3215
        %v3479 = vunpack.c.l.b16 %v3216
        %v3480 = vunpack.c.l.b16 %v3217
        %v3481 = vunpack.c.l.b16 %v3218
        %v3482 = vunpack.c.l.b16 %v3219
        %v3483 = vunpack.c.l.b16 %v3220
        %v3484 = vunpack.c.l.b16 %v3221
        %v3485 = vunpack.c.l.b16 %v3222
        %v3486 = vunpack.c.l.b16 %v3223
        %v3487 = vunpack.c.l.b16 %v3224
        %v3488 = vunpack.c.l.b16 %v3225
        %v3489 = vunpack.c.l.b16 %v3226
        %v3490 = vunpack.c.l.b16 %v3227
        %v3491 = vunpack.c.l.b16 %v3228
        %v3492 = vunpack.c.l.b16 %v3229
        %v3493 = vunpack.c.l.b16 %v3230
        %v3494 = vunpack.c.l.b16 %v3231
        %v3495 = vunpack.c.l.b16 %v3232
        %v3496 = vunpack.c.l.b16 %v3233
        %v3497 = vunpack.c.l.b16 %v3234
        %v3498 = vunpack.c.l.b16 %v3235
        %v3499 = vunpack.c.l.b16 %v3236
        %v3500 = vunpack.c.l.b16 %v3237
        %v3501 = vunpack.c.l.b16 %v3238
        %v3502 = vunpack.c.l.b16 %v3239
        %v3503 = vunpack.c.l.b16 %v3240
        %v3504 = vunpack.c.l.b16 %v3241
        %v3505 = vunpack.c.l.b16 %v3242
        %v3506 = vunpack.c.l.b16 %v3243
        %v3507 = vunpack.c.l.b16 %v3244
        %v3508 = vunpack.c.l.b16 %v3245
        %v3509 = vunpack.c.l.b16 %v3246
        %v3510 = vunpack.c.l.b16 %v3247
        %v3511 = vunpack.c.l.b16 %v3248
        %v3512 = vunpack.c.l.b16 %v3249
        %v3513 = vunpack.c.l.b16 %v3250
        %v3514 = vunpack.c.l.b16 %v3251
        %v3515 = vunpack.c.l.b16 %v3252
        %v3516 = vunpack.c.l.b16 %v3253
        %v3517 = vunpack.c.l.b16 %v3254
        %v3518 = vunpack.c.l.b16 %v3255
        %v3519 = vunpack.c.l.b16 %v3256
        %v3520 = vunpack.c.l.b16 %v3257
        %v3521 = vunpack.c.l.b16 %v3258
        %v3522 = vunpack.c.l.b16 %v3259
        %v3523 = vunpack.c.l.b16 %v3260
        %v3524 = vunpack.c.l.b16 %v3261
        %v3525 = vunpack.c.l.b16 %v3262
        %v3526 = vunpack.c.l.b16 %v3263
        %v3527 = vunpack.c.l.b16 %v3264
        %v3528 = vunpack.c.l.b16 %v3265
        %v3529 = vunpack.c.l.b16 %v3266
        %v3530 = vunpack.c.l.b16 %v3267
        %v3531 = vunpack.c.l.b16 %v3268
        %v3532 = vunpack.c.l.b16 %v3269
        %v3533 = vunpack.c.l.b16 %v3270
        %v3534 = vunpack.c.l.b16 %v3271
        %v3535 = vunpack.c.l.b16 %v3272
        %v3536 = vunpack.c.l.b16 %v3273
        %v3537 = vunpack.c.l.b16 %v3274
        %v3538 = vunpack.c.l.b16 %v3275
        %v3539 = vunpack.c.l.b16 %v3276
        %v3540 = vunpack.c.l.b16 %v3277
        %v3541 = vunpack.c.l.b16 %v3278
        %v3542 = vunpack.c.l.b16 %v3279
        %v3543 = vunpack.c.l.b16 %v3280
        %v3544 = vunpack.c.l.b16 %v3281
        %v3545 = vunpack.c.l.b16 %v3282
        %v3546 = vunpack.c.l.b16 %v3283
        %v3547 = vunpack.c.l.b16 %v3284
        %v3548 = vunpack.c.l.b16 %v3285
        %v3549 = vunpack.c.l.b16 %v3286
        %v3550 = vunpack.c.l.b16 %v3287
        %v3551 = vunpack.c.l.b16 %v3288
        %v3552 = vunpack.c.l.b16 %v3289
        %v3553 = vunpack.c.l.b16 %v3290
        %v3554 = vunpack.c.l.b16 %v3291
        %v3555 = vunpack.c.l.b16 %v3292
        %v3556 = vunpack.c.l.b16 %v3293
        %v3557 = vunpack.c.l.b16 %v3294
        %v3558 = vunpack.c.l.b16 %v3295
        %v3559 = vunpack.c.l.b16 %v3296
        %v3560 = vunpack.c.l.b16 %v3297
        %v3561 = vunpack.c.l.b16 %v3298
        %v3562 = vunpack.c.l.b16 %v3299
        %v3563 = vunpack.c.l.b16 %v3300
        %v3564 = vunpack.c.l.b16 %v3301
        %v3565 = vunpack.c.l.b16 %v3302
        %v3566 = vunpack.c.l.b16 %v3303
        %v3567 = vunpack.c.l.b16 %v3304
        %v3568 = vunpack.c.l.b16 %v3305
        %v3569 = vunpack.c.l.b16 %v3306
        %v3570 = vunpack.c.l.b16 %v3307
        %v3571 = vunpack.c.l.b16 %v3308
        %v3572 = vunpack.c.l.b16 %v3309
        %v3573 = vunpack.c.l.b16 %v3310
        %v3574 = vunpack.c.l.b16 %v3311
        %v3575 = vunpack.c.l.b16 %v3312
        %v3576 = vunpack.c.l.b16 %v3313
        %v3577 = vunpack.c.l.b16 %v3314
        %v3578 = vunpack.c.l.b16 %v3315
        %v3579 = vunpack.c.l.b16 %v3316
        %v3580 = vunpack.c.l.b16 %v3317
        %v3581 = vunpack.c.l.b16 %v3318
        %v3582 = vunpack.c.l.b16 %v3319
        %v3583 = vunpack.c.l.b16 %v3320
        %v3584 = vunpack.c.l.b16 %v3321
        %v3585 = vunpack.c.l.b16 %v3322
        %v3586 = vunpack.c.l.b16 %v3323
        %v3587 = vunpack.c.l.b16 %v3324
        %v3588 = vunpack.c.l.b16 %v3325
        %v3589 = vunpack.c.l.b16 %v3326
        %v3590 = vunpack.c.l.b16 %v3327
        %v3591 = vunpack.c.l.b16 %v3328
        %v3592 = vunpack.c.l.b16 %v3329
        %v3593 = vunpack.c.l.b16 %v3330
        %v3594 = vunpack.c.l.b16 %v3331
        %v3595 = vunpack.c.l.b16 %v3332
        %v3596 = vunpack.c.l.b16 %v3333
        %v3597 = vunpack.c.l.b16 %v3334
        %v3598 = vunpack.c.l.b16 %v3335
        %v3599 = vunpack.c.l.b16 %v3336
        %v3600 = vunpack.c.l.b16 %v3337
        %v3601 = vpack.c.b16 %v3474, %v3473
        %v3602 = vpack.c.b16 %v3476, %v3475
        %v3603 = vpack.c.b16 %v3478, %v3477
        %v3604 = vpack.c.b16 %v3480, %v3479
        %v3605 = vpack.c.b16 %v3482, %v3481
        %v3606 = vpack.c.b16 %v3484, %v3483
        %v3607 = vpack.c.b16 %v3486, %v3485
        %v3608 = vpack.c.b16 %v3488, %v3487
        %v3609 = vpack.c.b16 %v3490, %v3489
        %v3610 = vpack.c.b16 %v3492, %v3491
        %v3611 = vpack.c.b16 %v3494, %v3493
        %v3612 = vpack.c.b16 %v3496, %v3495
        %v3613 = vpack.c.b16 %v3498, %v3497
        %v3614 = vpack.c.b16 %v3500, %v3499
        %v3615 = vpack.c.b16 %v3502, %v3501
        %v3616 = vpack.c.b16 %v3504, %v3503
        %v3617 = vpack.c.b16 %v3506, %v3505
        %v3618 = vpack.c.b16 %v3508, %v3507
        %v3619 = vpack.c.b16 %v3510, %v3509
        %v3620 = vpack.c.b16 %v3512, %v3511
        %v3621 = vpack.c.b16 %v3514, %v3513
        %v3622 = vpack.c.b16 %v3516, %v3515
        %v3623 = vpack.c.b16 %v3518, %v3517
        %v3624 = vpack.c.b16 %v3520, %v3519
        %v3625 = vpack.c.b16 %v3522, %v3521
        %v3626 = vpack.c.b16 %v3524, %v3523
        %v3627 = vpack.c.b16 %v3526, %v3525
        %v3628 = vpack.c.b16 %v3528, %v3527
        %v3629 = vpack.c.b16 %v3530, %v3529
        %v3630 = vpack.c.b16 %v3532, %v3531
        %v3631 = vpack.c.b16 %v3534, %v3533
        %v3632 = vpack.c.b16 %v3536, %v3535
        %v3633 = vpack.c.b16 %v3538, %v3537
        %v3634 = vpack.c.b16 %v3540, %v3539
        %v3635 = vpack.c.b16 %v3542, %v3541
        %v3636 = vpack.c.b16 %v3544, %v3543
        %v3637 = vpack.c.b16 %v3546, %v3545
        %v3638 = vpack.c.b16 %v3548, %v3547
        %v3639 = vpack.c.b16 %v3550, %v3549
        %v3640 = vpack.c.b16 %v3552, %v3551
        %v3641 = vpack.c.b16 %v3554, %v3553
        %v3642 = vpack.c.b16 %v3556, %v3555
        %v3643 = vpack.c.b16 %v3558, %v3557
        %v3644 = vpack.c.b16 %v3560, %v3559
        %v3645 = vpack.c.b16 %v3562, %v3561
        %v3646 = vpack.c.b16 %v3564, %v3563
        %v3647 = vpack.c.b16 %v3566, %v3565
        %v3648 = vpack.c.b16 %v3568, %v3567
        %v3649 = vpack.c.b16 %v3570, %v3569
        %v3650 = vpack.c.b16 %v3572, %v3571
        %v3651 = vpack.c.b16 %v3574, %v3573
        %v3652 = vpack.c.b16 %v3576, %v3575
        %v3653 = vpack.c.b16 %v3578, %v3577
        %v3654 = vpack.c.b16 %v3580, %v3579
        %v3655 = vpack.c.b16 %v3582, %v3581
        %v3656 = vpack.c.b16 %v3584, %v3583
        %v3657 = vpack.c.b16 %v3586, %v3585
        %v3658 = vpack.c.b16 %v3588, %v3587
        %v3659 = vpack.c.b16 %v3590, %v3589
        %v3660 = vpack.c.b16 %v3592, %v3591
        %v3661 = vpack.c.b16 %v3594, %v3593
        %v3662 = vpack.c.b16 %v3596, %v3595
        %v3663 = vpack.c.b16 %v3598, %v3597
        %v3664 = vpack.c.b16 %v3600, %v3599
        %3729 = vmatprep.subr.bf16.mxu0 0
        %3730 = vmatpush1.bf16.msra.mxu0 %v3608
        %3731 = vmatprep.subr.bf16.mxu0 0
        %3732 = vmatpush1.bf16.msra.mxu0 %v3607
        %3733 = vmatprep.subr.bf16.mxu0 0
        %3734 = vmatpush1.bf16.msra.mxu0 %v3606
        %3735 = vmatprep.subr.bf16.mxu0 0
        %3736 = vmatpush1.bf16.msra.mxu0 %v3605
        %3737 = vmatprep.subr.bf16.mxu0 0
        %3738 = vmatpush1.bf16.msra.mxu0 %v3604
        %3739 = vmatprep.subr.bf16.mxu0 0
        %3740 = vmatpush1.bf16.msra.mxu0 %v3603
        %3741 = vmatprep.subr.bf16.mxu0 0
        %3742 = vmatpush1.bf16.msra.mxu0 %v3602
        %3743 = vmatprep.subr.bf16.mxu0 0
        %3744 = vmatpush1.bf16.msra.mxu0 %v3601
        %3745 = vmatprep.subr.bf16.mxu0 0
        %3746 = vmatpush2.bf16.msra.mxu0 %v3616
        %3747 = vmatprep.subr.bf16.mxu0 0
        %3748 = vmatpush2.bf16.msra.mxu0 %v3615
        %3749 = vmatprep.subr.bf16.mxu0 0
        %3750 = vmatpush2.bf16.msra.mxu0 %v3614
        %3751 = vmatprep.subr.bf16.mxu0 0
        %3752 = vmatpush2.bf16.msra.mxu0 %v3613
        %3753 = vmatprep.subr.bf16.mxu0 0
        %3754 = vmatpush2.bf16.msra.mxu0 %v3612
        %3755 = vmatprep.subr.bf16.mxu0 0
        %3756 = vmatpush2.bf16.msra.mxu0 %v3611
        %3757 = vmatprep.subr.bf16.mxu0 0
        %3758 = vmatpush2.bf16.msra.mxu0 %v3610
        %3759 = vmatprep.subr.bf16.mxu0 0
        %3760 = vmatpush2.bf16.msra.mxu0 %v3609
        %3761 = vmatprep.mubr.bf16.mxu0 %v3195
        %3762 = vmatmul.mubr.bf16.gmra.mxu0 %v3194
        %v3763 = vpop.f32.mrf.mxu0
        %v3764 = vadd.f32 %v3343, %v3763
        %v3765 = vpop.f32.mrf.mxu0
        %v3766 = vpop.f32.mrf.mxu0
        %v3767 = vadd.f32 %v3343, %v3766
        %v3768 = vpop.f32.mrf.mxu0
        %3769 = vmatprep.mubr.bf16.mxu0 %v3203
        %3770 = vmatmul.mubr.bf16.gmra.mxu0 %v3202
        %v3771 = vpop.f32.mrf.mxu0
        %v3772 = vadd.f32 %v3343, %v3771
        %v3773 = vpop.f32.mrf.mxu0
        %v3774 = vpop.f32.mrf.mxu0
        %v3775 = vadd.f32 %v3343, %v3774
        %v3776 = vpop.f32.mrf.mxu0
        %3777 = vdwg.mxu0
        %3778 = vmatprep.subr.bf16.mxu0 0
        %3779 = vmatpush1.bf16.msra.mxu0 %v3624
        %3780 = vmatprep.subr.bf16.mxu0 0
        %3781 = vmatpush1.bf16.msra.mxu0 %v3623
        %3782 = vmatprep.subr.bf16.mxu0 0
        %3783 = vmatpush1.bf16.msra.mxu0 %v3622
        %3784 = vmatprep.subr.bf16.mxu0 0
        %3785 = vmatpush1.bf16.msra.mxu0 %v3621
        %3786 = vmatprep.subr.bf16.mxu0 0
        %3787 = vmatpush1.bf16.msra.mxu0 %v3620
        %3788 = vmatprep.subr.bf16.mxu0 0
        %3789 = vmatpush1.bf16.msra.mxu0 %v3619
        %3790 = vmatprep.subr.bf16.mxu0 0
        %3791 = vmatpush1.bf16.msra.mxu0 %v3618
        %3792 = vmatprep.subr.bf16.mxu0 0
        %3793 = vmatpush1.bf16.msra.mxu0 %v3617
        %3794 = vmatprep.subr.bf16.mxu0 0
        %3795 = vmatpush2.bf16.msra.mxu0 %v3632
        %3796 = vmatprep.subr.bf16.mxu0 0
        %3797 = vmatpush2.bf16.msra.mxu0 %v3631
        %3798 = vmatprep.subr.bf16.mxu0 0
        %3799 = vmatpush2.bf16.msra.mxu0 %v3630
        %3800 = vmatprep.subr.bf16.mxu0 0
        %3801 = vmatpush2.bf16.msra.mxu0 %v3629
        %3802 = vmatprep.subr.bf16.mxu0 0
        %3803 = vmatpush2.bf16.msra.mxu0 %v3628
        %3804 = vmatprep.subr.bf16.mxu0 0
        %3805 = vmatpush2.bf16.msra.mxu0 %v3627
        %3806 = vmatprep.subr.bf16.mxu0 0
        %3807 = vmatpush2.bf16.msra.mxu0 %v3626
        %3808 = vmatprep.subr.bf16.mxu0 0
        %3809 = vmatpush2.bf16.msra.mxu0 %v3625
        %3810 = vmatprep.mubr.bf16.mxu0 %v3197
        %3811 = vmatmul.mubr.bf16.gmra.mxu0 %v3196
        %v3812 = vpop.f32.mrf.mxu0
        %v3813 = vadd.f32 %v3764, %v3812
        %v3814 = vpop.f32.mrf.mxu0
        %v3815 = vpop.f32.mrf.mxu0
        %v3816 = vadd.f32 %v3767, %v3815
        %v3817 = vpop.f32.mrf.mxu0
        %3818 = vmatprep.mubr.bf16.mxu0 %v3205
        %3819 = vmatmul.mubr.bf16.gmra.mxu0 %v3204
        %v3820 = vpop.f32.mrf.mxu0
        %v3821 = vadd.f32 %v3772, %v3820
        %v3822 = vpop.f32.mrf.mxu0
        %v3823 = vpop.f32.mrf.mxu0
        %v3824 = vadd.f32 %v3775, %v3823
        %v3825 = vpop.f32.mrf.mxu0
        %3826 = vdwg.mxu0
        %3827 = vmatprep.subr.bf16.mxu0 0
        %3828 = vmatpush1.bf16.msra.mxu0 %v3640
        %3829 = vmatprep.subr.bf16.mxu0 0
        %3830 = vmatpush1.bf16.msra.mxu0 %v3639
        %3831 = vmatprep.subr.bf16.mxu0 0
        %3832 = vmatpush1.bf16.msra.mxu0 %v3638
        %3833 = vmatprep.subr.bf16.mxu0 0
        %3834 = vmatpush1.bf16.msra.mxu0 %v3637
        %3835 = vmatprep.subr.bf16.mxu0 0
        %3836 = vmatpush1.bf16.msra.mxu0 %v3636
        %3837 = vmatprep.subr.bf16.mxu0 0
        %3838 = vmatpush1.bf16.msra.mxu0 %v3635
        %3839 = vmatprep.subr.bf16.mxu0 0
        %3840 = vmatpush1.bf16.msra.mxu0 %v3634
        %3841 = vmatprep.subr.bf16.mxu0 0
        %3842 = vmatpush1.bf16.msra.mxu0 %v3633
        %3843 = vmatprep.subr.bf16.mxu0 0
        %3844 = vmatpush2.bf16.msra.mxu0 %v3648
        %3845 = vmatprep.subr.bf16.mxu0 0
        %3846 = vmatpush2.bf16.msra.mxu0 %v3647
        %3847 = vmatprep.subr.bf16.mxu0 0
        %3848 = vmatpush2.bf16.msra.mxu0 %v3646
        %3849 = vmatprep.subr.bf16.mxu0 0
        %3850 = vmatpush2.bf16.msra.mxu0 %v3645
        %3851 = vmatprep.subr.bf16.mxu0 0
        %3852 = vmatpush2.bf16.msra.mxu0 %v3644
        %3853 = vmatprep.subr.bf16.mxu0 0
        %3854 = vmatpush2.bf16.msra.mxu0 %v3643
        %3855 = vmatprep.subr.bf16.mxu0 0
        %3856 = vmatpush2.bf16.msra.mxu0 %v3642
        %3857 = vmatprep.subr.bf16.mxu0 0
        %3858 = vmatpush2.bf16.msra.mxu0 %v3641
        %3859 = vmatprep.mubr.bf16.mxu0 %v3199
        %3860 = vmatmul.mubr.bf16.gmra.mxu0 %v3198
        %v3861 = vpop.f32.mrf.mxu0
        %v3862 = vadd.f32 %v3813, %v3861
        %v3863 = vpop.f32.mrf.mxu0
        %v3864 = vpop.f32.mrf.mxu0
        %v3865 = vadd.f32 %v3816, %v3864
        %v3866 = vpop.f32.mrf.mxu0
        %3867 = vmatprep.mubr.bf16.mxu0 %v3207
        %3868 = vmatmul.mubr.bf16.gmra.mxu0 %v3206
        %v3869 = vpop.f32.mrf.mxu0
        %v3870 = vadd.f32 %v3821, %v3869
        %v3871 = vpop.f32.mrf.mxu0
        %v3872 = vpop.f32.mrf.mxu0
        %v3873 = vadd.f32 %v3824, %v3872
        %v3874 = vpop.f32.mrf.mxu0
        %3875 = vdwg.mxu0
        %3876 = vmatprep.subr.bf16.mxu0 0
        %3877 = vmatpush1.bf16.msra.mxu0 %v3656
        %3878 = vmatprep.subr.bf16.mxu0 0
        %3879 = vmatpush1.bf16.msra.mxu0 %v3655
        %3880 = vmatprep.subr.bf16.mxu0 0
        %3881 = vmatpush1.bf16.msra.mxu0 %v3654
        %3882 = vmatprep.subr.bf16.mxu0 0
        %3883 = vmatpush1.bf16.msra.mxu0 %v3653
        %3884 = vmatprep.subr.bf16.mxu0 0
        %3885 = vmatpush1.bf16.msra.mxu0 %v3652
        %3886 = vmatprep.subr.bf16.mxu0 0
        %3887 = vmatpush1.bf16.msra.mxu0 %v3651
        %3888 = vmatprep.subr.bf16.mxu0 0
        %3889 = vmatpush1.bf16.msra.mxu0 %v3650
        %3890 = vmatprep.subr.bf16.mxu0 0
        %3891 = vmatpush1.bf16.msra.mxu0 %v3649
        %3892 = vmatprep.subr.bf16.mxu0 0
        %3893 = vmatpush2.bf16.msra.mxu0 %v3664
        %3894 = vmatprep.subr.bf16.mxu0 0
        %3895 = vmatpush2.bf16.msra.mxu0 %v3663
        %3896 = vmatprep.subr.bf16.mxu0 0
        %3897 = vmatpush2.bf16.msra.mxu0 %v3662
        %3898 = vmatprep.subr.bf16.mxu0 0
        %3899 = vmatpush2.bf16.msra.mxu0 %v3661
        %3900 = vmatprep.subr.bf16.mxu0 0
        %3901 = vmatpush2.bf16.msra.mxu0 %v3660
        %3902 = vmatprep.subr.bf16.mxu0 0
        %3903 = vmatpush2.bf16.msra.mxu0 %v3659
        %3904 = vmatprep.subr.bf16.mxu0 0
        %3905 = vmatpush2.bf16.msra.mxu0 %v3658
        %3906 = vmatprep.subr.bf16.mxu0 0
        %3907 = vmatpush2.bf16.msra.mxu0 %v3657
        %3908 = vmatprep.mubr.bf16.mxu0 %v3201
        %3909 = vmatmul.mubr.bf16.gmra.mxu0 %v3200
        %v3910 = vpop.f32.mrf.mxu0
        %v3911 = vadd.f32 %v3862, %v3910
        %v3912 = vpop.f32.mrf.mxu0
        %v3913 = vpop.f32.mrf.mxu0
        %v3914 = vadd.f32 %v3865, %v3913
        %v3915 = vpop.f32.mrf.mxu0
        %3916 = vmatprep.mubr.bf16.mxu0 %v3209
        %3917 = vmatmul.mubr.bf16.gmra.mxu0 %v3208
        %v3918 = vpop.f32.mrf.mxu0
        %v3919 = vadd.f32 %v3870, %v3918
        %v3920 = vpop.f32.mrf.mxu0
        %v3921 = vpop.f32.mrf.mxu0
        %v3922 = vadd.f32 %v3873, %v3921
        %v3923 = vpop.f32.mrf.mxu0
        %3924 = vdwg.mxu0
        %3925 = vst [vmem:[%s370] sm:$0xff] %v3911
        %3926 = vst [vmem:[%s370 + $0x8] sm:$0xff] %v3914
        %3927 = vst [vmem:[%s370 + $0x10] sm:$0xff] %v3919
        %3928 = vst [vmem:[%s370 + $0x18] sm:$0xff] %v3922
        %s3929 = sand.u32 %s227, 1
        %s3930 = scalar_lea.sflag [#allocation4], %s3929
        %s3931 = sand.u32 %s227, 1
        %s3932 = smul.addr %s3931, 32
        %s3933 = scalar_lea.vmem [#allocation8], %s3932
        // Predicated region
        $region69: #{tpu_custom_call.1} parent=55 // pred_check
          %p3934 = pneg %p237
        $region70: #{tpu_custom_call.1} parent=55 // pred_check_branch
          %3936 = sbr.rel (%p3934) target = $region72
        $region71: #{tpu_custom_call.1} parent=55 // pred_region
          %s3937 = smul.u32 4, %s25
          %s3939 = ssub.s32 512, 512
          %3940 = vsyncadd %s3930, %s3939
          %s3941 = smul.addr %s3937, 128
          %s3942 = scalar_lea.hbm %s9, %s3941
          %s3943 = sshll.u32 %s3933, 4
          %s3944 = int_to_ptr.vmem [resolvable:$true] %s3943
          %3949 = dma.vmem_to_hbm [thread:$0]  %s3944, 512, %s3942, %s3930, 128, 128, 8
        $region72: #{tpu_custom_call.1} parent=55 // pred_fallthru
          _
      $region56: #{tpu_custom_call.1} parent=5 // pred_fallthru
        _
      %p3950 = scmp.le.s32.totalorder 2, %s20
      // Predicated region
      $region73: #{tpu_custom_call.1} parent=5 // pred_check
        %p3951 = pneg %p3950
      $region74: #{tpu_custom_call.1} parent=5 // pred_check_branch
        %3953 = sbr.rel (%p3951) target = $region76
      $region75: #{tpu_custom_call.1} parent=5 // pred_region
        %s3954 = ssub.s32 %s20, 2
        // Predicated region
        $region77: #{tpu_custom_call.1} parent=75 // pred_check
          %p3955 = pneg %p243
        $region78: #{tpu_custom_call.1} parent=75 // pred_check_branch
          %3957 = sbr.rel (%p3955) target = $region80
        $region79: #{tpu_custom_call.1} parent=75 // pred_region
          %s3958 = sand.u32 %s228, 1
          %s3959 = scalar_lea.sflag [#allocation4], %s3958
          %s3960 = sand.u32 %s228, 1
          %s3961 = smul.addr %s3960, 32
          %s3962 = scalar_lea.vmem [#allocation8], %s3961
          %3963 = dma.done %s3959, 512
        $region80: #{tpu_custom_call.1} parent=75 // pred_fallthru
          _
      $region76: #{tpu_custom_call.1} parent=5 // pred_fallthru
        _
    $region6: #{tpu_custom_call.1} parent=1 // loop_footer
      %s24 = sadd.s32 1, %s20
    $region7: #{tpu_custom_call.1} parent=1 // loop_footer_branch
      %19 = sbr.rel target = $region3
    $region8: #{tpu_custom_call.1} parent=1 // loop_exit
      _
    %3964 = vsyncpa [#allocation3], 1
    %s3965 = scalar_lea.sflag [#allocation3], 1
    %3966 = vsyncpa %s3965, 1
    %3967 = vsyncpa [#allocation6], 1
    %3968 = vsyncpa [#allocation4], 1
    %s3969 = scalar_lea.sflag [#allocation4], 1
    %3970 = vsyncpa %s3969, 1

</llo_original>
